<compile_context>
chip_gen: v7x
topology: tpu7x:2x2x1
jax: 0.10.0
libtpu: 0.0.40
codegen_flags: <defaults>
</compile_context>

<pallas_src>
import functools
import math

import jax
import jax.numpy as jnp
from jax import lax
from jax.experimental import pallas as pl
from jax.experimental.pallas import tpu as pltpu

EPS = 1e-6
# bf16 MXU inputs, f32 accumulation. Mask bias / softmax / residuals stay f32.
MATMUL_DTYPE = jnp.bfloat16
VMEM_LIMIT_BYTES = 56 * 1024 * 1024


def _cparams(*sem):
    return pltpu.CompilerParams(dimension_semantics=sem,
                                vmem_limit_bytes=VMEM_LIMIT_BYTES)


def _tile(n, pref):
    """Row/col tile: prefer `pref` when it divides n, else the full extent."""
    return pref if (n >= pref and n % pref == 0) else n


# ---------------------------- in-kernel helpers ----------------------------

def _ln(x, a, b, eps):
    d = x.shape[-1]
    mean = jnp.mean(x, axis=-1, keepdims=True)
    diff = x - mean
    # torch .std() is unbiased (divide by d-1); eps added to std, not var.
    std = jnp.sqrt(jnp.sum(diff * diff, axis=-1, keepdims=True) * (1.0 / (d - 1)))
    inv = pl.reciprocal(std + eps, approx=True)      # EUP slot instead of VPU divide
    return a * (diff * inv) + b


def _mm(a, b):
    return jnp.dot(a.astype(MATMUL_DTYPE), b.astype(MATMUL_DTYPE),
                   preferred_element_type=jnp.float32)


def _qkT(a, b):
    # (Sq, dk) x (Sk, dk) -> (Sq, Sk), contracting last dims (no explicit transpose).
    return lax.dot_general(a.astype(MATMUL_DTYPE), b.astype(MATMUL_DTYPE),
                           (((1,), (1,)), ((), ())),
                           preferred_element_type=jnp.float32)


# ---------------------------- Pallas kernels ----------------------------

def _attn_sublayer_kernel(*refs, heads, scale, is_self, eps):
    # out = x + W_o( MHA( LN(x), kv, mask ) ) + b_o     (residual fused)
    if is_self:
        (x_ref, bias_ref, lna_ref, lnb_ref,
         wq_ref, bq_ref, wk_ref, bk_ref, wv_ref, bv_ref,
         wo_ref, bo_ref, o_ref, ohs_ref) = refs
        kv_ref = None
    else:
        (x_ref, kv_ref, bias_ref, lna_ref, lnb_ref,
         wq_ref, bq_ref, wk_ref, bk_ref, wv_ref, bv_ref,
         wo_ref, bo_ref, o_ref, ohs_ref) = refs

    x = x_ref[0]                                      # (Sq, d) f32
    y = _ln(x, lna_ref[...], lnb_ref[...], eps)       # pre-norm (f32)
    kv = y if is_self else kv_ref[0]                  # (Sk, d); enc output NOT normed

    # QKV projections: f32 accumulate + bias, then bf16 once for the MXU loop.
    q = (_mm(y, wq_ref[...]) + bq_ref[...]).astype(MATMUL_DTYPE)
    k = (_mm(kv, wk_ref[...]) + bk_ref[...]).astype(MATMUL_DTYPE)
    v = (_mm(kv, wv_ref[...]) + bv_ref[...]).astype(MATMUL_DTYPE)

    Sq, d = x.shape
    Sk = kv.shape[0]
    dk = d // heads
    # Hoist the mask broadcast out of the head loop (no CSE of broadcast_in_dim).
    bias = jnp.broadcast_to(bias_ref[0], (Sq, Sk)).astype(jnp.float32)

    # Per-head scores/softmax/PV; head outputs land in a (Sq, d) scratch slab,
    # then ONE d-deep matmul applies W_o (better MXU fill than per-head folds).
    # NOTE: for production configs pick dk (or head groups) as a multiple of 128
    # so q/k/v head slices stay lane-tile aligned.
    for hh in range(heads):
        sl = slice(hh * dk, (hh + 1) * dk)
        s = _qkT(q[:, sl], k[:, sl]) * scale + bias   # f32 (Sq, Sk)
        m = jnp.max(s, axis=-1, keepdims=True)
        p = jnp.exp(s - m)
        inv = pl.reciprocal(jnp.sum(p, axis=-1, keepdims=True), approx=True)
        o_h = _mm(p, v[:, sl]) * inv                  # scale the (Sq,dk) output, not p
        ohs_ref[:, sl] = o_h.astype(ohs_ref.dtype)

    out = x + _mm(ohs_ref[...], wo_ref[...]) + bo_ref[...]
    o_ref[0] = out.astype(o_ref.dtype)


def _ffn_sublayer_kernel(x_ref, lna_ref, lnb_ref, w1_ref, b1_ref, w2_ref, b2_ref,
                         o_ref, y_ref, *, eps):
    # out = x + W2( relu( W1(LN(x)) + b1 ) ) + b2, streamed over d_ff chunks.
    f = pl.program_id(2)

    @pl.when(f == 0)
    def _():
        x = x_ref[0]
        y_ref[...] = _ln(x, lna_ref[...], lnb_ref[...], eps).astype(y_ref.dtype)
        o_ref[0] = x + b2_ref[...]                    # init accumulator: residual + b2

    h1 = jnp.maximum(_mm(y_ref[...], w1_ref[...]) + b1_ref[...], 0.0)
    o_ref[0] += _mm(h1, w2_ref[...])                  # relu is elementwise over d_ff


def _final_ln_kernel(x_ref, a_ref, b_ref, o_ref, *, eps):
    o_ref[0] = _ln(x_ref[0], a_ref[...], b_ref[...], eps).astype(o_ref.dtype)


# ---------------------------- pallas_call wrappers ----------------------------

def self_attn_sublayer(x, bias, ln_a, ln_b, p, heads):
    B, Sq, d = x.shape
    Bm, Sqm, _ = bias.shape                           # (1|B, 1|Sq, Sq)
    bias_map = (lambda b: (b, 0, 0)) if Bm == B else (lambda b: (0, 0, 0))
    full = lambda shape: pl.BlockSpec(shape, lambda b: (0, 0))
    kernel = functools.partial(_attn_sublayer_kernel, heads=heads,
                               scale=1.0 / math.sqrt(d // heads),
                               is_self=True, eps=EPS)
    return pl.pallas_call(
        kernel,
        out_shape=jax.ShapeDtypeStruct((B, Sq, d), jnp.float32),
        grid=(B,),
        in_specs=[
            pl.BlockSpec((1, Sq, d), lambda b: (b, 0, 0)),     # x (residual + q + k/v)
            pl.BlockSpec((1, Sqm, Sq), bias_map),              # additive causal bias
            full((1, d)), full((1, d)),                        # ln alpha / bias
            full((d, d)), full((1, d)),                        # w_q, b_q
            full((d, d)), full((1, d)),                        # w_k, b_k
            full((d, d)), full((1, d)),                        # w_v, b_v
            full((d, d)), full((1, d)),                        # w_o, b_o
        ],
        out_specs=pl.BlockSpec((1, Sq, d), lambda b: (b, 0, 0)),
        scratch_shapes=[pltpu.VMEM((Sq, d), MATMUL_DTYPE)],    # concatenated head outs
        compiler_params=_cparams("parallel"),
    )(x, bias, ln_a, ln_b,
      p["w_q"], p["b_q"], p["w_k"], p["b_k"], p["w_v"], p["b_v"],
      p["w_o"], p["b_o"])


def cross_attn_sublayer(x, kv, bias, ln_a, ln_b, p, heads):
    B, Sq, d = x.shape
    Sk = kv.shape[1]
    tq = _tile(Sq, 128)
    nq = Sq // tq
    Bm, Sqm, _ = bias.shape                           # (B|1, 1|Sq, Sk)
    bq_blk = 1 if Sqm == 1 else tq
    bias_map = lambda b, q: (b if Bm == B else 0, 0 if Sqm == 1 else q, 0)
    full = lambda shape: pl.BlockSpec(shape, lambda b, q: (0, 0))
    kernel = functools.partial(_attn_sublayer_kernel, heads=heads,
                               scale=1.0 / math.sqrt(d // heads),
                               is_self=False, eps=EPS)
    return pl.pallas_call(
        kernel,
        out_shape=jax.ShapeDtypeStruct((B, Sq, d), jnp.float32),
        grid=(B, nq),
        in_specs=[
            pl.BlockSpec((1, tq, d), lambda b, q: (b, q, 0)),  # x (q-row tile)
            pl.BlockSpec((1, Sk, d), lambda b, q: (b, 0, 0)),  # encoder output (resident per b)
            pl.BlockSpec((1, bq_blk, Sk), bias_map),           # padding mask bias
            full((1, d)), full((1, d)),
            full((d, d)), full((1, d)),
            full((d, d)), full((1, d)),
            full((d, d)), full((1, d)),
            full((d, d)), full((1, d)),
        ],
        out_specs=pl.BlockSpec((1, tq, d), lambda b, q: (b, q, 0)),
        scratch_shapes=[pltpu.VMEM((tq, d), MATMUL_DTYPE)],
        compiler_params=_cparams("parallel", "parallel"),
    )(x, kv, bias, ln_a, ln_b,
      p["w_q"], p["b_q"], p["w_k"], p["b_k"], p["w_v"], p["b_v"],
      p["w_o"], p["b_o"])


def ffn_sublayer(x, ln_a, ln_b, p):
    B, S, d = x.shape
    d_ff = p["w1"].shape[1]
    tS = _tile(S, 256)
    tF = _tile(d_ff, 512)
    nS, nF = S // tS, d_ff // tF
    full = lambda shape: pl.BlockSpec(shape, lambda b, s, f: (0, 0))
    return pl.pallas_call(
        functools.partial(_ffn_sublayer_kernel, eps=EPS),
        out_shape=jax.ShapeDtypeStruct((B, S, d), jnp.float32),
        grid=(B, nS, nF),                                     # d_ff reduction axis last
        in_specs=[
            pl.BlockSpec((1, tS, d), lambda b, s, f: (b, s, 0)),
            full((1, d)), full((1, d)),
            pl.BlockSpec((d, tF), lambda b, s, f: (0, f)),     # W1 d_ff chunk
            pl.BlockSpec((1, tF), lambda b, s, f: (0, f)),     # b1 chunk
            pl.BlockSpec((tF, d), lambda b, s, f: (f, 0)),     # W2 d_ff chunk
            full((1, d)),                                      # b2
        ],
        out_specs=pl.BlockSpec((1, tS, d), lambda b, s, f: (b, s, 0)),  # resident over f
        scratch_shapes=[pltpu.VMEM((tS, d), MATMUL_DTYPE)],    # LN(x) staged once per (b,s)
        compiler_params=_cparams("parallel", "parallel", "arbitrary"),
    )(x, ln_a, ln_b, p["w1"], p["b1"], p["w2"], p["b2"])


def final_layer_norm(x, a, b):
    B, S, d = x.shape
    tS = _tile(S, 256)
    nS = S // tS
    return pl.pallas_call(
        functools.partial(_final_ln_kernel, eps=EPS),
        out_shape=jax.ShapeDtypeStruct((B, S, d), jnp.float32),
        grid=(B, nS),
        in_specs=[pl.BlockSpec((1, tS, d), lambda bb, ss: (bb, ss, 0)),
                  pl.BlockSpec((1, d), lambda bb, ss: (0, 0)),
                  pl.BlockSpec((1, d), lambda bb, ss: (0, 0))],
        out_specs=pl.BlockSpec((1, tS, d), lambda bb, ss: (bb, ss, 0)),
        compiler_params=_cparams("parallel", "parallel"),
    )(x, a, b)


# ---------------------------- Decoder forward ----------------------------

def decoder_forward(params, x, encoder_output, src_mask, tgt_mask, heads):
    # Additive mask biases hoisted out of the layer loop; no [B,H,Sq,Sk] broadcast
    # ever hits HBM — batch/Sq broadcasting happens via index_map / in-kernel.
    tgt_bias = ((tgt_mask - 1.0) * 1e9).reshape(
        tgt_mask.shape[0], tgt_mask.shape[2], tgt_mask.shape[3])   # (1, Sq, Sq)
    src_bias = ((src_mask - 1.0) * 1e9).reshape(
        src_mask.shape[0], src_mask.shape[2], src_mask.shape[3])   # (B, 1, Sk)

    for p in params["layers"]:
        x = self_attn_sublayer(x, tgt_bias, p["ln1_a"], p["ln1_b"],
                               p["self_attn"], heads)
        x = cross_attn_sublayer(x, encoder_output, src_bias, p["ln2_a"], p["ln2_b"],
                                p["cross_attn"], heads)
        x = ffn_sublayer(x, p["ln3_a"], p["ln3_b"], p["ffn"])
    return final_layer_norm(x, params["norm_a"], params["norm_b"])


# ---------------------------- Deterministic parameter init ----------------------------

def init_params(key, n_layers, d_model, d_ff):
    def lin(k, din, dout):
        kw, kb = jax.random.split(k)
        return (jax.random.normal(kw, (din, dout), jnp.float32) * 0.05,
                jax.random.normal(kb, (1, dout), jnp.float32) * 0.05)

    def attn_params(k):
        kq, kk, kv, ko = jax.random.split(k, 4)
        wq, bq = lin(kq, d_model, d_model)
        wk, bk = lin(kk, d_model, d_model)
        wv, bv = lin(kv, d_model, d_model)
        wo, bo = lin(ko, d_model, d_model)
        return dict(w_q=wq, b_q=bq, w_k=wk, b_k=bk, w_v=wv, b_v=bv, w_o=wo, b_o=bo)

    layers = []
    for _ in range(n_layers):
        key, k_sa, k_ca, k_ff = jax.random.split(key, 4)
        k1, k2 = jax.random.split(k_ff)
        w1, b1 = lin(k1, d_model, d_ff)
        w2, b2 = lin(k2, d_ff, d_model)
        layers.append(dict(
            self_attn=attn_params(k_sa),
            cross_attn=attn_params(k_ca),
            ffn=dict(w1=w1, b1=b1, w2=w2, b2=b2),
            ln1_a=jnp.ones((1, d_model), jnp.float32), ln1_b=jnp.zeros((1, d_model), jnp.float32),
            ln2_a=jnp.ones((1, d_model), jnp.float32), ln2_b=jnp.zeros((1, d_model), jnp.float32),
            ln3_a=jnp.ones((1, d_model), jnp.float32), ln3_b=jnp.zeros((1, d_model), jnp.float32),
        ))
    return dict(layers=layers,
                norm_a=jnp.ones((1, d_model), jnp.float32),
                norm_b=jnp.zeros((1, d_model), jnp.float32))


# ---------------------------- Pure-JAX reference ----------------------------

def _ref_ln(x, a, b):
    mean = jnp.mean(x, axis=-1, keepdims=True)
    diff = x - mean
    std = jnp.sqrt(jnp.sum(diff * diff, axis=-1, keepdims=True) / (x.shape[-1] - 1))
    return a * diff / (std + EPS) + b


def _ref_mha(p, x_q, x_kv, mask, h):
    B, Sq, d = x_q.shape
    Sk = x_kv.shape[1]
    dk = d // h
    q = (x_q @ p["w_q"] + p["b_q"]).reshape(B, Sq, h, dk).transpose(0, 2, 1, 3)
    k = (x_kv @ p["w_k"] + p["b_k"]).reshape(B, Sk, h, dk).transpose(0, 2, 1, 3)
    v = (x_kv @ p["w_v"] + p["b_v"]).reshape(B, Sk, h, dk).transpose(0, 2, 1, 3)
    scores = jnp.einsum("bhqd,bhkd->bhqk", q, k) / math.sqrt(dk)
    scores = jnp.where(mask == 0, -1e9, scores)
    attn = jax.nn.softmax(scores, axis=-1)
    o = jnp.einsum("bhqk,bhkd->bhqd", attn, v).transpose(0, 2, 1, 3).reshape(B, Sq, d)
    return o @ p["w_o"] + p["b_o"]


def _ref_decoder(params, x, enc, src_mask, tgt_mask, h):
    for p in params["layers"]:
        y = _ref_ln(x, p["ln1_a"], p["ln1_b"])
        x = x + _ref_mha(p["self_attn"], y, y, tgt_mask, h)
        y = _ref_ln(x, p["ln2_a"], p["ln2_b"])
        x = x + _ref_mha(p["cross_attn"], y, enc, src_mask, h)
        y = _ref_ln(x, p["ln3_a"], p["ln3_b"])
        hdn = jnp.maximum(y @ p["ffn"]["w1"] + p["ffn"]["b1"], 0.0)
        x = x + (hdn @ p["ffn"]["w2"] + p["ffn"]["b2"])
    return _ref_ln(x, params["norm_a"], params["norm_b"])


# ---------------------------- Main ----------------------------

if __name__ == "__main__":
    B, S_tgt, S_src = 2, 8, 8
    d_model, n_heads, d_ff, n_layers = 32, 4, 64, 2

    key = jax.random.PRNGKey(0)
    kx, kenc, kp = jax.random.split(key, 3)
    x = jax.random.normal(kx, (B, S_tgt, d_model), jnp.float32)
    encoder_output = jax.random.normal(kenc, (B, S_src, d_model), jnp.float32)

    # causal target mask (1,1,Sq,Sq); source padding mask (B,1,1,Sk) -- 1=keep, 0=mask
    tgt_mask = jnp.tril(jnp.ones((S_tgt, S_tgt), jnp.float32)).reshape(1, 1, S_tgt, S_tgt)
    src_pad = jnp.array([[1.0] * S_src, [1.0] * (S_src - 2) + [0.0] * 2], jnp.float32)
    src_mask = src_pad.reshape(B, 1, 1, S_src)

    params = init_params(kp, n_layers, d_model, d_ff)

    fwd = jax.jit(functools.partial(decoder_forward, heads=n_heads))
    out = jax.block_until_ready(fwd(params, x, encoder_output, src_mask, tgt_mask))

    ref = _ref_decoder(params, x, encoder_output, src_mask, tgt_mask, n_heads)
    assert out.shape == (B, S_tgt, d_model)
    max_err = float(jnp.max(jnp.abs(out - ref)))
    # bf16 MXU inputs + EUP approx reciprocals vs. the f32 reference -> looser tolerance.
    assert jnp.allclose(out, ref, atol=5e-2, rtol=5e-2), max_err

    print("KERNEL_OK")
</pallas_src>

<mosaic_0001>
module attributes {stable_mosaic.version = 11 : i64} {
  func.func @_attn_sublayer_kernel(%arg0: i32, %arg1: i32, %arg2: memref<1x8x32xf32, #tpu.memory_space<vmem>>, %arg3: memref<1x8x32xf32, #tpu.memory_space<vmem>>, %arg4: memref<1x1x8xf32, #tpu.memory_space<vmem>>, %arg5: memref<1x32xf32, #tpu.memory_space<vmem>>, %arg6: memref<1x32xf32, #tpu.memory_space<vmem>>, %arg7: memref<32x32xf32, #tpu.memory_space<vmem>>, %arg8: memref<1x32xf32, #tpu.memory_space<vmem>>, %arg9: memref<32x32xf32, #tpu.memory_space<vmem>>, %arg10: memref<1x32xf32, #tpu.memory_space<vmem>>, %arg11: memref<32x32xf32, #tpu.memory_space<vmem>>, %arg12: memref<1x32xf32, #tpu.memory_space<vmem>>, %arg13: memref<32x32xf32, #tpu.memory_space<vmem>>, %arg14: memref<1x32xf32, #tpu.memory_space<vmem>>, %arg15: memref<1x8x32xf32, #tpu.memory_space<vmem>>, %arg16: memref<8x32xbf16, #tpu.memory_space<vmem>>) attributes {dimension_semantics = [#tpu.dimension_semantics<parallel>, #tpu.dimension_semantics<parallel>], iteration_bounds = array<i64: 2, 1>, scalar_prefetch = 0 : i64, scratch_operands = 1 : i64, tpu.core_type = #tpu.core_type<tc>, window_params = [{transform_indices = @transform_0, window_bounds = array<i64: 1, 8, 32>}, {transform_indices = @transform_1, window_bounds = array<i64: 1, 8, 32>}, {transform_indices = @transform_2, window_bounds = array<i64: 1, 1, 8>}, {pipeline_mode = #tpu.pipeline_mode<synchronous>, transform_indices = @transform_3, window_bounds = array<i64: 1, 32>}, {pipeline_mode = #tpu.pipeline_mode<synchronous>, transform_indices = @transform_4, window_bounds = array<i64: 1, 32>}, {pipeline_mode = #tpu.pipeline_mode<synchronous>, transform_indices = @transform_5, window_bounds = array<i64: 32, 32>}, {pipeline_mode = #tpu.pipeline_mode<synchronous>, transform_indices = @transform_6, window_bounds = array<i64: 1, 32>}, {pipeline_mode = #tpu.pipeline_mode<synchronous>, transform_indices = @transform_7, window_bounds = array<i64: 32, 32>}, {pipeline_mode = #tpu.pipeline_mode<synchronous>, transform_indices = @transform_8, window_bounds = array<i64: 1, 32>}, {pipeline_mode = #tpu.pipeline_mode<synchronous>, transform_indices = @transform_9, window_bounds = array<i64: 32, 32>}, {pipeline_mode = #tpu.pipeline_mode<synchronous>, transform_indices = @transform_10, window_bounds = array<i64: 1, 32>}, {pipeline_mode = #tpu.pipeline_mode<synchronous>, transform_indices = @transform_11, window_bounds = array<i64: 32, 32>}, {pipeline_mode = #tpu.pipeline_mode<synchronous>, transform_indices = @transform_12, window_bounds = array<i64: 1, 32>}, {transform_indices = @transform_13, window_bounds = array<i64: 1, 8, 32>}]} {
    %c0 = arith.constant 0 : index
    %c0_0 = arith.constant 0 : index
    %c0_1 = arith.constant 0 : index
    %0 = vector.load %arg2[%c0, %c0_0, %c0_1] : memref<1x8x32xf32, #tpu.memory_space<vmem>>, vector<1x8x32xf32>
    %1 = vector.shape_cast %0 : vector<1x8x32xf32> to vector<8x32xf32>
    %c0_2 = arith.constant 0 : index
    %c0_3 = arith.constant 0 : index
    %2 = vector.load %arg5[%c0_2, %c0_3] : memref<1x32xf32, #tpu.memory_space<vmem>>, vector<1x32xf32>
    %c0_4 = arith.constant 0 : index
    %c0_5 = arith.constant 0 : index
    %3 = vector.load %arg6[%c0_4, %c0_5] : memref<1x32xf32, #tpu.memory_space<vmem>>, vector<1x32xf32>
    %cst = arith.constant dense<0.000000e+00> : vector<8xf32>
    %4 = vector.multi_reduction <add>, %1, %cst [1] : vector<8x32xf32> to vector<8xf32>
    %5 = vector.shape_cast %4 : vector<8xf32> to vector<8x1xf32>
    %cst_6 = arith.constant 3.200000e+01 : f32
    %6 = vector.broadcast %cst_6 : f32 to vector<8x1xf32>
    %7 = arith.divf %5, %6 : vector<8x1xf32>
    %8 = vector.broadcast %7 : vector<8x1xf32> to vector<8x32xf32>
    %9 = arith.subf %1, %8 : vector<8x32xf32>
    %10 = arith.mulf %9, %9 : vector<8x32xf32>
    %cst_7 = arith.constant dense<0.000000e+00> : vector<8xf32>
    %11 = vector.multi_reduction <add>, %10, %cst_7 [1] : vector<8x32xf32> to vector<8xf32>
    %12 = vector.shape_cast %11 : vector<8xf32> to vector<8x1xf32>
    %cst_8 = arith.constant 0.0322580636 : f32
    %13 = vector.broadcast %cst_8 : f32 to vector<8x1xf32>
    %14 = arith.mulf %12, %13 : vector<8x1xf32>
    %15 = math.sqrt %14 : vector<8x1xf32>
    %cst_9 = arith.constant 9.99999997E-7 : f32
    %16 = vector.broadcast %cst_9 : f32 to vector<8x1xf32>
    %17 = arith.addf %15, %16 : vector<8x1xf32>
    %18 = tpu.reciprocal %17 {approx = true} : vector<8x1xf32> -> vector<8x1xf32>
    %19 = vector.broadcast %18 : vector<8x1xf32> to vector<8x32xf32>
    %20 = arith.mulf %9, %19 : vector<8x32xf32>
    %21 = vector.broadcast %2 : vector<1x32xf32> to vector<8x32xf32>
    %22 = arith.mulf %21, %20 : vector<8x32xf32>
    %23 = vector.broadcast %3 : vector<1x32xf32> to vector<8x32xf32>
    %24 = arith.addf %22, %23 : vector<8x32xf32>
    %c0_10 = arith.constant 0 : index
    %c0_11 = arith.constant 0 : index
    %c0_12 = arith.constant 0 : index
    %25 = vector.load %arg3[%c0_10, %c0_11, %c0_12] : memref<1x8x32xf32, #tpu.memory_space<vmem>>, vector<1x8x32xf32>
    %26 = vector.shape_cast %25 : vector<1x8x32xf32> to vector<8x32xf32>
    %c0_13 = arith.constant 0 : index
    %c0_14 = arith.constant 0 : index
    %27 = vector.load %arg7[%c0_13, %c0_14] : memref<32x32xf32, #tpu.memory_space<vmem>>, vector<32x32xf32>
    %28 = arith.truncf %24 : vector<8x32xf32> to vector<8x32xbf16>
    %29 = arith.truncf %27 : vector<32x32xf32> to vector<32x32xbf16>
    %cst_15 = arith.constant dense<0.000000e+00> : vector<8x32xf32>
    %30 = tpu.matmul %28, %29, %cst_15 {dimension_numbers = #tpu.dot_dimension_numbers<[1], [0], [0], [1], [0, 0, 1, 1], [], []>} : vector<8x32xbf16>, vector<32x32xbf16>, vector<8x32xf32> -> vector<8x32xf32>
    %c0_16 = arith.constant 0 : index
    %c0_17 = arith.constant 0 : index
    %31 = vector.load %arg8[%c0_16, %c0_17] : memref<1x32xf32, #tpu.memory_space<vmem>>, vector<1x32xf32>
    %32 = vector.broadcast %31 : vector<1x32xf32> to vector<8x32xf32>
    %33 = arith.addf %30, %32 : vector<8x32xf32>
    %34 = arith.truncf %33 : vector<8x32xf32> to vector<8x32xbf16>
    %c0_18 = arith.constant 0 : index
    %c0_19 = arith.constant 0 : index
    %35 = vector.load %arg9[%c0_18, %c0_19] : memref<32x32xf32, #tpu.memory_space<vmem>>, vector<32x32xf32>
    %36 = arith.truncf %26 : vector<8x32xf32> to vector<8x32xbf16>
    %37 = arith.truncf %35 : vector<32x32xf32> to vector<32x32xbf16>
    %cst_20 = arith.constant dense<0.000000e+00> : vector<8x32xf32>
    %38 = tpu.matmul %36, %37, %cst_20 {dimension_numbers = #tpu.dot_dimension_numbers<[1], [0], [0], [1], [0, 0, 1, 1], [], []>} : vector<8x32xbf16>, vector<32x32xbf16>, vector<8x32xf32> -> vector<8x32xf32>
    %c0_21 = arith.constant 0 : index
    %c0_22 = arith.constant 0 : index
    %39 = vector.load %arg10[%c0_21, %c0_22] : memref<1x32xf32, #tpu.memory_space<vmem>>, vector<1x32xf32>
    %40 = vector.broadcast %39 : vector<1x32xf32> to vector<8x32xf32>
    %41 = arith.addf %38, %40 : vector<8x32xf32>
    %42 = arith.truncf %41 : vector<8x32xf32> to vector<8x32xbf16>
    %c0_23 = arith.constant 0 : index
    %c0_24 = arith.constant 0 : index
    %43 = vector.load %arg11[%c0_23, %c0_24] : memref<32x32xf32, #tpu.memory_space<vmem>>, vector<32x32xf32>
    %44 = arith.truncf %26 : vector<8x32xf32> to vector<8x32xbf16>
    %45 = arith.truncf %43 : vector<32x32xf32> to vector<32x32xbf16>
    %cst_25 = arith.constant dense<0.000000e+00> : vector<8x32xf32>
    %46 = tpu.matmul %44, %45, %cst_25 {dimension_numbers = #tpu.dot_dimension_numbers<[1], [0], [0], [1], [0, 0, 1, 1], [], []>} : vector<8x32xbf16>, vector<32x32xbf16>, vector<8x32xf32> -> vector<8x32xf32>
    %c0_26 = arith.constant 0 : index
    %c0_27 = arith.constant 0 : index
    %47 = vector.load %arg12[%c0_26, %c0_27] : memref<1x32xf32, #tpu.memory_space<vmem>>, vector<1x32xf32>
    %48 = vector.broadcast %47 : vector<1x32xf32> to vector<8x32xf32>
    %49 = arith.addf %46, %48 : vector<8x32xf32>
    %50 = arith.truncf %49 : vector<8x32xf32> to vector<8x32xbf16>
    %c0_28 = arith.constant 0 : index
    %c0_29 = arith.constant 0 : index
    %c0_30 = arith.constant 0 : index
    %51 = vector.load %arg4[%c0_28, %c0_29, %c0_30] : memref<1x1x8xf32, #tpu.memory_space<vmem>>, vector<1x1x8xf32>
    %52 = vector.shape_cast %51 : vector<1x1x8xf32> to vector<1x8xf32>
    %53 = vector.shape_cast %52 : vector<1x8xf32> to vector<1x8xf32>
    %54 = vector.broadcast %53 : vector<1x8xf32> to vector<8x8xf32>
    %55 = vector.extract_strided_slice %34 {offsets = [0, 0], sizes = [8, 8], strides = [1, 1]} : vector<8x32xbf16> to vector<8x8xbf16>
    %56 = vector.extract_strided_slice %42 {offsets = [0, 0], sizes = [8, 8], strides = [1, 1]} : vector<8x32xbf16> to vector<8x8xbf16>
    %cst_31 = arith.constant dense<0.000000e+00> : vector<8x8xf32>
    %57 = tpu.matmul %55, %56, %cst_31 {dimension_numbers = #tpu.dot_dimension_numbers<[1], [1], [0], [0], [0, 0, 1, 0], [], []>} : vector<8x8xbf16>, vector<8x8xbf16>, vector<8x8xf32> -> vector<8x8xf32>
    %cst_32 = arith.constant 0.353553385 : f32
    %58 = vector.broadcast %cst_32 : f32 to vector<8x8xf32>
    %59 = arith.mulf %57, %58 : vector<8x8xf32>
    %60 = arith.addf %59, %54 : vector<8x8xf32>
    %cst_33 = arith.constant dense<0xFF800000> : vector<8xf32>
    %61 = vector.multi_reduction <maximumf>, %60, %cst_33 [1] : vector<8x8xf32> to vector<8xf32>
    %62 = vector.shape_cast %61 : vector<8xf32> to vector<8x1xf32>
    %63 = vector.broadcast %62 : vector<8x1xf32> to vector<8x8xf32>
    %64 = arith.subf %60, %63 : vector<8x8xf32>
    %65 = math.exp %64 : vector<8x8xf32>
    %cst_34 = arith.constant dense<0.000000e+00> : vector<8xf32>
    %66 = vector.multi_reduction <add>, %65, %cst_34 [1] : vector<8x8xf32> to vector<8xf32>
    %67 = vector.shape_cast %66 : vector<8xf32> to vector<8x1xf32>
    %68 = tpu.reciprocal %67 {approx = true} : vector<8x1xf32> -> vector<8x1xf32>
    %69 = vector.extract_strided_slice %50 {offsets = [0, 0], sizes = [8, 8], strides = [1, 1]} : vector<8x32xbf16> to vector<8x8xbf16>
    %70 = arith.truncf %65 : vector<8x8xf32> to vector<8x8xbf16>
    %cst_35 = arith.constant dense<0.000000e+00> : vector<8x8xf32>
    %71 = tpu.matmul %70, %69, %cst_35 {dimension_numbers = #tpu.dot_dimension_numbers<[1], [0], [0], [1], [0, 0, 1, 1], [], []>} : vector<8x8xbf16>, vector<8x8xbf16>, vector<8x8xf32> -> vector<8x8xf32>
    %72 = vector.broadcast %68 : vector<8x1xf32> to vector<8x8xf32>
    %73 = arith.mulf %71, %72 : vector<8x8xf32>
    %74 = arith.truncf %73 : vector<8x8xf32> to vector<8x8xbf16>
    %c0_36 = arith.constant 0 : index
    %c0_37 = arith.constant 0 : index
    %75 = vector.load %arg16[%c0_36, %c0_37] : memref<8x32xbf16, #tpu.memory_space<vmem>>, vector<8x8xbf16>
    tpu.vector_store %arg16[%c0_36, %c0_37], %74 {strides = array<i32>} : memref<8x32xbf16, #tpu.memory_space<vmem>>, vector<8x8xbf16>,
    %76 = vector.extract_strided_slice %34 {offsets = [0, 8], sizes = [8, 8], strides = [1, 1]} : vector<8x32xbf16> to vector<8x8xbf16>
    %77 = vector.extract_strided_slice %42 {offsets = [0, 8], sizes = [8, 8], strides = [1, 1]} : vector<8x32xbf16> to vector<8x8xbf16>
    %cst_38 = arith.constant dense<0.000000e+00> : vector<8x8xf32>
    %78 = tpu.matmul %76, %77, %cst_38 {dimension_numbers = #tpu.dot_dimension_numbers<[1], [1], [0], [0], [0, 0, 1, 0], [], []>} : vector<8x8xbf16>, vector<8x8xbf16>, vector<8x8xf32> -> vector<8x8xf32>
    %cst_39 = arith.constant 0.353553385 : f32
    %79 = vector.broadcast %cst_39 : f32 to vector<8x8xf32>
    %80 = arith.mulf %78, %79 : vector<8x8xf32>
    %81 = arith.addf %80, %54 : vector<8x8xf32>
    %cst_40 = arith.constant dense<0xFF800000> : vector<8xf32>
    %82 = vector.multi_reduction <maximumf>, %81, %cst_40 [1] : vector<8x8xf32> to vector<8xf32>
    %83 = vector.shape_cast %82 : vector<8xf32> to vector<8x1xf32>
    %84 = vector.broadcast %83 : vector<8x1xf32> to vector<8x8xf32>
    %85 = arith.subf %81, %84 : vector<8x8xf32>
    %86 = math.exp %85 : vector<8x8xf32>
    %cst_41 = arith.constant dense<0.000000e+00> : vector<8xf32>
    %87 = vector.multi_reduction <add>, %86, %cst_41 [1] : vector<8x8xf32> to vector<8xf32>
    %88 = vector.shape_cast %87 : vector<8xf32> to vector<8x1xf32>
    %89 = tpu.reciprocal %88 {approx = true} : vector<8x1xf32> -> vector<8x1xf32>
    %90 = vector.extract_strided_slice %50 {offsets = [0, 8], sizes = [8, 8], strides = [1, 1]} : vector<8x32xbf16> to vector<8x8xbf16>
    %91 = arith.truncf %86 : vector<8x8xf32> to vector<8x8xbf16>
    %cst_42 = arith.constant dense<0.000000e+00> : vector<8x8xf32>
    %92 = tpu.matmul %91, %90, %cst_42 {dimension_numbers = #tpu.dot_dimension_numbers<[1], [0], [0], [1], [0, 0, 1, 1], [], []>} : vector<8x8xbf16>, vector<8x8xbf16>, vector<8x8xf32> -> vector<8x8xf32>
    %93 = vector.broadcast %89 : vector<8x1xf32> to vector<8x8xf32>
    %94 = arith.mulf %92, %93 : vector<8x8xf32>
    %95 = arith.truncf %94 : vector<8x8xf32> to vector<8x8xbf16>
    %c0_43 = arith.constant 0 : index
    %c8 = arith.constant 8 : index
    %96 = vector.load %arg16[%c0_43, %c8] : memref<8x32xbf16, #tpu.memory_space<vmem>>, vector<8x8xbf16>
    tpu.vector_store %arg16[%c0_43, %c8], %95 {strides = array<i32>} : memref<8x32xbf16, #tpu.memory_space<vmem>>, vector<8x8xbf16>,
    %97 = vector.extract_strided_slice %34 {offsets = [0, 16], sizes = [8, 8], strides = [1, 1]} : vector<8x32xbf16> to vector<8x8xbf16>
    %98 = vector.extract_strided_slice %42 {offsets = [0, 16], sizes = [8, 8], strides = [1, 1]} : vector<8x32xbf16> to vector<8x8xbf16>
    %cst_44 = arith.constant dense<0.000000e+00> : vector<8x8xf32>
    %99 = tpu.matmul %97, %98, %cst_44 {dimension_numbers = #tpu.dot_dimension_numbers<[1], [1], [0], [0], [0, 0, 1, 0], [], []>} : vector<8x8xbf16>, vector<8x8xbf16>, vector<8x8xf32> -> vector<8x8xf32>
    %cst_45 = arith.constant 0.353553385 : f32
    %100 = vector.broadcast %cst_45 : f32 to vector<8x8xf32>
    %101 = arith.mulf %99, %100 : vector<8x8xf32>
    %102 = arith.addf %101, %54 : vector<8x8xf32>
    %cst_46 = arith.constant dense<0xFF800000> : vector<8xf32>
    %103 = vector.multi_reduction <maximumf>, %102, %cst_46 [1] : vector<8x8xf32> to vector<8xf32>
    %104 = vector.shape_cast %103 : vector<8xf32> to vector<8x1xf32>
    %105 = vector.broadcast %104 : vector<8x1xf32> to vector<8x8xf32>
    %106 = arith.subf %102, %105 : vector<8x8xf32>
    %107 = math.exp %106 : vector<8x8xf32>
    %cst_47 = arith.constant dense<0.000000e+00> : vector<8xf32>
    %108 = vector.multi_reduction <add>, %107, %cst_47 [1] : vector<8x8xf32> to vector<8xf32>
    %109 = vector.shape_cast %108 : vector<8xf32> to vector<8x1xf32>
    %110 = tpu.reciprocal %109 {approx = true} : vector<8x1xf32> -> vector<8x1xf32>
    %111 = vector.extract_strided_slice %50 {offsets = [0, 16], sizes = [8, 8], strides = [1, 1]} : vector<8x32xbf16> to vector<8x8xbf16>
    %112 = arith.truncf %107 : vector<8x8xf32> to vector<8x8xbf16>
    %cst_48 = arith.constant dense<0.000000e+00> : vector<8x8xf32>
    %113 = tpu.matmul %112, %111, %cst_48 {dimension_numbers = #tpu.dot_dimension_numbers<[1], [0], [0], [1], [0, 0, 1, 1], [], []>} : vector<8x8xbf16>, vector<8x8xbf16>, vector<8x8xf32> -> vector<8x8xf32>
    %114 = vector.broadcast %110 : vector<8x1xf32> to vector<8x8xf32>
    %115 = arith.mulf %113, %114 : vector<8x8xf32>
    %116 = arith.truncf %115 : vector<8x8xf32> to vector<8x8xbf16>
    %c0_49 = arith.constant 0 : index
    %c16 = arith.constant 16 : index
    %117 = vector.load %arg16[%c0_49, %c16] : memref<8x32xbf16, #tpu.memory_space<vmem>>, vector<8x8xbf16>
    tpu.vector_store %arg16[%c0_49, %c16], %116 {strides = array<i32>} : memref<8x32xbf16, #tpu.memory_space<vmem>>, vector<8x8xbf16>,
    %118 = vector.extract_strided_slice %34 {offsets = [0, 24], sizes = [8, 8], strides = [1, 1]} : vector<8x32xbf16> to vector<8x8xbf16>
    %119 = vector.extract_strided_slice %42 {offsets = [0, 24], sizes = [8, 8], strides = [1, 1]} : vector<8x32xbf16> to vector<8x8xbf16>
    %cst_50 = arith.constant dense<0.000000e+00> : vector<8x8xf32>
    %120 = tpu.matmul %118, %119, %cst_50 {dimension_numbers = #tpu.dot_dimension_numbers<[1], [1], [0], [0], [0, 0, 1, 0], [], []>} : vector<8x8xbf16>, vector<8x8xbf16>, vector<8x8xf32> -> vector<8x8xf32>
    %cst_51 = arith.constant 0.353553385 : f32
    %121 = vector.broadcast %cst_51 : f32 to vector<8x8xf32>
    %122 = arith.mulf %120, %121 : vector<8x8xf32>
    %123 = arith.addf %122, %54 : vector<8x8xf32>
    %cst_52 = arith.constant dense<0xFF800000> : vector<8xf32>
    %124 = vector.multi_reduction <maximumf>, %123, %cst_52 [1] : vector<8x8xf32> to vector<8xf32>
    %125 = vector.shape_cast %124 : vector<8xf32> to vector<8x1xf32>
    %126 = vector.broadcast %125 : vector<8x1xf32> to vector<8x8xf32>
    %127 = arith.subf %123, %126 : vector<8x8xf32>
    %128 = math.exp %127 : vector<8x8xf32>
    %cst_53 = arith.constant dense<0.000000e+00> : vector<8xf32>
    %129 = vector.multi_reduction <add>, %128, %cst_53 [1] : vector<8x8xf32> to vector<8xf32>
    %130 = vector.shape_cast %129 : vector<8xf32> to vector<8x1xf32>
    %131 = tpu.reciprocal %130 {approx = true} : vector<8x1xf32> -> vector<8x1xf32>
    %132 = vector.extract_strided_slice %50 {offsets = [0, 24], sizes = [8, 8], strides = [1, 1]} : vector<8x32xbf16> to vector<8x8xbf16>
    %133 = arith.truncf %128 : vector<8x8xf32> to vector<8x8xbf16>
    %cst_54 = arith.constant dense<0.000000e+00> : vector<8x8xf32>
    %134 = tpu.matmul %133, %132, %cst_54 {dimension_numbers = #tpu.dot_dimension_numbers<[1], [0], [0], [1], [0, 0, 1, 1], [], []>} : vector<8x8xbf16>, vector<8x8xbf16>, vector<8x8xf32> -> vector<8x8xf32>
    %135 = vector.broadcast %131 : vector<8x1xf32> to vector<8x8xf32>
    %136 = arith.mulf %134, %135 : vector<8x8xf32>
    %137 = arith.truncf %136 : vector<8x8xf32> to vector<8x8xbf16>
    %c0_55 = arith.constant 0 : index
    %c24 = arith.constant 24 : index
    %138 = vector.load %arg16[%c0_55, %c24] : memref<8x32xbf16, #tpu.memory_space<vmem>>, vector<8x8xbf16>
    tpu.vector_store %arg16[%c0_55, %c24], %137 {strides = array<i32>} : memref<8x32xbf16, #tpu.memory_space<vmem>>, vector<8x8xbf16>,
    %c0_56 = arith.constant 0 : index
    %c0_57 = arith.constant 0 : index
    %139 = vector.load %arg16[%c0_56, %c0_57] : memref<8x32xbf16, #tpu.memory_space<vmem>>, vector<8x32xbf16>
    %c0_58 = arith.constant 0 : index
    %c0_59 = arith.constant 0 : index
    %140 = vector.load %arg13[%c0_58, %c0_59] : memref<32x32xf32, #tpu.memory_space<vmem>>, vector<32x32xf32>
    %141 = arith.truncf %140 : vector<32x32xf32> to vector<32x32xbf16>
    %cst_60 = arith.constant dense<0.000000e+00> : vector<8x32xf32>
    %142 = tpu.matmul %139, %141, %cst_60 {dimension_numbers = #tpu.dot_dimension_numbers<[1], [0], [0], [1], [0, 0, 1, 1], [], []>} : vector<8x32xbf16>, vector<32x32xbf16>, vector<8x32xf32> -> vector<8x32xf32>
    %143 = arith.addf %1, %142 : vector<8x32xf32>
    %c0_61 = arith.constant 0 : index
    %c0_62 = arith.constant 0 : index
    %144 = vector.load %arg14[%c0_61, %c0_62] : memref<1x32xf32, #tpu.memory_space<vmem>>, vector<1x32xf32>
    %145 = vector.broadcast %144 : vector<1x32xf32> to vector<8x32xf32>
    %146 = arith.addf %143, %145 : vector<8x32xf32>
    %c0_63 = arith.constant 0 : index
    %c0_64 = arith.constant 0 : index
    %c0_65 = arith.constant 0 : index
    %147 = vector.load %arg15[%c0_63, %c0_64, %c0_65] : memref<1x8x32xf32, #tpu.memory_space<vmem>>, vector<1x8x32xf32>
    %148 = vector.shape_cast %147 : vector<1x8x32xf32> to vector<8x32xf32>
    %149 = vector.shape_cast %146 : vector<8x32xf32> to vector<1x8x32xf32>
    tpu.vector_store %arg15[%c0_63, %c0_64, %c0_65], %149 {strides = array<i32>} : memref<1x8x32xf32, #tpu.memory_space<vmem>>, vector<1x8x32xf32>,
    return
  }
  func.func @transform_0(%arg0: i32, %arg1: i32) -> (i32, i32, i32) {
    %c0_i32 = arith.constant 0 : i32
    %c0_i32_0 = arith.constant 0 : i32
    return %arg0, %arg1, %c0_i32 : i32, i32, i32
  }
  func.func @transform_1(%arg0: i32, %arg1: i32) -> (i32, i32, i32) {
    %c0_i32 = arith.constant 0 : i32
    %c0_i32_0 = arith.constant 0 : i32
    %c0_i32_1 = arith.constant 0 : i32
    return %arg0, %c0_i32, %c0_i32_0 : i32, i32, i32
  }
  func.func @transform_2(%arg0: i32, %arg1: i32) -> (i32, i32, i32) {
    %c0_i32 = arith.constant 0 : i32
    %c0_i32_0 = arith.constant 0 : i32
    %c0_i32_1 = arith.constant 0 : i32
    return %arg0, %c0_i32, %c0_i32_0 : i32, i32, i32
  }
  func.func @transform_3(%arg0: i32, %arg1: i32) -> (i32, i32) {
    %c0_i32 = arith.constant 0 : i32
    %c0_i32_0 = arith.constant 0 : i32
    %c0_i32_1 = arith.constant 0 : i32
    return %c0_i32, %c0_i32_0 : i32, i32
  }
  func.func @transform_4(%arg0: i32, %arg1: i32) -> (i32, i32) {
    %c0_i32 = arith.constant 0 : i32
    %c0_i32_0 = arith.constant 0 : i32
    %c0_i32_1 = arith.constant 0 : i32
    return %c0_i32, %c0_i32_0 : i32, i32
  }
  func.func @transform_5(%arg0: i32, %arg1: i32) -> (i32, i32) {
    %c0_i32 = arith.constant 0 : i32
    %c0_i32_0 = arith.constant 0 : i32
    %c0_i32_1 = arith.constant 0 : i32
    return %c0_i32, %c0_i32_0 : i32, i32
  }
  func.func @transform_6(%arg0: i32, %arg1: i32) -> (i32, i32) {
    %c0_i32 = arith.constant 0 : i32
    %c0_i32_0 = arith.constant 0 : i32
    %c0_i32_1 = arith.constant 0 : i32
    return %c0_i32, %c0_i32_0 : i32, i32
  }
  func.func @transform_7(%arg0: i32, %arg1: i32) -> (i32, i32) {
    %c0_i32 = arith.constant 0 : i32
    %c0_i32_0 = arith.constant 0 : i32
    %c0_i32_1 = arith.constant 0 : i32
    return %c0_i32, %c0_i32_0 : i32, i32
  }
  func.func @transform_8(%arg0: i32, %arg1: i32) -> (i32, i32) {
    %c0_i32 = arith.constant 0 : i32
    %c0_i32_0 = arith.constant 0 : i32
    %c0_i32_1 = arith.constant 0 : i32
    return %c0_i32, %c0_i32_0 : i32, i32
  }
  func.func @transform_9(%arg0: i32, %arg1: i32) -> (i32, i32) {
    %c0_i32 = arith.constant 0 : i32
    %c0_i32_0 = arith.constant 0 : i32
    %c0_i32_1 = arith.constant 0 : i32
    return %c0_i32, %c0_i32_0 : i32, i32
  }
  func.func @transform_10(%arg0: i32, %arg1: i32) -> (i32, i32) {
    %c0_i32 = arith.constant 0 : i32
    %c0_i32_0 = arith.constant 0 : i32
    %c0_i32_1 = arith.constant 0 : i32
    return %c0_i32, %c0_i32_0 : i32, i32
  }
  func.func @transform_11(%arg0: i32, %arg1: i32) -> (i32, i32) {
    %c0_i32 = arith.constant 0 : i32
    %c0_i32_0 = arith.constant 0 : i32
    %c0_i32_1 = arith.constant 0 : i32
    return %c0_i32, %c0_i32_0 : i32, i32
  }
  func.func @transform_12(%arg0: i32, %arg1: i32) -> (i32, i32) {
    %c0_i32 = arith.constant 0 : i32
    %c0_i32_0 = arith.constant 0 : i32
    %c0_i32_1 = arith.constant 0 : i32
    return %c0_i32, %c0_i32_0 : i32, i32
  }
  func.func @transform_13(%arg0: i32, %arg1: i32) -> (i32, i32, i32) {
    %c0_i32 = arith.constant 0 : i32
    %c0_i32_0 = arith.constant 0 : i32
    return %arg0, %arg1, %c0_i32 : i32, i32, i32
  }
}

module attributes {stable_mosaic.version = 11 : i64} {
  func.func @_attn_sublayer_kernel(%arg0: i32, %arg1: memref<1x8x32xf32, #tpu.memory_space<vmem>>, %arg2: memref<1x8x8xf32, #tpu.memory_space<vmem>>, %arg3: memref<1x32xf32, #tpu.memory_space<vmem>>, %arg4: memref<1x32xf32, #tpu.memory_space<vmem>>, %arg5: memref<32x32xf32, #tpu.memory_space<vmem>>, %arg6: memref<1x32xf32, #tpu.memory_space<vmem>>, %arg7: memref<32x32xf32, #tpu.memory_space<vmem>>, %arg8: memref<1x32xf32, #tpu.memory_space<vmem>>, %arg9: memref<32x32xf32, #tpu.memory_space<vmem>>, %arg10: memref<1x32xf32, #tpu.memory_space<vmem>>, %arg11: memref<32x32xf32, #tpu.memory_space<vmem>>, %arg12: memref<1x32xf32, #tpu.memory_space<vmem>>, %arg13: memref<1x8x32xf32, #tpu.memory_space<vmem>>, %arg14: memref<8x32xbf16, #tpu.memory_space<vmem>>) attributes {dimension_semantics = [#tpu.dimension_semantics<parallel>], iteration_bounds = array<i64: 2>, scalar_prefetch = 0 : i64, scratch_operands = 1 : i64, tpu.core_type = #tpu.core_type<tc>, window_params = [{transform_indices = @transform_0, window_bounds = array<i64: 1, 8, 32>}, {pipeline_mode = #tpu.pipeline_mode<synchronous>, transform_indices = @transform_1, window_bounds = array<i64: 1, 8, 8>}, {pipeline_mode = #tpu.pipeline_mode<synchronous>, transform_indices = @transform_2, window_bounds = array<i64: 1, 32>}, {pipeline_mode = #tpu.pipeline_mode<synchronous>, transform_indices = @transform_3, window_bounds = array<i64: 1, 32>}, {pipeline_mode = #tpu.pipeline_mode<synchronous>, transform_indices = @transform_4, window_bounds = array<i64: 32, 32>}, {pipeline_mode = #tpu.pipeline_mode<synchronous>, transform_indices = @transform_5, window_bounds = array<i64: 1, 32>}, {pipeline_mode = #tpu.pipeline_mode<synchronous>, transform_indices = @transform_6, window_bounds = array<i64: 32, 32>}, {pipeline_mode = #tpu.pipeline_mode<synchronous>, transform_indices = @transform_7, window_bounds = array<i64: 1, 32>}, {pipeline_mode = #tpu.pipeline_mode<synchronous>, transform_indices = @transform_8, window_bounds = array<i64: 32, 32>}, {pipeline_mode = #tpu.pipeline_mode<synchronous>, transform_indices = @transform_9, window_bounds = array<i64: 1, 32>}, {pipeline_mode = #tpu.pipeline_mode<synchronous>, transform_indices = @transform_10, window_bounds = array<i64: 32, 32>}, {pipeline_mode = #tpu.pipeline_mode<synchronous>, transform_indices = @transform_11, window_bounds = array<i64: 1, 32>}, {transform_indices = @transform_12, window_bounds = array<i64: 1, 8, 32>}]} {
    %c0 = arith.constant 0 : index
    %c0_0 = arith.constant 0 : index
    %c0_1 = arith.constant 0 : index
    %0 = vector.load %arg1[%c0, %c0_0, %c0_1] : memref<1x8x32xf32, #tpu.memory_space<vmem>>, vector<1x8x32xf32>
    %1 = vector.shape_cast %0 : vector<1x8x32xf32> to vector<8x32xf32>
    %c0_2 = arith.constant 0 : index
    %c0_3 = arith.constant 0 : index
    %2 = vector.load %arg3[%c0_2, %c0_3] : memref<1x32xf32, #tpu.memory_space<vmem>>, vector<1x32xf32>
    %c0_4 = arith.constant 0 : index
    %c0_5 = arith.constant 0 : index
    %3 = vector.load %arg4[%c0_4, %c0_5] : memref<1x32xf32, #tpu.memory_space<vmem>>, vector<1x32xf32>
    %cst = arith.constant dense<0.000000e+00> : vector<8xf32>
    %4 = vector.multi_reduction <add>, %1, %cst [1] : vector<8x32xf32> to vector<8xf32>
    %5 = vector.shape_cast %4 : vector<8xf32> to vector<8x1xf32>
    %cst_6 = arith.constant 3.200000e+01 : f32
    %6 = vector.broadcast %cst_6 : f32 to vector<8x1xf32>
    %7 = arith.divf %5, %6 : vector<8x1xf32>
    %8 = vector.broadcast %7 : vector<8x1xf32> to vector<8x32xf32>
    %9 = arith.subf %1, %8 : vector<8x32xf32>
    %10 = arith.mulf %9, %9 : vector<8x32xf32>
    %cst_7 = arith.constant dense<0.000000e+00> : vector<8xf32>
    %11 = vector.multi_reduction <add>, %10, %cst_7 [1] : vector<8x32xf32> to vector<8xf32>
    %12 = vector.shape_cast %11 : vector<8xf32> to vector<8x1xf32>
    %cst_8 = arith.constant 0.0322580636 : f32
    %13 = vector.broadcast %cst_8 : f32 to vector<8x1xf32>
    %14 = arith.mulf %12, %13 : vector<8x1xf32>
    %15 = math.sqrt %14 : vector<8x1xf32>
    %cst_9 = arith.constant 9.99999997E-7 : f32
    %16 = vector.broadcast %cst_9 : f32 to vector<8x1xf32>
    %17 = arith.addf %15, %16 : vector<8x1xf32>
    %18 = tpu.reciprocal %17 {approx = true} : vector<8x1xf32> -> vector<8x1xf32>
    %19 = vector.broadcast %18 : vector<8x1xf32> to vector<8x32xf32>
    %20 = arith.mulf %9, %19 : vector<8x32xf32>
    %21 = vector.broadcast %2 : vector<1x32xf32> to vector<8x32xf32>
    %22 = arith.mulf %21, %20 : vector<8x32xf32>
    %23 = vector.broadcast %3 : vector<1x32xf32> to vector<8x32xf32>
    %24 = arith.addf %22, %23 : vector<8x32xf32>
    %c0_10 = arith.constant 0 : index
    %c0_11 = arith.constant 0 : index
    %25 = vector.load %arg5[%c0_10, %c0_11] : memref<32x32xf32, #tpu.memory_space<vmem>>, vector<32x32xf32>
    %26 = arith.truncf %24 : vector<8x32xf32> to vector<8x32xbf16>
    %27 = arith.truncf %25 : vector<32x32xf32> to vector<32x32xbf16>
    %cst_12 = arith.constant dense<0.000000e+00> : vector<8x32xf32>
    %28 = tpu.matmul %26, %27, %cst_12 {dimension_numbers = #tpu.dot_dimension_numbers<[1], [0], [0], [1], [0, 0, 1, 1], [], []>} : vector<8x32xbf16>, vector<32x32xbf16>, vector<8x32xf32> -> vector<8x32xf32>
    %c0_13 = arith.constant 0 : index
    %c0_14 = arith.constant 0 : index
    %29 = vector.load %arg6[%c0_13, %c0_14] : memref<1x32xf32, #tpu.memory_space<vmem>>, vector<1x32xf32>
    %30 = vector.broadcast %29 : vector<1x32xf32> to vector<8x32xf32>
    %31 = arith.addf %28, %30 : vector<8x32xf32>
    %32 = arith.truncf %31 : vector<8x32xf32> to vector<8x32xbf16>
    %c0_15 = arith.constant 0 : index
    %c0_16 = arith.constant 0 : index
    %33 = vector.load %arg7[%c0_15, %c0_16] : memref<32x32xf32, #tpu.memory_space<vmem>>, vector<32x32xf32>
    %34 = arith.truncf %24 : vector<8x32xf32> to vector<8x32xbf16>
    %35 = arith.truncf %33 : vector<32x32xf32> to vector<32x32xbf16>
    %cst_17 = arith.constant dense<0.000000e+00> : vector<8x32xf32>
    %36 = tpu.matmul %34, %35, %cst_17 {dimension_numbers = #tpu.dot_dimension_numbers<[1], [0], [0], [1], [0, 0, 1, 1], [], []>} : vector<8x32xbf16>, vector<32x32xbf16>, vector<8x32xf32> -> vector<8x32xf32>
    %c0_18 = arith.constant 0 : index
    %c0_19 = arith.constant 0 : index
    %37 = vector.load %arg8[%c0_18, %c0_19] : memref<1x32xf32, #tpu.memory_space<vmem>>, vector<1x32xf32>
    %38 = vector.broadcast %37 : vector<1x32xf32> to vector<8x32xf32>
    %39 = arith.addf %36, %38 : vector<8x32xf32>
    %40 = arith.truncf %39 : vector<8x32xf32> to vector<8x32xbf16>
    %c0_20 = arith.constant 0 : index
    %c0_21 = arith.constant 0 : index
    %41 = vector.load %arg9[%c0_20, %c0_21] : memref<32x32xf32, #tpu.memory_space<vmem>>, vector<32x32xf32>
    %42 = arith.truncf %24 : vector<8x32xf32> to vector<8x32xbf16>
    %43 = arith.truncf %41 : vector<32x32xf32> to vector<32x32xbf16>
    %cst_22 = arith.constant dense<0.000000e+00> : vector<8x32xf32>
    %44 = tpu.matmul %42, %43, %cst_22 {dimension_numbers = #tpu.dot_dimension_numbers<[1], [0], [0], [1], [0, 0, 1, 1], [], []>} : vector<8x32xbf16>, vector<32x32xbf16>, vector<8x32xf32> -> vector<8x32xf32>
    %c0_23 = arith.constant 0 : index
    %c0_24 = arith.constant 0 : index
    %45 = vector.load %arg10[%c0_23, %c0_24] : memref<1x32xf32, #tpu.memory_space<vmem>>, vector<1x32xf32>
    %46 = vector.broadcast %45 : vector<1x32xf32> to vector<8x32xf32>
    %47 = arith.addf %44, %46 : vector<8x32xf32>
    %48 = arith.truncf %47 : vector<8x32xf32> to vector<8x32xbf16>
    %c0_25 = arith.constant 0 : index
    %c0_26 = arith.constant 0 : index
    %c0_27 = arith.constant 0 : index
    %49 = vector.load %arg2[%c0_25, %c0_26, %c0_27] : memref<1x8x8xf32, #tpu.memory_space<vmem>>, vector<1x8x8xf32>
    %50 = vector.shape_cast %49 : vector<1x8x8xf32> to vector<8x8xf32>
    %51 = vector.extract_strided_slice %32 {offsets = [0, 0], sizes = [8, 8], strides = [1, 1]} : vector<8x32xbf16> to vector<8x8xbf16>
    %52 = vector.extract_strided_slice %40 {offsets = [0, 0], sizes = [8, 8], strides = [1, 1]} : vector<8x32xbf16> to vector<8x8xbf16>
    %cst_28 = arith.constant dense<0.000000e+00> : vector<8x8xf32>
    %53 = tpu.matmul %51, %52, %cst_28 {dimension_numbers = #tpu.dot_dimension_numbers<[1], [1], [0], [0], [0, 0, 1, 0], [], []>} : vector<8x8xbf16>, vector<8x8xbf16>, vector<8x8xf32> -> vector<8x8xf32>
    %cst_29 = arith.constant 0.353553385 : f32
    %54 = vector.broadcast %cst_29 : f32 to vector<8x8xf32>
    %55 = arith.mulf %53, %54 : vector<8x8xf32>
    %56 = arith.addf %55, %50 : vector<8x8xf32>
    %cst_30 = arith.constant dense<0xFF800000> : vector<8xf32>
    %57 = vector.multi_reduction <maximumf>, %56, %cst_30 [1] : vector<8x8xf32> to vector<8xf32>
    %58 = vector.shape_cast %57 : vector<8xf32> to vector<8x1xf32>
    %59 = vector.broadcast %58 : vector<8x1xf32> to vector<8x8xf32>
    %60 = arith.subf %56, %59 : vector<8x8xf32>
    %61 = math.exp %60 : vector<8x8xf32>
    %cst_31 = arith.constant dense<0.000000e+00> : vector<8xf32>
    %62 = vector.multi_reduction <add>, %61, %cst_31 [1] : vector<8x8xf32> to vector<8xf32>
    %63 = vector.shape_cast %62 : vector<8xf32> to vector<8x1xf32>
    %64 = tpu.reciprocal %63 {approx = true} : vector<8x1xf32> -> vector<8x1xf32>
    %65 = vector.extract_strided_slice %48 {offsets = [0, 0], sizes = [8, 8], strides = [1, 1]} : vector<8x32xbf16> to vector<8x8xbf16>
    %66 = arith.truncf %61 : vector<8x8xf32> to vector<8x8xbf16>
    %cst_32 = arith.constant dense<0.000000e+00> : vector<8x8xf32>
    %67 = tpu.matmul %66, %65, %cst_32 {dimension_numbers = #tpu.dot_dimension_numbers<[1], [0], [0], [1], [0, 0, 1, 1], [], []>} : vector<8x8xbf16>, vector<8x8xbf16>, vector<8x8xf32> -> vector<8x8xf32>
    %68 = vector.broadcast %64 : vector<8x1xf32> to vector<8x8xf32>
    %69 = arith.mulf %67, %68 : vector<8x8xf32>
    %70 = arith.truncf %69 : vector<8x8xf32> to vector<8x8xbf16>
    %c0_33 = arith.constant 0 : index
    %c0_34 = arith.constant 0 : index
    %71 = vector.load %arg14[%c0_33, %c0_34] : memref<8x32xbf16, #tpu.memory_space<vmem>>, vector<8x8xbf16>
    tpu.vector_store %arg14[%c0_33, %c0_34], %70 {strides = array<i32>} : memref<8x32xbf16, #tpu.memory_space<vmem>>, vector<8x8xbf16>,
    %72 = vector.extract_strided_slice %32 {offsets = [0, 8], sizes = [8, 8], strides = [1, 1]} : vector<8x32xbf16> to vector<8x8xbf16>
    %73 = vector.extract_strided_slice %40 {offsets = [0, 8], sizes = [8, 8], strides = [1, 1]} : vector<8x32xbf16> to vector<8x8xbf16>
    %cst_35 = arith.constant dense<0.000000e+00> : vector<8x8xf32>
    %74 = tpu.matmul %72, %73, %cst_35 {dimension_numbers = #tpu.dot_dimension_numbers<[1], [1], [0], [0], [0, 0, 1, 0], [], []>} : vector<8x8xbf16>, vector<8x8xbf16>, vector<8x8xf32> -> vector<8x8xf32>
    %cst_36 = arith.constant 0.353553385 : f32
    %75 = vector.broadcast %cst_36 : f32 to vector<8x8xf32>
    %76 = arith.mulf %74, %75 : vector<8x8xf32>
    %77 = arith.addf %76, %50 : vector<8x8xf32>
    %cst_37 = arith.constant dense<0xFF800000> : vector<8xf32>
    %78 = vector.multi_reduction <maximumf>, %77, %cst_37 [1] : vector<8x8xf32> to vector<8xf32>
    %79 = vector.shape_cast %78 : vector<8xf32> to vector<8x1xf32>
    %80 = vector.broadcast %79 : vector<8x1xf32> to vector<8x8xf32>
    %81 = arith.subf %77, %80 : vector<8x8xf32>
    %82 = math.exp %81 : vector<8x8xf32>
    %cst_38 = arith.constant dense<0.000000e+00> : vector<8xf32>
    %83 = vector.multi_reduction <add>, %82, %cst_38 [1] : vector<8x8xf32> to vector<8xf32>
    %84 = vector.shape_cast %83 : vector<8xf32> to vector<8x1xf32>
    %85 = tpu.reciprocal %84 {approx = true} : vector<8x1xf32> -> vector<8x1xf32>
    %86 = vector.extract_strided_slice %48 {offsets = [0, 8], sizes = [8, 8], strides = [1, 1]} : vector<8x32xbf16> to vector<8x8xbf16>
    %87 = arith.truncf %82 : vector<8x8xf32> to vector<8x8xbf16>
    %cst_39 = arith.constant dense<0.000000e+00> : vector<8x8xf32>
    %88 = tpu.matmul %87, %86, %cst_39 {dimension_numbers = #tpu.dot_dimension_numbers<[1], [0], [0], [1], [0, 0, 1, 1], [], []>} : vector<8x8xbf16>, vector<8x8xbf16>, vector<8x8xf32> -> vector<8x8xf32>
    %89 = vector.broadcast %85 : vector<8x1xf32> to vector<8x8xf32>
    %90 = arith.mulf %88, %89 : vector<8x8xf32>
    %91 = arith.truncf %90 : vector<8x8xf32> to vector<8x8xbf16>
    %c0_40 = arith.constant 0 : index
    %c8 = arith.constant 8 : index
    %92 = vector.load %arg14[%c0_40, %c8] : memref<8x32xbf16, #tpu.memory_space<vmem>>, vector<8x8xbf16>
    tpu.vector_store %arg14[%c0_40, %c8], %91 {strides = array<i32>} : memref<8x32xbf16, #tpu.memory_space<vmem>>, vector<8x8xbf16>,
    %93 = vector.extract_strided_slice %32 {offsets = [0, 16], sizes = [8, 8], strides = [1, 1]} : vector<8x32xbf16> to vector<8x8xbf16>
    %94 = vector.extract_strided_slice %40 {offsets = [0, 16], sizes = [8, 8], strides = [1, 1]} : vector<8x32xbf16> to vector<8x8xbf16>
    %cst_41 = arith.constant dense<0.000000e+00> : vector<8x8xf32>
    %95 = tpu.matmul %93, %94, %cst_41 {dimension_numbers = #tpu.dot_dimension_numbers<[1], [1], [0], [0], [0, 0, 1, 0], [], []>} : vector<8x8xbf16>, vector<8x8xbf16>, vector<8x8xf32> -> vector<8x8xf32>
    %cst_42 = arith.constant 0.353553385 : f32
    %96 = vector.broadcast %cst_42 : f32 to vector<8x8xf32>
    %97 = arith.mulf %95, %96 : vector<8x8xf32>
    %98 = arith.addf %97, %50 : vector<8x8xf32>
    %cst_43 = arith.constant dense<0xFF800000> : vector<8xf32>
    %99 = vector.multi_reduction <maximumf>, %98, %cst_43 [1] : vector<8x8xf32> to vector<8xf32>
    %100 = vector.shape_cast %99 : vector<8xf32> to vector<8x1xf32>
    %101 = vector.broadcast %100 : vector<8x1xf32> to vector<8x8xf32>
    %102 = arith.subf %98, %101 : vector<8x8xf32>
    %103 = math.exp %102 : vector<8x8xf32>
    %cst_44 = arith.constant dense<0.000000e+00> : vector<8xf32>
    %104 = vector.multi_reduction <add>, %103, %cst_44 [1] : vector<8x8xf32> to vector<8xf32>
    %105 = vector.shape_cast %104 : vector<8xf32> to vector<8x1xf32>
    %106 = tpu.reciprocal %105 {approx = true} : vector<8x1xf32> -> vector<8x1xf32>
    %107 = vector.extract_strided_slice %48 {offsets = [0, 16], sizes = [8, 8], strides = [1, 1]} : vector<8x32xbf16> to vector<8x8xbf16>
    %108 = arith.truncf %103 : vector<8x8xf32> to vector<8x8xbf16>
    %cst_45 = arith.constant dense<0.000000e+00> : vector<8x8xf32>
    %109 = tpu.matmul %108, %107, %cst_45 {dimension_numbers = #tpu.dot_dimension_numbers<[1], [0], [0], [1], [0, 0, 1, 1], [], []>} : vector<8x8xbf16>, vector<8x8xbf16>, vector<8x8xf32> -> vector<8x8xf32>
    %110 = vector.broadcast %106 : vector<8x1xf32> to vector<8x8xf32>
    %111 = arith.mulf %109, %110 : vector<8x8xf32>
    %112 = arith.truncf %111 : vector<8x8xf32> to vector<8x8xbf16>
    %c0_46 = arith.constant 0 : index
    %c16 = arith.constant 16 : index
    %113 = vector.load %arg14[%c0_46, %c16] : memref<8x32xbf16, #tpu.memory_space<vmem>>, vector<8x8xbf16>
    tpu.vector_store %arg14[%c0_46, %c16], %112 {strides = array<i32>} : memref<8x32xbf16, #tpu.memory_space<vmem>>, vector<8x8xbf16>,
    %114 = vector.extract_strided_slice %32 {offsets = [0, 24], sizes = [8, 8], strides = [1, 1]} : vector<8x32xbf16> to vector<8x8xbf16>
    %115 = vector.extract_strided_slice %40 {offsets = [0, 24], sizes = [8, 8], strides = [1, 1]} : vector<8x32xbf16> to vector<8x8xbf16>
    %cst_47 = arith.constant dense<0.000000e+00> : vector<8x8xf32>
    %116 = tpu.matmul %114, %115, %cst_47 {dimension_numbers = #tpu.dot_dimension_numbers<[1], [1], [0], [0], [0, 0, 1, 0], [], []>} : vector<8x8xbf16>, vector<8x8xbf16>, vector<8x8xf32> -> vector<8x8xf32>
    %cst_48 = arith.constant 0.353553385 : f32
    %117 = vector.broadcast %cst_48 : f32 to vector<8x8xf32>
    %118 = arith.mulf %116, %117 : vector<8x8xf32>
    %119 = arith.addf %118, %50 : vector<8x8xf32>
    %cst_49 = arith.constant dense<0xFF800000> : vector<8xf32>
    %120 = vector.multi_reduction <maximumf>, %119, %cst_49 [1] : vector<8x8xf32> to vector<8xf32>
    %121 = vector.shape_cast %120 : vector<8xf32> to vector<8x1xf32>
    %122 = vector.broadcast %121 : vector<8x1xf32> to vector<8x8xf32>
    %123 = arith.subf %119, %122 : vector<8x8xf32>
    %124 = math.exp %123 : vector<8x8xf32>
    %cst_50 = arith.constant dense<0.000000e+00> : vector<8xf32>
    %125 = vector.multi_reduction <add>, %124, %cst_50 [1] : vector<8x8xf32> to vector<8xf32>
    %126 = vector.shape_cast %125 : vector<8xf32> to vector<8x1xf32>
    %127 = tpu.reciprocal %126 {approx = true} : vector<8x1xf32> -> vector<8x1xf32>
    %128 = vector.extract_strided_slice %48 {offsets = [0, 24], sizes = [8, 8], strides = [1, 1]} : vector<8x32xbf16> to vector<8x8xbf16>
    %129 = arith.truncf %124 : vector<8x8xf32> to vector<8x8xbf16>
    %cst_51 = arith.constant dense<0.000000e+00> : vector<8x8xf32>
    %130 = tpu.matmul %129, %128, %cst_51 {dimension_numbers = #tpu.dot_dimension_numbers<[1], [0], [0], [1], [0, 0, 1, 1], [], []>} : vector<8x8xbf16>, vector<8x8xbf16>, vector<8x8xf32> -> vector<8x8xf32>
    %131 = vector.broadcast %127 : vector<8x1xf32> to vector<8x8xf32>
    %132 = arith.mulf %130, %131 : vector<8x8xf32>
    %133 = arith.truncf %132 : vector<8x8xf32> to vector<8x8xbf16>
    %c0_52 = arith.constant 0 : index
    %c24 = arith.constant 24 : index
    %134 = vector.load %arg14[%c0_52, %c24] : memref<8x32xbf16, #tpu.memory_space<vmem>>, vector<8x8xbf16>
    tpu.vector_store %arg14[%c0_52, %c24], %133 {strides = array<i32>} : memref<8x32xbf16, #tpu.memory_space<vmem>>, vector<8x8xbf16>,
    %c0_53 = arith.constant 0 : index
    %c0_54 = arith.constant 0 : index
    %135 = vector.load %arg14[%c0_53, %c0_54] : memref<8x32xbf16, #tpu.memory_space<vmem>>, vector<8x32xbf16>
    %c0_55 = arith.constant 0 : index
    %c0_56 = arith.constant 0 : index
    %136 = vector.load %arg11[%c0_55, %c0_56] : memref<32x32xf32, #tpu.memory_space<vmem>>, vector<32x32xf32>
    %137 = arith.truncf %136 : vector<32x32xf32> to vector<32x32xbf16>
    %cst_57 = arith.constant dense<0.000000e+00> : vector<8x32xf32>
    %138 = tpu.matmul %135, %137, %cst_57 {dimension_numbers = #tpu.dot_dimension_numbers<[1], [0], [0], [1], [0, 0, 1, 1], [], []>} : vector<8x32xbf16>, vector<32x32xbf16>, vector<8x32xf32> -> vector<8x32xf32>
    %139 = arith.addf %1, %138 : vector<8x32xf32>
    %c0_58 = arith.constant 0 : index
    %c0_59 = arith.constant 0 : index
    %140 = vector.load %arg12[%c0_58, %c0_59] : memref<1x32xf32, #tpu.memory_space<vmem>>, vector<1x32xf32>
    %141 = vector.broadcast %140 : vector<1x32xf32> to vector<8x32xf32>
    %142 = arith.addf %139, %141 : vector<8x32xf32>
    %c0_60 = arith.constant 0 : index
    %c0_61 = arith.constant 0 : index
    %c0_62 = arith.constant 0 : index
    %143 = vector.load %arg13[%c0_60, %c0_61, %c0_62] : memref<1x8x32xf32, #tpu.memory_space<vmem>>, vector<1x8x32xf32>
    %144 = vector.shape_cast %143 : vector<1x8x32xf32> to vector<8x32xf32>
    %145 = vector.shape_cast %142 : vector<8x32xf32> to vector<1x8x32xf32>
    tpu.vector_store %arg13[%c0_60, %c0_61, %c0_62], %145 {strides = array<i32>} : memref<1x8x32xf32, #tpu.memory_space<vmem>>, vector<1x8x32xf32>,
    return
  }
  func.func @transform_0(%arg0: i32) -> (i32, i32, i32) {
    %c0_i32 = arith.constant 0 : i32
    %c0_i32_0 = arith.constant 0 : i32
    %c0_i32_1 = arith.constant 0 : i32
    return %arg0, %c0_i32, %c0_i32_0 : i32, i32, i32
  }
  func.func @transform_1(%arg0: i32) -> (i32, i32, i32) {
    %c0_i32 = arith.constant 0 : i32
    %c0_i32_0 = arith.constant 0 : i32
    %c0_i32_1 = arith.constant 0 : i32
    %c0_i32_2 = arith.constant 0 : i32
    return %c0_i32, %c0_i32_0, %c0_i32_1 : i32, i32, i32
  }
  func.func @transform_2(%arg0: i32) -> (i32, i32) {
    %c0_i32 = arith.constant 0 : i32
    %c0_i32_0 = arith.constant 0 : i32
    %c0_i32_1 = arith.constant 0 : i32
    return %c0_i32, %c0_i32_0 : i32, i32
  }
  func.func @transform_3(%arg0: i32) -> (i32, i32) {
    %c0_i32 = arith.constant 0 : i32
    %c0_i32_0 = arith.constant 0 : i32
    %c0_i32_1 = arith.constant 0 : i32
    return %c0_i32, %c0_i32_0 : i32, i32
  }
  func.func @transform_4(%arg0: i32) -> (i32, i32) {
    %c0_i32 = arith.constant 0 : i32
    %c0_i32_0 = arith.constant 0 : i32
    %c0_i32_1 = arith.constant 0 : i32
    return %c0_i32, %c0_i32_0 : i32, i32
  }
  func.func @transform_5(%arg0: i32) -> (i32, i32) {
    %c0_i32 = arith.constant 0 : i32
    %c0_i32_0 = arith.constant 0 : i32
    %c0_i32_1 = arith.constant 0 : i32
    return %c0_i32, %c0_i32_0 : i32, i32
  }
  func.func @transform_6(%arg0: i32) -> (i32, i32) {
    %c0_i32 = arith.constant 0 : i32
    %c0_i32_0 = arith.constant 0 : i32
    %c0_i32_1 = arith.constant 0 : i32
    return %c0_i32, %c0_i32_0 : i32, i32
  }
  func.func @transform_7(%arg0: i32) -> (i32, i32) {
    %c0_i32 = arith.constant 0 : i32
    %c0_i32_0 = arith.constant 0 : i32
    %c0_i32_1 = arith.constant 0 : i32
    return %c0_i32, %c0_i32_0 : i32, i32
  }
  func.func @transform_8(%arg0: i32) -> (i32, i32) {
    %c0_i32 = arith.constant 0 : i32
    %c0_i32_0 = arith.constant 0 : i32
    %c0_i32_1 = arith.constant 0 : i32
    return %c0_i32, %c0_i32_0 : i32, i32
  }
  func.func @transform_9(%arg0: i32) -> (i32, i32) {
    %c0_i32 = arith.constant 0 : i32
    %c0_i32_0 = arith.constant 0 : i32
    %c0_i32_1 = arith.constant 0 : i32
    return %c0_i32, %c0_i32_0 : i32, i32
  }
  func.func @transform_10(%arg0: i32) -> (i32, i32) {
    %c0_i32 = arith.constant 0 : i32
    %c0_i32_0 = arith.constant 0 : i32
    %c0_i32_1 = arith.constant 0 : i32
    return %c0_i32, %c0_i32_0 : i32, i32
  }
  func.func @transform_11(%arg0: i32) -> (i32, i32) {
    %c0_i32 = arith.constant 0 : i32
    %c0_i32_0 = arith.constant 0 : i32
    %c0_i32_1 = arith.constant 0 : i32
    return %c0_i32, %c0_i32_0 : i32, i32
  }
  func.func @transform_12(%arg0: i32) -> (i32, i32, i32) {
    %c0_i32 = arith.constant 0 : i32
    %c0_i32_0 = arith.constant 0 : i32
    %c0_i32_1 = arith.constant 0 : i32
    return %arg0, %c0_i32, %c0_i32_0 : i32, i32, i32
  }
}

module attributes {stable_mosaic.version = 11 : i64} {
  func.func @_ffn_sublayer_kernel(%arg0: i32, %arg1: i32, %arg2: i32, %arg3: memref<1x8x32xf32, #tpu.memory_space<vmem>>, %arg4: memref<1x32xf32, #tpu.memory_space<vmem>>, %arg5: memref<1x32xf32, #tpu.memory_space<vmem>>, %arg6: memref<32x64xf32, #tpu.memory_space<vmem>>, %arg7: memref<1x64xf32, #tpu.memory_space<vmem>>, %arg8: memref<64x32xf32, #tpu.memory_space<vmem>>, %arg9: memref<1x32xf32, #tpu.memory_space<vmem>>, %arg10: memref<1x8x32xf32, #tpu.memory_space<vmem>>, %arg11: memref<8x32xbf16, #tpu.memory_space<vmem>>) attributes {dimension_semantics = [#tpu.dimension_semantics<parallel>, #tpu.dimension_semantics<parallel>, #tpu.dimension_semantics<arbitrary>], iteration_bounds = array<i64: 2, 1, 1>, scalar_prefetch = 0 : i64, scratch_operands = 1 : i64, tpu.core_type = #tpu.core_type<tc>, window_params = [{transform_indices = @transform_0, window_bounds = array<i64: 1, 8, 32>}, {pipeline_mode = #tpu.pipeline_mode<synchronous>, transform_indices = @transform_1, window_bounds = array<i64: 1, 32>}, {pipeline_mode = #tpu.pipeline_mode<synchronous>, transform_indices = @transform_2, window_bounds = array<i64: 1, 32>}, {transform_indices = @transform_3, window_bounds = array<i64: 32, 64>}, {transform_indices = @transform_4, window_bounds = array<i64: 1, 64>}, {transform_indices = @transform_5, window_bounds = array<i64: 64, 32>}, {pipeline_mode = #tpu.pipeline_mode<synchronous>, transform_indices = @transform_6, window_bounds = array<i64: 1, 32>}, {transform_indices = @transform_7, window_bounds = array<i64: 1, 8, 32>}]} {
    %c0_i32 = arith.constant 0 : i32
    %0 = arith.cmpi eq, %arg2, %c0_i32 : i32
    %1 = arith.extui %0 : i1 to i32
    %c0_i32_0 = arith.constant 0 : i32
    %2 = arith.cmpi ne, %1, %c0_i32_0 : i32
    scf.if %2 {
      %c0_16 = arith.constant 0 : index
      %c0_17 = arith.constant 0 : index
      %c0_18 = arith.constant 0 : index
      %22 = vector.load %arg3[%c0_16, %c0_17, %c0_18] : memref<1x8x32xf32, #tpu.memory_space<vmem>>, vector<1x8x32xf32>
      %23 = vector.shape_cast %22 : vector<1x8x32xf32> to vector<8x32xf32>
      %c0_19 = arith.constant 0 : index
      %c0_20 = arith.constant 0 : index
      %24 = vector.load %arg4[%c0_19, %c0_20] : memref<1x32xf32, #tpu.memory_space<vmem>>, vector<1x32xf32>
      %c0_21 = arith.constant 0 : index
      %c0_22 = arith.constant 0 : index
      %25 = vector.load %arg5[%c0_21, %c0_22] : memref<1x32xf32, #tpu.memory_space<vmem>>, vector<1x32xf32>
      %cst_23 = arith.constant dense<0.000000e+00> : vector<8xf32>
      %26 = vector.multi_reduction <add>, %23, %cst_23 [1] : vector<8x32xf32> to vector<8xf32>
      %27 = vector.shape_cast %26 : vector<8xf32> to vector<8x1xf32>
      %cst_24 = arith.constant 3.200000e+01 : f32
      %28 = vector.broadcast %cst_24 : f32 to vector<8x1xf32>
      %29 = arith.divf %27, %28 : vector<8x1xf32>
      %30 = vector.broadcast %29 : vector<8x1xf32> to vector<8x32xf32>
      %31 = arith.subf %23, %30 : vector<8x32xf32>
      %32 = arith.mulf %31, %31 : vector<8x32xf32>
      %cst_25 = arith.constant dense<0.000000e+00> : vector<8xf32>
      %33 = vector.multi_reduction <add>, %32, %cst_25 [1] : vector<8x32xf32> to vector<8xf32>
      %34 = vector.shape_cast %33 : vector<8xf32> to vector<8x1xf32>
      %cst_26 = arith.constant 0.0322580636 : f32
      %35 = vector.broadcast %cst_26 : f32 to vector<8x1xf32>
      %36 = arith.mulf %34, %35 : vector<8x1xf32>
      %37 = math.sqrt %36 : vector<8x1xf32>
      %cst_27 = arith.constant 9.99999997E-7 : f32
      %38 = vector.broadcast %cst_27 : f32 to vector<8x1xf32>
      %39 = arith.addf %37, %38 : vector<8x1xf32>
      %40 = tpu.reciprocal %39 {approx = true} : vector<8x1xf32> -> vector<8x1xf32>
      %41 = vector.broadcast %40 : vector<8x1xf32> to vector<8x32xf32>
      %42 = arith.mulf %31, %41 : vector<8x32xf32>
      %43 = vector.broadcast %24 : vector<1x32xf32> to vector<8x32xf32>
      %44 = arith.mulf %43, %42 : vector<8x32xf32>
      %45 = vector.broadcast %25 : vector<1x32xf32> to vector<8x32xf32>
      %46 = arith.addf %44, %45 : vector<8x32xf32>
      %47 = arith.truncf %46 : vector<8x32xf32> to vector<8x32xbf16>
      %c0_28 = arith.constant 0 : index
      %c0_29 = arith.constant 0 : index
      %48 = vector.load %arg11[%c0_28, %c0_29] : memref<8x32xbf16, #tpu.memory_space<vmem>>, vector<8x32xbf16>
      tpu.vector_store %arg11[%c0_28, %c0_29], %47 {strides = array<i32>} : memref<8x32xbf16, #tpu.memory_space<vmem>>, vector<8x32xbf16>,
      %c0_30 = arith.constant 0 : index
      %c0_31 = arith.constant 0 : index
      %49 = vector.load %arg9[%c0_30, %c0_31] : memref<1x32xf32, #tpu.memory_space<vmem>>, vector<1x32xf32>
      %50 = vector.broadcast %49 : vector<1x32xf32> to vector<8x32xf32>
      %51 = arith.addf %23, %50 : vector<8x32xf32>
      %c0_32 = arith.constant 0 : index
      %c0_33 = arith.constant 0 : index
      %c0_34 = arith.constant 0 : index
      %52 = vector.load %arg10[%c0_32, %c0_33, %c0_34] : memref<1x8x32xf32, #tpu.memory_space<vmem>>, vector<1x8x32xf32>
      %53 = vector.shape_cast %52 : vector<1x8x32xf32> to vector<8x32xf32>
      %54 = vector.shape_cast %51 : vector<8x32xf32> to vector<1x8x32xf32>
      tpu.vector_store %arg10[%c0_32, %c0_33, %c0_34], %54 {strides = array<i32>} : memref<1x8x32xf32, #tpu.memory_space<vmem>>, vector<1x8x32xf32>,
    } else {
    }
    %c0 = arith.constant 0 : index
    %c0_1 = arith.constant 0 : index
    %3 = vector.load %arg11[%c0, %c0_1] : memref<8x32xbf16, #tpu.memory_space<vmem>>, vector<8x32xbf16>
    %c0_2 = arith.constant 0 : index
    %c0_3 = arith.constant 0 : index
    %4 = vector.load %arg6[%c0_2, %c0_3] : memref<32x64xf32, #tpu.memory_space<vmem>>, vector<32x64xf32>
    %5 = arith.truncf %4 : vector<32x64xf32> to vector<32x64xbf16>
    %cst = arith.constant dense<0.000000e+00> : vector<8x64xf32>
    %6 = tpu.matmul %3, %5, %cst {dimension_numbers = #tpu.dot_dimension_numbers<[1], [0], [0], [1], [0, 0, 1, 1], [], []>} : vector<8x32xbf16>, vector<32x64xbf16>, vector<8x64xf32> -> vector<8x64xf32>
    %c0_4 = arith.constant 0 : index
    %c0_5 = arith.constant 0 : index
    %7 = vector.load %arg7[%c0_4, %c0_5] : memref<1x64xf32, #tpu.memory_space<vmem>>, vector<1x64xf32>
    %8 = vector.broadcast %7 : vector<1x64xf32> to vector<8x64xf32>
    %9 = arith.addf %6, %8 : vector<8x64xf32>
    %cst_6 = arith.constant 0.000000e+00 : f32
    %10 = vector.broadcast %cst_6 : f32 to vector<8x64xf32>
    %11 = arith.maximumf %9, %10 : vector<8x64xf32>
    %c0_7 = arith.constant 0 : index
    %c0_8 = arith.constant 0 : index
    %c0_9 = arith.constant 0 : index
    %12 = vector.load %arg10[%c0_7, %c0_8, %c0_9] : memref<1x8x32xf32, #tpu.memory_space<vmem>>, vector<1x8x32xf32>
    %13 = vector.shape_cast %12 : vector<1x8x32xf32> to vector<8x32xf32>
    %c0_10 = arith.constant 0 : index
    %c0_11 = arith.constant 0 : index
    %14 = vector.load %arg8[%c0_10, %c0_11] : memref<64x32xf32, #tpu.memory_space<vmem>>, vector<64x32xf32>
    %15 = arith.truncf %11 : vector<8x64xf32> to vector<8x64xbf16>
    %16 = arith.truncf %14 : vector<64x32xf32> to vector<64x32xbf16>
    %cst_12 = arith.constant dense<0.000000e+00> : vector<8x32xf32>
    %17 = tpu.matmul %15, %16, %cst_12 {dimension_numbers = #tpu.dot_dimension_numbers<[1], [0], [0], [1], [0, 0, 1, 1], [], []>} : vector<8x64xbf16>, vector<64x32xbf16>, vector<8x32xf32> -> vector<8x32xf32>
    %18 = arith.addf %13, %17 : vector<8x32xf32>
    %c0_13 = arith.constant 0 : index
    %c0_14 = arith.constant 0 : index
    %c0_15 = arith.constant 0 : index
    %19 = vector.load %arg10[%c0_13, %c0_14, %c0_15] : memref<1x8x32xf32, #tpu.memory_space<vmem>>, vector<1x8x32xf32>
    %20 = vector.shape_cast %19 : vector<1x8x32xf32> to vector<8x32xf32>
    %21 = vector.shape_cast %18 : vector<8x32xf32> to vector<1x8x32xf32>
    tpu.vector_store %arg10[%c0_13, %c0_14, %c0_15], %21 {strides = array<i32>} : memref<1x8x32xf32, #tpu.memory_space<vmem>>, vector<1x8x32xf32>,
    return
  }
  func.func @transform_0(%arg0: i32, %arg1: i32, %arg2: i32) -> (i32, i32, i32) {
    %c0_i32 = arith.constant 0 : i32
    %c0_i32_0 = arith.constant 0 : i32
    return %arg0, %arg1, %c0_i32 : i32, i32, i32
  }
  func.func @transform_1(%arg0: i32, %arg1: i32, %arg2: i32) -> (i32, i32) {
    %c0_i32 = arith.constant 0 : i32
    %c0_i32_0 = arith.constant 0 : i32
    %c0_i32_1 = arith.constant 0 : i32
    return %c0_i32, %c0_i32_0 : i32, i32
  }
  func.func @transform_2(%arg0: i32, %arg1: i32, %arg2: i32) -> (i32, i32) {
    %c0_i32 = arith.constant 0 : i32
    %c0_i32_0 = arith.constant 0 : i32
    %c0_i32_1 = arith.constant 0 : i32
    return %c0_i32, %c0_i32_0 : i32, i32
  }
  func.func @transform_3(%arg0: i32, %arg1: i32, %arg2: i32) -> (i32, i32) {
    %c0_i32 = arith.constant 0 : i32
    %c0_i32_0 = arith.constant 0 : i32
    return %c0_i32, %arg2 : i32, i32
  }
  func.func @transform_4(%arg0: i32, %arg1: i32, %arg2: i32) -> (i32, i32) {
    %c0_i32 = arith.constant 0 : i32
    %c0_i32_0 = arith.constant 0 : i32
    return %c0_i32, %arg2 : i32, i32
  }
  func.func @transform_5(%arg0: i32, %arg1: i32, %arg2: i32) -> (i32, i32) {
    %c0_i32 = arith.constant 0 : i32
    %c0_i32_0 = arith.constant 0 : i32
    return %arg2, %c0_i32 : i32, i32
  }
  func.func @transform_6(%arg0: i32, %arg1: i32, %arg2: i32) -> (i32, i32) {
    %c0_i32 = arith.constant 0 : i32
    %c0_i32_0 = arith.constant 0 : i32
    %c0_i32_1 = arith.constant 0 : i32
    return %c0_i32, %c0_i32_0 : i32, i32
  }
  func.func @transform_7(%arg0: i32, %arg1: i32, %arg2: i32) -> (i32, i32, i32) {
    %c0_i32 = arith.constant 0 : i32
    %c0_i32_0 = arith.constant 0 : i32
    return %arg0, %arg1, %c0_i32 : i32, i32, i32
  }
}

module attributes {stable_mosaic.version = 11 : i64} {
  func.func @_attn_sublayer_kernel(%arg0: i32, %arg1: memref<1x8x32xf32, #tpu.memory_space<vmem>>, %arg2: memref<1x8x8xf32, #tpu.memory_space<vmem>>, %arg3: memref<1x32xf32, #tpu.memory_space<vmem>>, %arg4: memref<1x32xf32, #tpu.memory_space<vmem>>, %arg5: memref<32x32xf32, #tpu.memory_space<vmem>>, %arg6: memref<1x32xf32, #tpu.memory_space<vmem>>, %arg7: memref<32x32xf32, #tpu.memory_space<vmem>>, %arg8: memref<1x32xf32, #tpu.memory_space<vmem>>, %arg9: memref<32x32xf32, #tpu.memory_space<vmem>>, %arg10: memref<1x32xf32, #tpu.memory_space<vmem>>, %arg11: memref<32x32xf32, #tpu.memory_space<vmem>>, %arg12: memref<1x32xf32, #tpu.memory_space<vmem>>, %arg13: memref<1x8x32xf32, #tpu.memory_space<vmem>>, %arg14: memref<8x32xbf16, #tpu.memory_space<vmem>>) attributes {dimension_semantics = [#tpu.dimension_semantics<parallel>], iteration_bounds = array<i64: 2>, scalar_prefetch = 0 : i64, scratch_operands = 1 : i64, tpu.core_type = #tpu.core_type<tc>, window_params = [{transform_indices = @transform_0, window_bounds = array<i64: 1, 8, 32>}, {pipeline_mode = #tpu.pipeline_mode<synchronous>, transform_indices = @transform_1, window_bounds = array<i64: 1, 8, 8>}, {pipeline_mode = #tpu.pipeline_mode<synchronous>, transform_indices = @transform_2, window_bounds = array<i64: 1, 32>}, {pipeline_mode = #tpu.pipeline_mode<synchronous>, transform_indices = @transform_3, window_bounds = array<i64: 1, 32>}, {pipeline_mode = #tpu.pipeline_mode<synchronous>, transform_indices = @transform_4, window_bounds = array<i64: 32, 32>}, {pipeline_mode = #tpu.pipeline_mode<synchronous>, transform_indices = @transform_5, window_bounds = array<i64: 1, 32>}, {pipeline_mode = #tpu.pipeline_mode<synchronous>, transform_indices = @transform_6, window_bounds = array<i64: 32, 32>}, {pipeline_mode = #tpu.pipeline_mode<synchronous>, transform_indices = @transform_7, window_bounds = array<i64: 1, 32>}, {pipeline_mode = #tpu.pipeline_mode<synchronous>, transform_indices = @transform_8, window_bounds = array<i64: 32, 32>}, {pipeline_mode = #tpu.pipeline_mode<synchronous>, transform_indices = @transform_9, window_bounds = array<i64: 1, 32>}, {pipeline_mode = #tpu.pipeline_mode<synchronous>, transform_indices = @transform_10, window_bounds = array<i64: 32, 32>}, {pipeline_mode = #tpu.pipeline_mode<synchronous>, transform_indices = @transform_11, window_bounds = array<i64: 1, 32>}, {transform_indices = @transform_12, window_bounds = array<i64: 1, 8, 32>}]} {
    %c0 = arith.constant 0 : index
    %c0_0 = arith.constant 0 : index
    %c0_1 = arith.constant 0 : index
    %0 = vector.load %arg1[%c0, %c0_0, %c0_1] : memref<1x8x32xf32, #tpu.memory_space<vmem>>, vector<1x8x32xf32>
    %1 = vector.shape_cast %0 : vector<1x8x32xf32> to vector<8x32xf32>
    %c0_2 = arith.constant 0 : index
    %c0_3 = arith.constant 0 : index
    %2 = vector.load %arg3[%c0_2, %c0_3] : memref<1x32xf32, #tpu.memory_space<vmem>>, vector<1x32xf32>
    %c0_4 = arith.constant 0 : index
    %c0_5 = arith.constant 0 : index
    %3 = vector.load %arg4[%c0_4, %c0_5] : memref<1x32xf32, #tpu.memory_space<vmem>>, vector<1x32xf32>
    %cst = arith.constant dense<0.000000e+00> : vector<8xf32>
    %4 = vector.multi_reduction <add>, %1, %cst [1] : vector<8x32xf32> to vector<8xf32>
    %5 = vector.shape_cast %4 : vector<8xf32> to vector<8x1xf32>
    %cst_6 = arith.constant 3.200000e+01 : f32
    %6 = vector.broadcast %cst_6 : f32 to vector<8x1xf32>
    %7 = arith.divf %5, %6 : vector<8x1xf32>
    %8 = vector.broadcast %7 : vector<8x1xf32> to vector<8x32xf32>
    %9 = arith.subf %1, %8 : vector<8x32xf32>
    %10 = arith.mulf %9, %9 : vector<8x32xf32>
    %cst_7 = arith.constant dense<0.000000e+00> : vector<8xf32>
    %11 = vector.multi_reduction <add>, %10, %cst_7 [1] : vector<8x32xf32> to vector<8xf32>
    %12 = vector.shape_cast %11 : vector<8xf32> to vector<8x1xf32>
    %cst_8 = arith.constant 0.0322580636 : f32
    %13 = vector.broadcast %cst_8 : f32 to vector<8x1xf32>
    %14 = arith.mulf %12, %13 : vector<8x1xf32>
    %15 = math.sqrt %14 : vector<8x1xf32>
    %cst_9 = arith.constant 9.99999997E-7 : f32
    %16 = vector.broadcast %cst_9 : f32 to vector<8x1xf32>
    %17 = arith.addf %15, %16 : vector<8x1xf32>
    %18 = tpu.reciprocal %17 {approx = true} : vector<8x1xf32> -> vector<8x1xf32>
    %19 = vector.broadcast %18 : vector<8x1xf32> to vector<8x32xf32>
    %20 = arith.mulf %9, %19 : vector<8x32xf32>
    %21 = vector.broadcast %2 : vector<1x32xf32> to vector<8x32xf32>
    %22 = arith.mulf %21, %20 : vector<8x32xf32>
    %23 = vector.broadcast %3 : vector<1x32xf32> to vector<8x32xf32>
    %24 = arith.addf %22, %23 : vector<8x32xf32>
    %c0_10 = arith.constant 0 : index
    %c0_11 = arith.constant 0 : index
    %25 = vector.load %arg5[%c0_10, %c0_11] : memref<32x32xf32, #tpu.memory_space<vmem>>, vector<32x32xf32>
    %26 = arith.truncf %24 : vector<8x32xf32> to vector<8x32xbf16>
    %27 = arith.truncf %25 : vector<32x32xf32> to vector<32x32xbf16>
    %cst_12 = arith.constant dense<0.000000e+00> : vector<8x32xf32>
    %28 = tpu.matmul %26, %27, %cst_12 {dimension_numbers = #tpu.dot_dimension_numbers<[1], [0], [0], [1], [0, 0, 1, 1], [], []>} : vector<8x32xbf16>, vector<32x32xbf16>, vector<8x32xf32> -> vector<8x32xf32>
    %c0_13 = arith.constant 0 : index
    %c0_14 = arith.constant 0 : index
    %29 = vector.load %arg6[%c0_13, %c0_14] : memref<1x32xf32, #tpu.memory_space<vmem>>, vector<1x32xf32>
    %30 = vector.broadcast %29 : vector<1x32xf32> to vector<8x32xf32>
    %31 = arith.addf %28, %30 : vector<8x32xf32>
    %32 = arith.truncf %31 : vector<8x32xf32> to vector<8x32xbf16>
    %c0_15 = arith.constant 0 : index
    %c0_16 = arith.constant 0 : index
    %33 = vector.load %arg7[%c0_15, %c0_16] : memref<32x32xf32, #tpu.memory_space<vmem>>, vector<32x32xf32>
    %34 = arith.truncf %24 : vector<8x32xf32> to vector<8x32xbf16>
    %35 = arith.truncf %33 : vector<32x32xf32> to vector<32x32xbf16>
    %cst_17 = arith.constant dense<0.000000e+00> : vector<8x32xf32>
    %36 = tpu.matmul %34, %35, %cst_17 {dimension_numbers = #tpu.dot_dimension_numbers<[1], [0], [0], [1], [0, 0, 1, 1], [], []>} : vector<8x32xbf16>, vector<32x32xbf16>, vector<8x32xf32> -> vector<8x32xf32>
    %c0_18 = arith.constant 0 : index
    %c0_19 = arith.constant 0 : index
    %37 = vector.load %arg8[%c0_18, %c0_19] : memref<1x32xf32, #tpu.memory_space<vmem>>, vector<1x32xf32>
    %38 = vector.broadcast %37 : vector<1x32xf32> to vector<8x32xf32>
    %39 = arith.addf %36, %38 : vector<8x32xf32>
    %40 = arith.truncf %39 : vector<8x32xf32> to vector<8x32xbf16>
    %c0_20 = arith.constant 0 : index
    %c0_21 = arith.constant 0 : index
    %41 = vector.load %arg9[%c0_20, %c0_21] : memref<32x32xf32, #tpu.memory_space<vmem>>, vector<32x32xf32>
    %42 = arith.truncf %24 : vector<8x32xf32> to vector<8x32xbf16>
    %43 = arith.truncf %41 : vector<32x32xf32> to vector<32x32xbf16>
    %cst_22 = arith.constant dense<0.000000e+00> : vector<8x32xf32>
    %44 = tpu.matmul %42, %43, %cst_22 {dimension_numbers = #tpu.dot_dimension_numbers<[1], [0], [0], [1], [0, 0, 1, 1], [], []>} : vector<8x32xbf16>, vector<32x32xbf16>, vector<8x32xf32> -> vector<8x32xf32>
    %c0_23 = arith.constant 0 : index
    %c0_24 = arith.constant 0 : index
    %45 = vector.load %arg10[%c0_23, %c0_24] : memref<1x32xf32, #tpu.memory_space<vmem>>, vector<1x32xf32>
    %46 = vector.broadcast %45 : vector<1x32xf32> to vector<8x32xf32>
    %47 = arith.addf %44, %46 : vector<8x32xf32>
    %48 = arith.truncf %47 : vector<8x32xf32> to vector<8x32xbf16>
    %c0_25 = arith.constant 0 : index
    %c0_26 = arith.constant 0 : index
    %c0_27 = arith.constant 0 : index
    %49 = vector.load %arg2[%c0_25, %c0_26, %c0_27] : memref<1x8x8xf32, #tpu.memory_space<vmem>>, vector<1x8x8xf32>
    %50 = vector.shape_cast %49 : vector<1x8x8xf32> to vector<8x8xf32>
    %51 = vector.extract_strided_slice %32 {offsets = [0, 0], sizes = [8, 8], strides = [1, 1]} : vector<8x32xbf16> to vector<8x8xbf16>
    %52 = vector.extract_strided_slice %40 {offsets = [0, 0], sizes = [8, 8], strides = [1, 1]} : vector<8x32xbf16> to vector<8x8xbf16>
    %cst_28 = arith.constant dense<0.000000e+00> : vector<8x8xf32>
    %53 = tpu.matmul %51, %52, %cst_28 {dimension_numbers = #tpu.dot_dimension_numbers<[1], [1], [0], [0], [0, 0, 1, 0], [], []>} : vector<8x8xbf16>, vector<8x8xbf16>, vector<8x8xf32> -> vector<8x8xf32>
    %cst_29 = arith.constant 0.353553385 : f32
    %54 = vector.broadcast %cst_29 : f32 to vector<8x8xf32>
    %55 = arith.mulf %53, %54 : vector<8x8xf32>
    %56 = arith.addf %55, %50 : vector<8x8xf32>
    %cst_30 = arith.constant dense<0xFF800000> : vector<8xf32>
    %57 = vector.multi_reduction <maximumf>, %56, %cst_30 [1] : vector<8x8xf32> to vector<8xf32>
    %58 = vector.shape_cast %57 : vector<8xf32> to vector<8x1xf32>
    %59 = vector.broadcast %58 : vector<8x1xf32> to vector<8x8xf32>
    %60 = arith.subf %56, %59 : vector<8x8xf32>
    %61 = math.exp %60 : vector<8x8xf32>
    %cst_31 = arith.constant dense<0.000000e+00> : vector<8xf32>
    %62 = vector.multi_reduction <add>, %61, %cst_31 [1] : vector<8x8xf32> to vector<8xf32>
    %63 = vector.shape_cast %62 : vector<8xf32> to vector<8x1xf32>
    %64 = tpu.reciprocal %63 {approx = true} : vector<8x1xf32> -> vector<8x1xf32>
    %65 = vector.extract_strided_slice %48 {offsets = [0, 0], sizes = [8, 8], strides = [1, 1]} : vector<8x32xbf16> to vector<8x8xbf16>
    %66 = arith.truncf %61 : vector<8x8xf32> to vector<8x8xbf16>
    %cst_32 = arith.constant dense<0.000000e+00> : vector<8x8xf32>
    %67 = tpu.matmul %66, %65, %cst_32 {dimension_numbers = #tpu.dot_dimension_numbers<[1], [0], [0], [1], [0, 0, 1, 1], [], []>} : vector<8x8xbf16>, vector<8x8xbf16>, vector<8x8xf32> -> vector<8x8xf32>
    %68 = vector.broadcast %64 : vector<8x1xf32> to vector<8x8xf32>
    %69 = arith.mulf %67, %68 : vector<8x8xf32>
    %70 = arith.truncf %69 : vector<8x8xf32> to vector<8x8xbf16>
    %c0_33 = arith.constant 0 : index
    %c0_34 = arith.constant 0 : index
    %71 = vector.load %arg14[%c0_33, %c0_34] : memref<8x32xbf16, #tpu.memory_space<vmem>>, vector<8x8xbf16>
    tpu.vector_store %arg14[%c0_33, %c0_34], %70 {strides = array<i32>} : memref<8x32xbf16, #tpu.memory_space<vmem>>, vector<8x8xbf16>,
    %72 = vector.extract_strided_slice %32 {offsets = [0, 8], sizes = [8, 8], strides = [1, 1]} : vector<8x32xbf16> to vector<8x8xbf16>
    %73 = vector.extract_strided_slice %40 {offsets = [0, 8], sizes = [8, 8], strides = [1, 1]} : vector<8x32xbf16> to vector<8x8xbf16>
    %cst_35 = arith.constant dense<0.000000e+00> : vector<8x8xf32>
    %74 = tpu.matmul %72, %73, %cst_35 {dimension_numbers = #tpu.dot_dimension_numbers<[1], [1], [0], [0], [0, 0, 1, 0], [], []>} : vector<8x8xbf16>, vector<8x8xbf16>, vector<8x8xf32> -> vector<8x8xf32>
    %cst_36 = arith.constant 0.353553385 : f32
    %75 = vector.broadcast %cst_36 : f32 to vector<8x8xf32>
    %76 = arith.mulf %74, %75 : vector<8x8xf32>
    %77 = arith.addf %76, %50 : vector<8x8xf32>
    %cst_37 = arith.constant dense<0xFF800000> : vector<8xf32>
    %78 = vector.multi_reduction <maximumf>, %77, %cst_37 [1] : vector<8x8xf32> to vector<8xf32>
    %79 = vector.shape_cast %78 : vector<8xf32> to vector<8x1xf32>
    %80 = vector.broadcast %79 : vector<8x1xf32> to vector<8x8xf32>
    %81 = arith.subf %77, %80 : vector<8x8xf32>
    %82 = math.exp %81 : vector<8x8xf32>
    %cst_38 = arith.constant dense<0.000000e+00> : vector<8xf32>
    %83 = vector.multi_reduction <add>, %82, %cst_38 [1] : vector<8x8xf32> to vector<8xf32>
    %84 = vector.shape_cast %83 : vector<8xf32> to vector<8x1xf32>
    %85 = tpu.reciprocal %84 {approx = true} : vector<8x1xf32> -> vector<8x1xf32>
    %86 = vector.extract_strided_slice %48 {offsets = [0, 8], sizes = [8, 8], strides = [1, 1]} : vector<8x32xbf16> to vector<8x8xbf16>
    %87 = arith.truncf %82 : vector<8x8xf32> to vector<8x8xbf16>
    %cst_39 = arith.constant dense<0.000000e+00> : vector<8x8xf32>
    %88 = tpu.matmul %87, %86, %cst_39 {dimension_numbers = #tpu.dot_dimension_numbers<[1], [0], [0], [1], [0, 0, 1, 1], [], []>} : vector<8x8xbf16>, vector<8x8xbf16>, vector<8x8xf32> -> vector<8x8xf32>
    %89 = vector.broadcast %85 : vector<8x1xf32> to vector<8x8xf32>
    %90 = arith.mulf %88, %89 : vector<8x8xf32>
    %91 = arith.truncf %90 : vector<8x8xf32> to vector<8x8xbf16>
    %c0_40 = arith.constant 0 : index
    %c8 = arith.constant 8 : index
    %92 = vector.load %arg14[%c0_40, %c8] : memref<8x32xbf16, #tpu.memory_space<vmem>>, vector<8x8xbf16>
    tpu.vector_store %arg14[%c0_40, %c8], %91 {strides = array<i32>} : memref<8x32xbf16, #tpu.memory_space<vmem>>, vector<8x8xbf16>,
    %93 = vector.extract_strided_slice %32 {offsets = [0, 16], sizes = [8, 8], strides = [1, 1]} : vector<8x32xbf16> to vector<8x8xbf16>
    %94 = vector.extract_strided_slice %40 {offsets = [0, 16], sizes = [8, 8], strides = [1, 1]} : vector<8x32xbf16> to vector<8x8xbf16>
    %cst_41 = arith.constant dense<0.000000e+00> : vector<8x8xf32>
    %95 = tpu.matmul %93, %94, %cst_41 {dimension_numbers = #tpu.dot_dimension_numbers<[1], [1], [0], [0], [0, 0, 1, 0], [], []>} : vector<8x8xbf16>, vector<8x8xbf16>, vector<8x8xf32> -> vector<8x8xf32>
    %cst_42 = arith.constant 0.353553385 : f32
    %96 = vector.broadcast %cst_42 : f32 to vector<8x8xf32>
    %97 = arith.mulf %95, %96 : vector<8x8xf32>
    %98 = arith.addf %97, %50 : vector<8x8xf32>
    %cst_43 = arith.constant dense<0xFF800000> : vector<8xf32>
    %99 = vector.multi_reduction <maximumf>, %98, %cst_43 [1] : vector<8x8xf32> to vector<8xf32>
    %100 = vector.shape_cast %99 : vector<8xf32> to vector<8x1xf32>
    %101 = vector.broadcast %100 : vector<8x1xf32> to vector<8x8xf32>
    %102 = arith.subf %98, %101 : vector<8x8xf32>
    %103 = math.exp %102 : vector<8x8xf32>
    %cst_44 = arith.constant dense<0.000000e+00> : vector<8xf32>
    %104 = vector.multi_reduction <add>, %103, %cst_44 [1] : vector<8x8xf32> to vector<8xf32>
    %105 = vector.shape_cast %104 : vector<8xf32> to vector<8x1xf32>
    %106 = tpu.reciprocal %105 {approx = true} : vector<8x1xf32> -> vector<8x1xf32>
    %107 = vector.extract_strided_slice %48 {offsets = [0, 16], sizes = [8, 8], strides = [1, 1]} : vector<8x32xbf16> to vector<8x8xbf16>
    %108 = arith.truncf %103 : vector<8x8xf32> to vector<8x8xbf16>
    %cst_45 = arith.constant dense<0.000000e+00> : vector<8x8xf32>
    %109 = tpu.matmul %108, %107, %cst_45 {dimension_numbers = #tpu.dot_dimension_numbers<[1], [0], [0], [1], [0, 0, 1, 1], [], []>} : vector<8x8xbf16>, vector<8x8xbf16>, vector<8x8xf32> -> vector<8x8xf32>
    %110 = vector.broadcast %106 : vector<8x1xf32> to vector<8x8xf32>
    %111 = arith.mulf %109, %110 : vector<8x8xf32>
    %112 = arith.truncf %111 : vector<8x8xf32> to vector<8x8xbf16>
    %c0_46 = arith.constant 0 : index
    %c16 = arith.constant 16 : index
    %113 = vector.load %arg14[%c0_46, %c16] : memref<8x32xbf16, #tpu.memory_space<vmem>>, vector<8x8xbf16>
    tpu.vector_store %arg14[%c0_46, %c16], %112 {strides = array<i32>} : memref<8x32xbf16, #tpu.memory_space<vmem>>, vector<8x8xbf16>,
    %114 = vector.extract_strided_slice %32 {offsets = [0, 24], sizes = [8, 8], strides = [1, 1]} : vector<8x32xbf16> to vector<8x8xbf16>
    %115 = vector.extract_strided_slice %40 {offsets = [0, 24], sizes = [8, 8], strides = [1, 1]} : vector<8x32xbf16> to vector<8x8xbf16>
    %cst_47 = arith.constant dense<0.000000e+00> : vector<8x8xf32>
    %116 = tpu.matmul %114, %115, %cst_47 {dimension_numbers = #tpu.dot_dimension_numbers<[1], [1], [0], [0], [0, 0, 1, 0], [], []>} : vector<8x8xbf16>, vector<8x8xbf16>, vector<8x8xf32> -> vector<8x8xf32>
    %cst_48 = arith.constant 0.353553385 : f32
    %117 = vector.broadcast %cst_48 : f32 to vector<8x8xf32>
    %118 = arith.mulf %116, %117 : vector<8x8xf32>
    %119 = arith.addf %118, %50 : vector<8x8xf32>
    %cst_49 = arith.constant dense<0xFF800000> : vector<8xf32>
    %120 = vector.multi_reduction <maximumf>, %119, %cst_49 [1] : vector<8x8xf32> to vector<8xf32>
    %121 = vector.shape_cast %120 : vector<8xf32> to vector<8x1xf32>
    %122 = vector.broadcast %121 : vector<8x1xf32> to vector<8x8xf32>
    %123 = arith.subf %119, %122 : vector<8x8xf32>
    %124 = math.exp %123 : vector<8x8xf32>
    %cst_50 = arith.constant dense<0.000000e+00> : vector<8xf32>
    %125 = vector.multi_reduction <add>, %124, %cst_50 [1] : vector<8x8xf32> to vector<8xf32>
    %126 = vector.shape_cast %125 : vector<8xf32> to vector<8x1xf32>
    %127 = tpu.reciprocal %126 {approx = true} : vector<8x1xf32> -> vector<8x1xf32>
    %128 = vector.extract_strided_slice %48 {offsets = [0, 24], sizes = [8, 8], strides = [1, 1]} : vector<8x32xbf16> to vector<8x8xbf16>
    %129 = arith.truncf %124 : vector<8x8xf32> to vector<8x8xbf16>
    %cst_51 = arith.constant dense<0.000000e+00> : vector<8x8xf32>
    %130 = tpu.matmul %129, %128, %cst_51 {dimension_numbers = #tpu.dot_dimension_numbers<[1], [0], [0], [1], [0, 0, 1, 1], [], []>} : vector<8x8xbf16>, vector<8x8xbf16>, vector<8x8xf32> -> vector<8x8xf32>
    %131 = vector.broadcast %127 : vector<8x1xf32> to vector<8x8xf32>
    %132 = arith.mulf %130, %131 : vector<8x8xf32>
    %133 = arith.truncf %132 : vector<8x8xf32> to vector<8x8xbf16>
    %c0_52 = arith.constant 0 : index
    %c24 = arith.constant 24 : index
    %134 = vector.load %arg14[%c0_52, %c24] : memref<8x32xbf16, #tpu.memory_space<vmem>>, vector<8x8xbf16>
    tpu.vector_store %arg14[%c0_52, %c24], %133 {strides = array<i32>} : memref<8x32xbf16, #tpu.memory_space<vmem>>, vector<8x8xbf16>,
    %c0_53 = arith.constant 0 : index
    %c0_54 = arith.constant 0 : index
    %135 = vector.load %arg14[%c0_53, %c0_54] : memref<8x32xbf16, #tpu.memory_space<vmem>>, vector<8x32xbf16>
    %c0_55 = arith.constant 0 : index
    %c0_56 = arith.constant 0 : index
    %136 = vector.load %arg11[%c0_55, %c0_56] : memref<32x32xf32, #tpu.memory_space<vmem>>, vector<32x32xf32>
    %137 = arith.truncf %136 : vector<32x32xf32> to vector<32x32xbf16>
    %cst_57 = arith.constant dense<0.000000e+00> : vector<8x32xf32>
    %138 = tpu.matmul %135, %137, %cst_57 {dimension_numbers = #tpu.dot_dimension_numbers<[1], [0], [0], [1], [0, 0, 1, 1], [], []>} : vector<8x32xbf16>, vector<32x32xbf16>, vector<8x32xf32> -> vector<8x32xf32>
    %139 = arith.addf %1, %138 : vector<8x32xf32>
    %c0_58 = arith.constant 0 : index
    %c0_59 = arith.constant 0 : index
    %140 = vector.load %arg12[%c0_58, %c0_59] : memref<1x32xf32, #tpu.memory_space<vmem>>, vector<1x32xf32>
    %141 = vector.broadcast %140 : vector<1x32xf32> to vector<8x32xf32>
    %142 = arith.addf %139, %141 : vector<8x32xf32>
    %c0_60 = arith.constant 0 : index
    %c0_61 = arith.constant 0 : index
    %c0_62 = arith.constant 0 : index
    %143 = vector.load %arg13[%c0_60, %c0_61, %c0_62] : memref<1x8x32xf32, #tpu.memory_space<vmem>>, vector<1x8x32xf32>
    %144 = vector.shape_cast %143 : vector<1x8x32xf32> to vector<8x32xf32>
    %145 = vector.shape_cast %142 : vector<8x32xf32> to vector<1x8x32xf32>
    tpu.vector_store %arg13[%c0_60, %c0_61, %c0_62], %145 {strides = array<i32>} : memref<1x8x32xf32, #tpu.memory_space<vmem>>, vector<1x8x32xf32>,
    return
  }
  func.func @transform_0(%arg0: i32) -> (i32, i32, i32) {
    %c0_i32 = arith.constant 0 : i32
    %c0_i32_0 = arith.constant 0 : i32
    %c0_i32_1 = arith.constant 0 : i32
    return %arg0, %c0_i32, %c0_i32_0 : i32, i32, i32
  }
  func.func @transform_1(%arg0: i32) -> (i32, i32, i32) {
    %c0_i32 = arith.constant 0 : i32
    %c0_i32_0 = arith.constant 0 : i32
    %c0_i32_1 = arith.constant 0 : i32
    %c0_i32_2 = arith.constant 0 : i32
    return %c0_i32, %c0_i32_0, %c0_i32_1 : i32, i32, i32
  }
  func.func @transform_2(%arg0: i32) -> (i32, i32) {
    %c0_i32 = arith.constant 0 : i32
    %c0_i32_0 = arith.constant 0 : i32
    %c0_i32_1 = arith.constant 0 : i32
    return %c0_i32, %c0_i32_0 : i32, i32
  }
  func.func @transform_3(%arg0: i32) -> (i32, i32) {
    %c0_i32 = arith.constant 0 : i32
    %c0_i32_0 = arith.constant 0 : i32
    %c0_i32_1 = arith.constant 0 : i32
    return %c0_i32, %c0_i32_0 : i32, i32
  }
  func.func @transform_4(%arg0: i32) -> (i32, i32) {
    %c0_i32 = arith.constant 0 : i32
    %c0_i32_0 = arith.constant 0 : i32
    %c0_i32_1 = arith.constant 0 : i32
    return %c0_i32, %c0_i32_0 : i32, i32
  }
  func.func @transform_5(%arg0: i32) -> (i32, i32) {
    %c0_i32 = arith.constant 0 : i32
    %c0_i32_0 = arith.constant 0 : i32
    %c0_i32_1 = arith.constant 0 : i32
    return %c0_i32, %c0_i32_0 : i32, i32
  }
  func.func @transform_6(%arg0: i32) -> (i32, i32) {
    %c0_i32 = arith.constant 0 : i32
    %c0_i32_0 = arith.constant 0 : i32
    %c0_i32_1 = arith.constant 0 : i32
    return %c0_i32, %c0_i32_0 : i32, i32
  }
  func.func @transform_7(%arg0: i32) -> (i32, i32) {
    %c0_i32 = arith.constant 0 : i32
    %c0_i32_0 = arith.constant 0 : i32
    %c0_i32_1 = arith.constant 0 : i32
    return %c0_i32, %c0_i32_0 : i32, i32
  }
  func.func @transform_8(%arg0: i32) -> (i32, i32) {
    %c0_i32 = arith.constant 0 : i32
    %c0_i32_0 = arith.constant 0 : i32
    %c0_i32_1 = arith.constant 0 : i32
    return %c0_i32, %c0_i32_0 : i32, i32
  }
  func.func @transform_9(%arg0: i32) -> (i32, i32) {
    %c0_i32 = arith.constant 0 : i32
    %c0_i32_0 = arith.constant 0 : i32
    %c0_i32_1 = arith.constant 0 : i32
    return %c0_i32, %c0_i32_0 : i32, i32
  }
  func.func @transform_10(%arg0: i32) -> (i32, i32) {
    %c0_i32 = arith.constant 0 : i32
    %c0_i32_0 = arith.constant 0 : i32
    %c0_i32_1 = arith.constant 0 : i32
    return %c0_i32, %c0_i32_0 : i32, i32
  }
  func.func @transform_11(%arg0: i32) -> (i32, i32) {
    %c0_i32 = arith.constant 0 : i32
    %c0_i32_0 = arith.constant 0 : i32
    %c0_i32_1 = arith.constant 0 : i32
    return %c0_i32, %c0_i32_0 : i32, i32
  }
  func.func @transform_12(%arg0: i32) -> (i32, i32, i32) {
    %c0_i32 = arith.constant 0 : i32
    %c0_i32_0 = arith.constant 0 : i32
    %c0_i32_1 = arith.constant 0 : i32
    return %arg0, %c0_i32, %c0_i32_0 : i32, i32, i32
  }
}

module attributes {stable_mosaic.version = 11 : i64} {
  func.func @_final_ln_kernel(%arg0: i32, %arg1: i32, %arg2: memref<1x8x32xf32, #tpu.memory_space<vmem>>, %arg3: memref<1x32xf32, #tpu.memory_space<vmem>>, %arg4: memref<1x32xf32, #tpu.memory_space<vmem>>, %arg5: memref<1x8x32xf32, #tpu.memory_space<vmem>>) attributes {dimension_semantics = [#tpu.dimension_semantics<parallel>, #tpu.dimension_semantics<parallel>], iteration_bounds = array<i64: 2, 1>, scalar_prefetch = 0 : i64, scratch_operands = 0 : i64, tpu.core_type = #tpu.core_type<tc>, window_params = [{transform_indices = @transform_0, window_bounds = array<i64: 1, 8, 32>}, {pipeline_mode = #tpu.pipeline_mode<synchronous>, transform_indices = @transform_1, window_bounds = array<i64: 1, 32>}, {pipeline_mode = #tpu.pipeline_mode<synchronous>, transform_indices = @transform_2, window_bounds = array<i64: 1, 32>}, {transform_indices = @transform_3, window_bounds = array<i64: 1, 8, 32>}]} {
    %c0 = arith.constant 0 : index
    %c0_0 = arith.constant 0 : index
    %c0_1 = arith.constant 0 : index
    %0 = vector.load %arg2[%c0, %c0_0, %c0_1] : memref<1x8x32xf32, #tpu.memory_space<vmem>>, vector<1x8x32xf32>
    %1 = vector.shape_cast %0 : vector<1x8x32xf32> to vector<8x32xf32>
    %c0_2 = arith.constant 0 : index
    %c0_3 = arith.constant 0 : index
    %2 = vector.load %arg3[%c0_2, %c0_3] : memref<1x32xf32, #tpu.memory_space<vmem>>, vector<1x32xf32>
    %c0_4 = arith.constant 0 : index
    %c0_5 = arith.constant 0 : index
    %3 = vector.load %arg4[%c0_4, %c0_5] : memref<1x32xf32, #tpu.memory_space<vmem>>, vector<1x32xf32>
    %cst = arith.constant dense<0.000000e+00> : vector<8xf32>
    %4 = vector.multi_reduction <add>, %1, %cst [1] : vector<8x32xf32> to vector<8xf32>
    %5 = vector.shape_cast %4 : vector<8xf32> to vector<8x1xf32>
    %cst_6 = arith.constant 3.200000e+01 : f32
    %6 = vector.broadcast %cst_6 : f32 to vector<8x1xf32>
    %7 = arith.divf %5, %6 : vector<8x1xf32>
    %8 = vector.broadcast %7 : vector<8x1xf32> to vector<8x32xf32>
    %9 = arith.subf %1, %8 : vector<8x32xf32>
    %10 = arith.mulf %9, %9 : vector<8x32xf32>
    %cst_7 = arith.constant dense<0.000000e+00> : vector<8xf32>
    %11 = vector.multi_reduction <add>, %10, %cst_7 [1] : vector<8x32xf32> to vector<8xf32>
    %12 = vector.shape_cast %11 : vector<8xf32> to vector<8x1xf32>
    %cst_8 = arith.constant 0.0322580636 : f32
    %13 = vector.broadcast %cst_8 : f32 to vector<8x1xf32>
    %14 = arith.mulf %12, %13 : vector<8x1xf32>
    %15 = math.sqrt %14 : vector<8x1xf32>
    %cst_9 = arith.constant 9.99999997E-7 : f32
    %16 = vector.broadcast %cst_9 : f32 to vector<8x1xf32>
    %17 = arith.addf %15, %16 : vector<8x1xf32>
    %18 = tpu.reciprocal %17 {approx = true} : vector<8x1xf32> -> vector<8x1xf32>
    %19 = vector.broadcast %18 : vector<8x1xf32> to vector<8x32xf32>
    %20 = arith.mulf %9, %19 : vector<8x32xf32>
    %21 = vector.broadcast %2 : vector<1x32xf32> to vector<8x32xf32>
    %22 = arith.mulf %21, %20 : vector<8x32xf32>
    %23 = vector.broadcast %3 : vector<1x32xf32> to vector<8x32xf32>
    %24 = arith.addf %22, %23 : vector<8x32xf32>
    %c0_10 = arith.constant 0 : index
    %c0_11 = arith.constant 0 : index
    %c0_12 = arith.constant 0 : index
    %25 = vector.load %arg5[%c0_10, %c0_11, %c0_12] : memref<1x8x32xf32, #tpu.memory_space<vmem>>, vector<1x8x32xf32>
    %26 = vector.shape_cast %25 : vector<1x8x32xf32> to vector<8x32xf32>
    %27 = vector.shape_cast %24 : vector<8x32xf32> to vector<1x8x32xf32>
    tpu.vector_store %arg5[%c0_10, %c0_11, %c0_12], %27 {strides = array<i32>} : memref<1x8x32xf32, #tpu.memory_space<vmem>>, vector<1x8x32xf32>,
    return
  }
  func.func @transform_0(%arg0: i32, %arg1: i32) -> (i32, i32, i32) {
    %c0_i32 = arith.constant 0 : i32
    %c0_i32_0 = arith.constant 0 : i32
    return %arg0, %arg1, %c0_i32 : i32, i32, i32
  }
  func.func @transform_1(%arg0: i32, %arg1: i32) -> (i32, i32) {
    %c0_i32 = arith.constant 0 : i32
    %c0_i32_0 = arith.constant 0 : i32
    %c0_i32_1 = arith.constant 0 : i32
    return %c0_i32, %c0_i32_0 : i32, i32
  }
  func.func @transform_2(%arg0: i32, %arg1: i32) -> (i32, i32) {
    %c0_i32 = arith.constant 0 : i32
    %c0_i32_0 = arith.constant 0 : i32
    %c0_i32_1 = arith.constant 0 : i32
    return %c0_i32, %c0_i32_0 : i32, i32
  }
  func.func @transform_3(%arg0: i32, %arg1: i32) -> (i32, i32, i32) {
    %c0_i32 = arith.constant 0 : i32
    %c0_i32_0 = arith.constant 0 : i32
    return %arg0, %arg1, %c0_i32 : i32, i32, i32
  }
}

</mosaic_0001>

<llo_original>
// kernel: decoder_forward.9
$region0: #{decoder_forward.9}
  #allocation0 [shape = 'u32[]', space=smem, size = 0x4, offset = 0x4, fixed_abs, tag = 'smem constant byte address 0x4 - core index']
  #allocation1 [shape = 'u32[144,128]{1,0:T(1,128)}', space=vmem, size = 0x12000, scoped, tag = 'internal scratch']
  #allocation2 [shape = 'bf16[8,32]{1,0:T(8,128)(2,1)}', space=vmem, size = 0x800, scoped, tag = 'scratch operand']
  %s0 = inlined_call_operand.vmem [shape: f32[2,8,32], index: 0, kind: input, shape index: {}]
  %s1 = inlined_call_operand.vmem [shape: f32[1,32], index: 1, kind: input, shape index: {}]
  %s2 = inlined_call_operand.vmem [shape: f32[1,32], index: 2, kind: input, shape index: {}]
  %s3 = inlined_call_operand.vmem [shape: f32[32,64], index: 3, kind: input, shape index: {}]
  %s4 = inlined_call_operand.vmem [shape: f32[1,64], index: 4, kind: input, shape index: {}]
  %s5 = inlined_call_operand.vmem [shape: f32[64,32], index: 5, kind: input, shape index: {}]
  %s6 = inlined_call_operand.vmem [shape: f32[1,32], index: 6, kind: input, shape index: {}]
  %s7 = inlined_call_operand.vmem [shape: f32[2,8,32], index: 7, kind: output, shape index: {}]
  %s8 = sld [smem:[#allocation0]]
  $region65: #{decoder_forward.9} parent=0
    _
  %s10 = ssub.s32 1, %s8
  %s11 = scalar_select 0, %s10, %s8
  loop: start=0, step=1, limit=4
  $region2: #{decoder_forward.9} parent=0 // loop_pre_header
    _
  $region3: #{decoder_forward.9} parent=0 // loop_header
    %s13 = sphi 0, %s17
    %p14 = scmp.ge.s32.totalorder %s13, 4
    %s20 = sphi 0, %s39
    %s21 = sphi 0, %s35
    %s22 = sphi 0, %s31
    %s23 = sphi 0, %s20
    %s24 = sphi 0, %s21
    %s25 = sphi 0, %s22
    %s26 = sphi 0, %s23
    %s27 = sphi 0, %s24
    %s28 = sphi 0, %s25
    %s44 = sphi 0, %s46
    %s47 = sphi 0, %s44
    %s48 = sphi 0, %s47
    %s64 = sphi 0, %s48
    %s68 = sphi 0, %s68
    %s70 = sphi 0, %s68
    %s71 = sphi 0, %s70
    %s85 = sphi 0, %s71
    %s89 = sphi 0, %s89
    %s91 = sphi 0, %s89
    %s92 = sphi 0, %s91
    %s106 = sphi 0, %s92
    %s112 = sphi 0, %s114
    %s115 = sphi 0, %s112
    %s116 = sphi 0, %s115
    %s132 = sphi 0, %s116
    %s138 = sphi 0, %s140
    %s141 = sphi 0, %s138
    %s142 = sphi 0, %s141
    %s158 = sphi 0, %s142
    %s164 = sphi 0, %s166
    %s167 = sphi 0, %s164
    %s168 = sphi 0, %s167
    %s184 = sphi 0, %s168
    %s188 = sphi 0, %s188
    %s190 = sphi 0, %s188
    %s191 = sphi 0, %s190
    %s205 = sphi 0, %s191
    %s213 = sphi 0, %s215
    %s216 = sphi 0, %s213
    %s217 = sphi 0, %s216
    %s233 = sphi 0, %s217
  $region4: #{decoder_forward.9} parent=0 // loop_header_branch
    %16 = sbr.rel (%p14) target = $region8
  $region5: #{decoder_forward.9} parent=0 // loop_body
    %s18 = ssub.s32 %s13, 1
    %s19 = ssub.s32 %s13, 2
    %s29 = sadd.s32 1, %s22
    %p30 = scmp.ge.s32.totalorder %s29, 1
    %s31 = scalar_select %p30, 0, %s29
    %s32 = sadd.s32 1, %s21
    %s33 = scalar_select %p30, %s32, %s21
    %p34 = scmp.ge.s32.totalorder %s33, 1
    %s35 = scalar_select %p34, 0, %s33
    %s36 = sadd.s32 1, %s20
    %s37 = scalar_select %p34, %s36, %s20
    %p38 = scmp.ge.s32.totalorder %s37, 2
    %s39 = scalar_select %p38, 0, %s37
    %s40 = ssub.s32 %s20, %s39
    %s41 = ssub.s32 %s21, %s35
    %s42 = sor.u32 %s40, %s41
    %p43 = scmp.eq.s32.totalorder %s42, 0
    %s45 = sadd.s32 %s44, 1
    %s46 = scalar_select %p43, %s44, %s45
    %p49 = pneg %p43
    %p50 = scmp.eq.s32.totalorder %s13, 1
    %p51 = por %p49, %p50
    %p52 = scmp.ne.s32.totalorder %s44, %s47
    %p53 = scmp.eq.s32.totalorder %s13, 0
    %p54 = por %p52, %p53
    %p55 = scmp.ne.s32.totalorder %s44, %s47
    %p56 = scmp.eq.s32.totalorder %s18, 1
    %p57 = por %p55, %p56
    %p58 = scmp.ne.s32.totalorder %s47, %s48
    %p59 = scmp.eq.s32.totalorder %s18, 0
    %p60 = por %p58, %p59
    %p61 = scmp.ne.s32.totalorder %s47, %s48
    %p62 = scmp.eq.s32.totalorder %s19, 1
    %p63 = por %p61, %p62
    %p65 = scmp.ne.s32.totalorder %s48, %s64
    %p66 = scmp.eq.s32.totalorder %s19, 0
    %p67 = por %p65, %p66
    %s69 = sadd.s32 %s68, 1
    %p72 = scmp.eq.s32.totalorder %s13, 1
    %p73 = scmp.ne.s32.totalorder %s68, %s70
    %p74 = scmp.eq.s32.totalorder %s13, 0
    %p75 = por %p73, %p74
    %p76 = scmp.ne.s32.totalorder %s68, %s70
    %p77 = scmp.eq.s32.totalorder %s18, 1
    %p78 = por %p76, %p77
    %p79 = scmp.ne.s32.totalorder %s70, %s71
    %p80 = scmp.eq.s32.totalorder %s18, 0
    %p81 = por %p79, %p80
    %p82 = scmp.ne.s32.totalorder %s70, %s71
    %p83 = scmp.eq.s32.totalorder %s19, 1
    %p84 = por %p82, %p83
    %p86 = scmp.ne.s32.totalorder %s71, %s85
    %p87 = scmp.eq.s32.totalorder %s19, 0
    %p88 = por %p86, %p87
    %s90 = sadd.s32 %s89, 1
    %p93 = scmp.eq.s32.totalorder %s13, 1
    %p94 = scmp.ne.s32.totalorder %s89, %s91
    %p95 = scmp.eq.s32.totalorder %s13, 0
    %p96 = por %p94, %p95
    %p97 = scmp.ne.s32.totalorder %s89, %s91
    %p98 = scmp.eq.s32.totalorder %s18, 1
    %p99 = por %p97, %p98
    %p100 = scmp.ne.s32.totalorder %s91, %s92
    %p101 = scmp.eq.s32.totalorder %s18, 0
    %p102 = por %p100, %p101
    %p103 = scmp.ne.s32.totalorder %s91, %s92
    %p104 = scmp.eq.s32.totalorder %s19, 1
    %p105 = por %p103, %p104
    %p107 = scmp.ne.s32.totalorder %s92, %s106
    %p108 = scmp.eq.s32.totalorder %s19, 0
    %p109 = por %p107, %p108
    %s110 = ssub.s32 %s22, %s31
    %p111 = scmp.eq.s32.totalorder %s110, 0
    %s113 = sadd.s32 %s112, 1
    %s114 = scalar_select %p111, %s112, %s113
    %p117 = pneg %p111
    %p118 = scmp.eq.s32.totalorder %s13, 1
    %p119 = por %p117, %p118
    %p120 = scmp.ne.s32.totalorder %s112, %s115
    %p121 = scmp.eq.s32.totalorder %s13, 0
    %p122 = por %p120, %p121
    %p123 = scmp.ne.s32.totalorder %s112, %s115
    %p124 = scmp.eq.s32.totalorder %s18, 1
    %p125 = por %p123, %p124
    %p126 = scmp.ne.s32.totalorder %s115, %s116
    %p127 = scmp.eq.s32.totalorder %s18, 0
    %p128 = por %p126, %p127
    %p129 = scmp.ne.s32.totalorder %s115, %s116
    %p130 = scmp.eq.s32.totalorder %s19, 1
    %p131 = por %p129, %p130
    %p133 = scmp.ne.s32.totalorder %s116, %s132
    %p134 = scmp.eq.s32.totalorder %s19, 0
    %p135 = por %p133, %p134
    %s136 = ssub.s32 %s22, %s31
    %p137 = scmp.eq.s32.totalorder %s136, 0
    %s139 = sadd.s32 %s138, 1
    %s140 = scalar_select %p137, %s138, %s139
    %p143 = pneg %p137
    %p144 = scmp.eq.s32.totalorder %s13, 1
    %p145 = por %p143, %p144
    %p146 = scmp.ne.s32.totalorder %s138, %s141
    %p147 = scmp.eq.s32.totalorder %s13, 0
    %p148 = por %p146, %p147
    %p149 = scmp.ne.s32.totalorder %s138, %s141
    %p150 = scmp.eq.s32.totalorder %s18, 1
    %p151 = por %p149, %p150
    %p152 = scmp.ne.s32.totalorder %s141, %s142
    %p153 = scmp.eq.s32.totalorder %s18, 0
    %p154 = por %p152, %p153
    %p155 = scmp.ne.s32.totalorder %s141, %s142
    %p156 = scmp.eq.s32.totalorder %s19, 1
    %p157 = por %p155, %p156
    %p159 = scmp.ne.s32.totalorder %s142, %s158
    %p160 = scmp.eq.s32.totalorder %s19, 0
    %p161 = por %p159, %p160
    %s162 = ssub.s32 %s22, %s31
    %p163 = scmp.eq.s32.totalorder %s162, 0
    %s165 = sadd.s32 %s164, 1
    %s166 = scalar_select %p163, %s164, %s165
    %p169 = pneg %p163
    %p170 = scmp.eq.s32.totalorder %s13, 1
    %p171 = por %p169, %p170
    %p172 = scmp.ne.s32.totalorder %s164, %s167
    %p173 = scmp.eq.s32.totalorder %s13, 0
    %p174 = por %p172, %p173
    %p175 = scmp.ne.s32.totalorder %s164, %s167
    %p176 = scmp.eq.s32.totalorder %s18, 1
    %p177 = por %p175, %p176
    %p178 = scmp.ne.s32.totalorder %s167, %s168
    %p179 = scmp.eq.s32.totalorder %s18, 0
    %p180 = por %p178, %p179
    %p181 = scmp.ne.s32.totalorder %s167, %s168
    %p182 = scmp.eq.s32.totalorder %s19, 1
    %p183 = por %p181, %p182
    %p185 = scmp.ne.s32.totalorder %s168, %s184
    %p186 = scmp.eq.s32.totalorder %s19, 0
    %p187 = por %p185, %p186
    %s189 = sadd.s32 %s188, 1
    %p192 = scmp.eq.s32.totalorder %s13, 1
    %p193 = scmp.ne.s32.totalorder %s188, %s190
    %p194 = scmp.eq.s32.totalorder %s13, 0
    %p195 = por %p193, %p194
    %p196 = scmp.ne.s32.totalorder %s188, %s190
    %p197 = scmp.eq.s32.totalorder %s18, 1
    %p198 = por %p196, %p197
    %p199 = scmp.ne.s32.totalorder %s190, %s191
    %p200 = scmp.eq.s32.totalorder %s18, 0
    %p201 = por %p199, %p200
    %p202 = scmp.ne.s32.totalorder %s190, %s191
    %p203 = scmp.eq.s32.totalorder %s19, 1
    %p204 = por %p202, %p203
    %p206 = scmp.ne.s32.totalorder %s191, %s205
    %p207 = scmp.eq.s32.totalorder %s19, 0
    %p208 = por %p206, %p207
    %s209 = ssub.s32 %s20, %s39
    %s210 = ssub.s32 %s21, %s35
    %s211 = sor.u32 %s209, %s210
    %p212 = scmp.eq.s32.totalorder %s211, 0
    %s214 = sadd.s32 %s213, 1
    %s215 = scalar_select %p212, %s213, %s214
    %p218 = pneg %p212
    %p219 = scmp.eq.s32.totalorder %s13, 1
    %p220 = por %p218, %p219
    %p221 = scmp.ne.s32.totalorder %s213, %s216
    %p222 = scmp.eq.s32.totalorder %s13, 0
    %p223 = por %p221, %p222
    %p224 = scmp.ne.s32.totalorder %s213, %s216
    %p225 = scmp.eq.s32.totalorder %s18, 1
    %p226 = por %p224, %p225
    %p227 = scmp.ne.s32.totalorder %s216, %s217
    %p228 = scmp.eq.s32.totalorder %s18, 0
    %p229 = por %p227, %p228
    %p230 = scmp.ne.s32.totalorder %s216, %s217
    %p231 = scmp.eq.s32.totalorder %s19, 1
    %p232 = por %p230, %p231
    %p234 = scmp.ne.s32.totalorder %s217, %s233
    %p235 = scmp.eq.s32.totalorder %s19, 0
    %p236 = por %p234, %p235
    %p237 = scmp.le.s32.totalorder 1, %s13
    %p238 = scmp.lt.s32.totalorder %s13, 3
    %p239 = pnand %p237, %p238
    %p240 = pneg %p239
    // Predicated region
    $region9: #{decoder_forward.9} parent=5 // pred_check
      _
    $region10: #{decoder_forward.9} parent=5 // pred_check_branch
      %242 = sbr.rel (%p239) target = $region12
    $region11: #{decoder_forward.9} parent=5 // pred_region
      %s243 = ssub.s32 %s13, 1
      // Predicated region
      $region13: #{decoder_forward.9} parent=11 // pred_check
        %p244 = pneg %p81
      $region14: #{decoder_forward.9} parent=11 // pred_check_branch
        %246 = sbr.rel (%p244) target = $region16
      $region15: #{decoder_forward.9} parent=11 // pred_region
        _
      $region16: #{decoder_forward.9} parent=11 // pred_fallthru
        _
      // Predicated region
      $region17: #{decoder_forward.9} parent=11 // pred_check
        %p247 = pneg %p102
      $region18: #{decoder_forward.9} parent=11 // pred_check_branch
        %249 = sbr.rel (%p247) target = $region20
      $region19: #{decoder_forward.9} parent=11 // pred_region
        _
      $region20: #{decoder_forward.9} parent=11 // pred_fallthru
        _
      // Predicated region
      $region21: #{decoder_forward.9} parent=11 // pred_check
        %p250 = pneg %p128
      $region22: #{decoder_forward.9} parent=11 // pred_check_branch
        %252 = sbr.rel (%p250) target = $region24
      $region23: #{decoder_forward.9} parent=11 // pred_region
        %p253 = scmp.lt.s32.totalorder %s25, 0
        %s254 = scalar_select %p253, %s25, 0
        %s255 = smul.addr %s254, 8
        %s256 = scalar_lea.vmem %s3, %s255
      $region24: #{decoder_forward.9} parent=11 // pred_fallthru
        _
      // Predicated region
      $region25: #{decoder_forward.9} parent=11 // pred_check
        %p257 = pneg %p154
      $region26: #{decoder_forward.9} parent=11 // pred_check_branch
        %259 = sbr.rel (%p257) target = $region28
      $region27: #{decoder_forward.9} parent=11 // pred_region
        %p260 = scmp.lt.s32.totalorder %s25, 0
        %s261 = scalar_select %p260, %s25, 0
        %s262 = scalar_lea.vmem %s4, %s261
      $region28: #{decoder_forward.9} parent=11 // pred_fallthru
        _
      // Predicated region
      $region29: #{decoder_forward.9} parent=11 // pred_check
        %p263 = pneg %p180
      $region30: #{decoder_forward.9} parent=11 // pred_check_branch
        %265 = sbr.rel (%p263) target = $region32
      $region31: #{decoder_forward.9} parent=11 // pred_region
        %s266 = smul.u32 8, %s25
        %p267 = scmp.lt.s32.totalorder %s266, 7
        %s268 = scalar_select %p267, %s266, 7
        %s269 = smul.addr %s268, 8
        %s270 = scalar_lea.vmem %s5, %s269
        %s271 = smul.u32 8, %s25
      $region32: #{decoder_forward.9} parent=11 // pred_fallthru
        _
      // Predicated region
      $region33: #{decoder_forward.9} parent=11 // pred_check
        %p272 = pneg %p201
      $region34: #{decoder_forward.9} parent=11 // pred_check_branch
        %274 = sbr.rel (%p272) target = $region36
      $region35: #{decoder_forward.9} parent=11 // pred_region
        _
      $region36: #{decoder_forward.9} parent=11 // pred_fallthru
        _
    $region12: #{decoder_forward.9} parent=5 // pred_fallthru
      _
    %p275 = scmp.lt.s32.totalorder %s13, 2
    // Predicated region
    $region37: #{decoder_forward.9} parent=5 // pred_check
      %p276 = pneg %p275
    $region38: #{decoder_forward.9} parent=5 // pred_check_branch
      %278 = sbr.rel (%p276) target = $region40
    $region39: #{decoder_forward.9} parent=5 // pred_region
      // Predicated region
      $region41: #{decoder_forward.9} parent=39 // pred_check
        %p279 = pneg %p54
      $region42: #{decoder_forward.9} parent=39 // pred_check_branch
        %281 = sbr.rel (%p279) target = $region44
      $region43: #{decoder_forward.9} parent=39 // pred_region
        %p282 = scmp.lt.s32.totalorder %s20, 1
        %s283 = scalar_select %p282, %s20, 1
        %p284 = scmp.lt.s32.totalorder %s21, 0
        %s285 = scalar_select %p284, %s21, 0
        %s286 = sadd.s32 %s285, %s283
        %s287 = smul.addr %s286, 8
        %s288 = scalar_lea.vmem %s0, %s287
      $region44: #{decoder_forward.9} parent=39 // pred_fallthru
        _
    $region40: #{decoder_forward.9} parent=5 // pred_fallthru
      _
    %p289 = scmp.le.s32.totalorder 1, %s13
    %p290 = scmp.lt.s32.totalorder %s13, 3
    %p291 = pnand %p289, %p290
    %p292 = pneg %p291
    // Predicated region
    $region45: #{decoder_forward.9} parent=5 // pred_check
      _
    $region46: #{decoder_forward.9} parent=5 // pred_check_branch
      %294 = sbr.rel (%p291) target = $region48
    $region47: #{decoder_forward.9} parent=5 // pred_region
      %s295 = ssub.s32 %s13, 1
      %p296 = scmp.lt.s32.totalorder %s23, 1
      %s297 = scalar_select %p296, %s23, 1
      %p298 = scmp.lt.s32.totalorder %s24, 0
      %s299 = scalar_select %p298, %s24, 0
      %s300 = sadd.s32 %s299, %s297
      %s301 = smul.addr %s300, 8
      %s302 = scalar_lea.vmem %s0, %s301
      %p303 = pneg %p60
      %p304 = pneg %p57
      %p305 = pneg %p81
      %p306 = pneg %p78
      %p307 = pneg %p102
      %p308 = pneg %p99
      %p309 = scmp.lt.s32.totalorder %s25, 0
      %s310 = scalar_select %p309, %s25, 0
      %s311 = smul.addr %s310, 8
      %s312 = scalar_lea.vmem %s3, %s311
      %p313 = pneg %p128
      %p314 = pneg %p125
      %p315 = scmp.lt.s32.totalorder %s25, 0
      %s316 = scalar_select %p315, %s25, 0
      %s317 = scalar_lea.vmem %s4, %s316
      %p318 = pneg %p154
      %p319 = pneg %p151
      %s320 = smul.u32 8, %s25
      %p321 = scmp.lt.s32.totalorder %s320, 7
      %s322 = scalar_select %p321, %s320, 7
      %s323 = smul.addr %s322, 8
      %s324 = scalar_lea.vmem %s5, %s323
      %p325 = pneg %p180
      %p326 = pneg %p177
      %p327 = pneg %p201
      %p328 = pneg %p198
      %p329 = pneg %p229
      %p330 = pneg %p226
      %p331 = scmp.lt.s32.totalorder %s23, 1
      %s332 = scalar_select %p331, %s23, 1
      %p333 = scmp.lt.s32.totalorder %s24, 0
      %s334 = scalar_select %p333, %s24, 0
      %s335 = sadd.s32 %s334, %s332
      %s336 = smul.addr %s335, 8
      %s337 = scalar_lea.vmem %s7, %s336
      %p338 = scmp.lt.s32.totalorder %s23, 1
      %s339 = scalar_select %p338, %s23, 1
      %p340 = scmp.lt.s32.totalorder %s24, 0
      %s341 = scalar_select %p340, %s24, 0
      %s342 = sadd.s32 %s341, %s339
      %s343 = smul.addr %s342, 8
      %s344 = scalar_lea.vmem %s0, %s343
      %p345 = scmp.lt.s32.totalorder %s25, 0
      %s346 = scalar_select %p345, %s25, 0
      %s347 = smul.addr %s346, 8
      %s348 = scalar_lea.vmem %s3, %s347
      %p349 = scmp.lt.s32.totalorder %s25, 0
      %s350 = scalar_select %p349, %s25, 0
      %s351 = scalar_lea.vmem %s4, %s350
      %s352 = smul.u32 8, %s25
      %p353 = scmp.lt.s32.totalorder %s352, 7
      %s354 = scalar_select %p353, %s352, 7
      %s355 = smul.addr %s354, 8
      %s356 = scalar_lea.vmem %s5, %s355
      %s357 = smul.u32 8, %s25
      %p358 = scmp.lt.s32.totalorder %s23, 1
      %s359 = scalar_select %p358, %s23, 1
      %p360 = scmp.lt.s32.totalorder %s24, 0
      %s361 = scalar_select %p360, %s24, 0
      %s362 = sadd.s32 %s361, %s359
      %s363 = smul.addr %s362, 8
      %s364 = scalar_lea.vmem %s7, %s363
      %p366 = scmp.eq.s32.totalorder %s25, 0
      // Predicated region
      $region49: #{decoder_forward.9} parent=47 // pred_check
        %p367 = pneg %p366
      $region50: #{decoder_forward.9} parent=47 // pred_check_branch
        %369 = sbr.rel (%p367) target = $region52
      $region51: #{decoder_forward.9} parent=47 // pred_region
        %v370 = vld [vmem:[%s344] sm:$0xff]
        %v371 = vld [vmem:[%s1] sm:$0x1]
        %v372 = vld [vmem:[%s2] sm:$0x1]
        %vm373 = vcmask 261120
        %v374 = vsel %vm373, %v370, 0.0
        %375 = vadd.xlane.f32.xlu0 %v374
        %v376 = vpop.xlane.xlu0 %375
        %v377 = vrcp.pop 32.0
        %v378 = vmul.f32 %v376, %v377
        %v379 = vsub.f32 %v370, %v378
        %v380 = vmul.f32 %v379, %v379
        %v381 = vsel %vm373, %v380, 0.0
        %382 = vadd.xlane.f32.xlu0 %v381
        %v383 = vpop.xlane.xlu0 %382
        %v384 = vmul.f32 %v383, 0.032258064
        %v385 = vrsqrt.pop %v384
        %v386 = vmul.f32 %v384, %v385
        %vm387 = vcmp.eq.f32.partialorder %v384, inf
        %v388 = vsel %vm387, %v384, %v386
        %vm389 = vcmp.eq.f32.partialorder %v384, 0.0
        %v390 = vand.u32 %v384, 2147483648
        %v391 = vsel %vm389, %v390, %v388
        %v392 = vadd.f32 %v391, 1e-06
        %v393 = vrcp.pop %v392
        %v394 = vmul.f32 %v379, %v393
        %v396 = vlaneseq
        %v397 = vshrl.u32 %v396, 7
        %v398 = vsub.s32 0, %v397
        %v399 = vrot.slane %v371, %v398
        %v401 = vmul.f32 %v399, %v394
        %v403 = vlaneseq
        %v404 = vshrl.u32 %v403, 7
        %v405 = vsub.s32 0, %v404
        %v406 = vrot.slane %v372, %v405
        %v408 = vadd.f32 %v401, %v406
        %v409 = vpack.c.bf16 %v408, %v408
        %vm410 = vcmask 257024
        %411 = vst.msk [vmem:[#allocation2] sm:$0xf] %vm410, %v409
        %v412 = vld [vmem:[%s6] sm:$0x1]
        %v414 = vlaneseq
        %v415 = vshrl.u32 %v414, 7
        %v416 = vsub.s32 0, %v415
        %v417 = vrot.slane %v412, %v416
        %v419 = vadd.f32 %v370, %v417
        %420 = vst.msk [vmem:[%s364] sm:$0xff] %vm373, %v419
      $region52: #{decoder_forward.9} parent=47 // pred_fallthru
        _
      %v421 = vld [vmem:[#allocation2] sm:$0xf]
      %v422 = vld [vmem:[%s348] sm:$0xff]
      %v423 = vld [vmem:[%s348 + $0x8] sm:$0xff]
      %v424 = vld [vmem:[%s348 + $0x10] sm:$0xff]
      %v425 = vld [vmem:[%s348 + $0x18] sm:$0xff]
      %v426 = vpack.c.bf16 %v423, %v422
      %v427 = vpack.c.bf16 %v425, %v424
      %v428 = vld [vmem:[%s351] sm:$0x1]
      %v430 = vlaneseq
      %v431 = vshrl.u32 %v430, 7
      %v432 = vsub.s32 0, %v431
      %v433 = vrot.slane %v428, %v432
      %vm435 = vcmask 261120
      %v437 = vsel %vm435, %v421, 0
      %439 = vmatprep.subr.bf16.mxu0 0
      %440 = vmatpush1.bf16.msra.mxu0 %v426
      %441 = vmatprep.subr.bf16.mxu0 0
      %442 = vmatpush1.bf16.msra.mxu0 %v427
      %443 = vmatprep.subr.bf16.mxu0 0
      %444 = vmatpush1.bf16.msra.mxu0 0
      %445 = vmatprep.subr.bf16.mxu0 0
      %446 = vmatpush1.bf16.msra.mxu0 0
      %447 = vmatprep.subr.bf16.mxu0 0
      %448 = vmatpush1.bf16.msra.mxu0 0
      %449 = vmatprep.subr.bf16.mxu0 0
      %450 = vmatpush1.bf16.msra.mxu0 0
      %451 = vmatprep.subr.bf16.mxu0 0
      %452 = vmatpush1.bf16.msra.mxu0 0
      %453 = vmatprep.subr.bf16.mxu0 0
      %454 = vmatpush1.bf16.msra.mxu0 0
      %455 = vmatprep.subr.bf16.mxu0 0
      %456 = vmatpush1.bf16.msra.mxu0 0
      %457 = vmatprep.subr.bf16.mxu0 0
      %458 = vmatpush1.bf16.msra.mxu0 0
      %459 = vmatprep.subr.bf16.mxu0 0
      %460 = vmatpush1.bf16.msra.mxu0 0
      %461 = vmatprep.subr.bf16.mxu0 0
      %462 = vmatpush1.bf16.msra.mxu0 0
      %463 = vmatprep.subr.bf16.mxu0 0
      %464 = vmatpush1.bf16.msra.mxu0 0
      %465 = vmatprep.subr.bf16.mxu0 0
      %466 = vmatpush1.bf16.msra.mxu0 0
      %467 = vmatprep.subr.bf16.mxu0 0
      %468 = vmatpush1.bf16.msra.mxu0 0
      %469 = vmatprep.subr.bf16.mxu0 0
      %470 = vmatpush1.bf16.msra.mxu0 0
      %471 = vmatprep.mubr.bf16.mxu0 0
      %472 = vmatmul.mubr.bf16.gmra.mrb[0].mxu0 %v437
      %v473 = vpop.f32.mrb[0].mxu0
      %v474 = vadd.f32 %v433, %v473
      %v475 = vpop.f32.mrb[0].mxu0
      %v476 = vpop.f32.mrb[0].mxu0
      %v477 = vpop.f32.mrb[0].mxu0
      %478 = vdwg.mxu0
      %v479 = vmax.f32 %v474, 0.0
      %v480 = vld [vmem:[%s364] sm:$0xff]
      %v481 = vld [vmem:[%s356] sm:$0xff]
      %v482 = vld [vmem:[%s356 + $0x8] sm:$0xff]
      %v483 = vld [vmem:[%s356 + $0x10] sm:$0xff]
      %v484 = vld [vmem:[%s356 + $0x18] sm:$0xff]
      %v485 = vld [vmem:[%s356 + $0x20] sm:$0xff]
      %v486 = vld [vmem:[%s356 + $0x28] sm:$0xff]
      %v487 = vld [vmem:[%s356 + $0x30] sm:$0xff]
      %v488 = vld [vmem:[%s356 + $0x38] sm:$0xff]
      %v489 = vpack.c.bf16 %v479, %v479
      %v490 = vpack.c.bf16 %v482, %v481
      %v491 = vpack.c.bf16 %v484, %v483
      %v492 = vpack.c.bf16 %v486, %v485
      %v493 = vpack.c.bf16 %v488, %v487
      %vm494 = vcmask 523264
      %v496 = vsel %vm494, %v489, 0
      %498 = vmatprep.subr.bf16.mxu0 0
      %499 = vmatpush1.bf16.msra.mxu0 %v490
      %500 = vmatprep.subr.bf16.mxu0 0
      %501 = vmatpush1.bf16.msra.mxu0 %v491
      %502 = vmatprep.subr.bf16.mxu0 0
      %503 = vmatpush1.bf16.msra.mxu0 %v492
      %504 = vmatprep.subr.bf16.mxu0 0
      %505 = vmatpush1.bf16.msra.mxu0 %v493
      %506 = vmatprep.subr.bf16.mxu0 0
      %507 = vmatpush1.bf16.msra.mxu0 0
      %508 = vmatprep.subr.bf16.mxu0 0
      %509 = vmatpush1.bf16.msra.mxu0 0
      %510 = vmatprep.subr.bf16.mxu0 0
      %511 = vmatpush1.bf16.msra.mxu0 0
      %512 = vmatprep.subr.bf16.mxu0 0
      %513 = vmatpush1.bf16.msra.mxu0 0
      %514 = vmatprep.subr.bf16.mxu0 0
      %515 = vmatpush1.bf16.msra.mxu0 0
      %516 = vmatprep.subr.bf16.mxu0 0
      %517 = vmatpush1.bf16.msra.mxu0 0
      %518 = vmatprep.subr.bf16.mxu0 0
      %519 = vmatpush1.bf16.msra.mxu0 0
      %520 = vmatprep.subr.bf16.mxu0 0
      %521 = vmatpush1.bf16.msra.mxu0 0
      %522 = vmatprep.subr.bf16.mxu0 0
      %523 = vmatpush1.bf16.msra.mxu0 0
      %524 = vmatprep.subr.bf16.mxu0 0
      %525 = vmatpush1.bf16.msra.mxu0 0
      %526 = vmatprep.subr.bf16.mxu0 0
      %527 = vmatpush1.bf16.msra.mxu0 0
      %528 = vmatprep.subr.bf16.mxu0 0
      %529 = vmatpush1.bf16.msra.mxu0 0
      %530 = vmatprep.mubr.bf16.mxu0 0
      %531 = vmatmul.mubr.bf16.gmra.mrb[0].mxu0 %v496
      %v532 = vpop.f32.mrb[0].mxu0
      %v533 = vadd.f32 0.0, %v532
      %v534 = vpop.f32.mrb[0].mxu0
      %v535 = vpop.f32.mrb[0].mxu0
      %v536 = vpop.f32.mrb[0].mxu0
      %537 = vdwg.mxu0
      %v538 = vadd.f32 %v480, %v533
      %539 = vst.msk [vmem:[%s364] sm:$0xff] %vm435, %v538
      %p540 = scmp.lt.s32.totalorder %s23, 1
      %s541 = scalar_select %p540, %s23, 1
      %p542 = scmp.lt.s32.totalorder %s24, 0
      %s543 = scalar_select %p542, %s24, 0
      %s544 = sadd.s32 %s543, %s541
      %s545 = smul.addr %s544, 8
      %s546 = scalar_lea.vmem %s7, %s545
      // Predicated region
      $region53: #{decoder_forward.9} parent=47 // pred_check
        %p547 = pneg %p226
      $region54: #{decoder_forward.9} parent=47 // pred_check_branch
        %549 = sbr.rel (%p547) target = $region56
      $region55: #{decoder_forward.9} parent=47 // pred_region
        _
      $region56: #{decoder_forward.9} parent=47 // pred_fallthru
        _
    $region48: #{decoder_forward.9} parent=5 // pred_fallthru
      _
    %p550 = scmp.le.s32.totalorder 2, %s13
    // Predicated region
    $region57: #{decoder_forward.9} parent=5 // pred_check
      %p551 = pneg %p550
    $region58: #{decoder_forward.9} parent=5 // pred_check_branch
      %553 = sbr.rel (%p551) target = $region60
    $region59: #{decoder_forward.9} parent=5 // pred_region
      %s554 = ssub.s32 %s13, 2
      // Predicated region
      $region61: #{decoder_forward.9} parent=59 // pred_check
        %p555 = pneg %p232
      $region62: #{decoder_forward.9} parent=59 // pred_check_branch
        %557 = sbr.rel (%p555) target = $region64
      $region63: #{decoder_forward.9} parent=59 // pred_region
        %p558 = scmp.lt.s32.totalorder %s26, 1
        %s559 = scalar_select %p558, %s26, 1
        %p560 = scmp.lt.s32.totalorder %s27, 0
        %s561 = scalar_select %p560, %s27, 0
        %s562 = sadd.s32 %s561, %s559
        %s563 = smul.addr %s562, 8
        %s564 = scalar_lea.vmem %s7, %s563
      $region64: #{decoder_forward.9} parent=59 // pred_fallthru
        _
    $region60: #{decoder_forward.9} parent=5 // pred_fallthru
      _
  $region6: #{decoder_forward.9} parent=0 // loop_footer
    %s17 = sadd.s32 1, %s13
  $region7: #{decoder_forward.9} parent=0 // loop_footer_branch
    %12 = sbr.rel target = $region3
  $region8: #{decoder_forward.9} parent=0 // loop_exit
    _

// kernel: decoder_forward.7
$region0: #{decoder_forward.7}
  #allocation0 [shape = 'u32[]', space=smem, size = 0x4, offset = 0x4, fixed_abs, tag = 'smem constant byte address 0x4 - core index']
  #allocation1 [shape = 'u32[144,128]{1,0:T(1,128)}', space=vmem, size = 0x12000, scoped, tag = 'internal scratch']
  #allocation2 [shape = 'bf16[8,32]{1,0:T(8,128)(2,1)}', space=vmem, size = 0x800, scoped, tag = 'scratch operand']
  %s0 = inlined_call_operand.vmem [shape: f32[2,8,32], index: 0, kind: input, shape index: {}]
  %s1 = inlined_call_operand.vmem [shape: f32[1,8,8], index: 1, kind: input, shape index: {}]
  %s2 = inlined_call_operand.hbm [shape: f32[1,32], index: 2, kind: input, shape index: {}]
  %s3 = inlined_call_operand.hbm [shape: f32[1,32], index: 3, kind: input, shape index: {}]
  %s4 = inlined_call_operand.vmem [shape: f32[32,32], index: 4, kind: input, shape index: {}]
  %s5 = inlined_call_operand.hbm [shape: f32[1,32], index: 5, kind: input, shape index: {}]
  %s6 = inlined_call_operand.vmem [shape: f32[32,32], index: 6, kind: input, shape index: {}]
  %s7 = inlined_call_operand.hbm [shape: f32[1,32], index: 7, kind: input, shape index: {}]
  %s8 = inlined_call_operand.vmem [shape: f32[32,32], index: 8, kind: input, shape index: {}]
  %s9 = inlined_call_operand.hbm [shape: f32[1,32], index: 9, kind: input, shape index: {}]
  %s10 = inlined_call_operand.hbm [shape: f32[32,32], index: 10, kind: input, shape index: {}]
  %s11 = inlined_call_operand.hbm [shape: f32[1,32], index: 11, kind: input, shape index: {}]
  %s12 = inlined_call_operand.vmem [shape: f32[2,8,32], index: 12, kind: output, shape index: {}]
  %s13 = sld [smem:[#allocation0]]
  $region109: #{decoder_forward.7} parent=0
    _
  %s15 = ssub.s32 1, %s13
  %s16 = scalar_select 0, %s15, %s13
  $region1: #{decoder_forward.7} parent=0
    #allocation3 [shape = 'u8[512]{0}', space=vmem, size = 0x400, scoped, tag = 'input window, operand 2, single buffered']
    #allocation4 [shape = 's32[2]{0}', space=sflag, size = 0x8, scoped, tag = 'scoped memory for decoder_forward.7']
    #allocation5 [shape = 'u8[512]{0}', space=vmem, size = 0x400, scoped, tag = 'input window, operand 3, single buffered']
    #allocation6 [shape = 's32[1]{0}', space=sflag, size = 0x4, scoped, tag = 'scoped memory for decoder_forward.7']
    #allocation7 [shape = 'u8[512]{0}', space=vmem, size = 0x400, scoped, tag = 'input window, operand 5, single buffered']
    #allocation8 [shape = 'u8[512]{0}', space=vmem, size = 0x400, scoped, tag = 'input window, operand 7, single buffered']
    #allocation9 [shape = 's32[1]{0}', space=sflag, size = 0x4, scoped, tag = 'scoped memory for decoder_forward.7']
    #allocation10 [shape = 'u8[512]{0}', space=vmem, size = 0x400, scoped, tag = 'input window, operand 9, single buffered']
    #allocation11 [shape = 'u8[16384]{0}', space=vmem, size = 0x4000, scoped, tag = 'input window, operand 10, single buffered']
    #allocation12 [shape = 's32[1]{0}', space=sflag, size = 0x4, scoped, tag = 'scoped memory for decoder_forward.7']
    #allocation13 [shape = 'u8[512]{0}', space=vmem, size = 0x400, scoped, tag = 'input window, operand 11, single buffered']
    %17 = vsyncpa [#allocation4], 0
    %18 = vsyncpa [#allocation6], 0
    %19 = vsyncpa [#allocation9], 0
    %20 = vsyncpa [#allocation12], 0
    loop: start=0, step=1, limit=4
    $region2: #{decoder_forward.7} parent=1 // loop_pre_header
      _
    $region3: #{decoder_forward.7} parent=1 // loop_header
      %s22 = sphi 0, %s26
      %p23 = scmp.ge.s32.totalorder %s22, 4
      %s32 = sphi 0, %s34
      %s35 = sphi 0, %s32
      %s36 = sphi 0, %s35
      %s52 = sphi 0, %s36
      %s56 = sphi 0, %s56
      %s58 = sphi 0, %s56
      %s59 = sphi 0, %s58
      %s73 = sphi 0, %s59
      %s77 = sphi 0, %s77
      %s79 = sphi 0, %s77
      %s80 = sphi 0, %s79
      %s94 = sphi 0, %s80
      %s98 = sphi 0, %s98
      %s100 = sphi 0, %s98
      %s101 = sphi 0, %s100
      %s115 = sphi 0, %s101
      %s119 = sphi 0, %s119
      %s121 = sphi 0, %s119
      %s122 = sphi 0, %s121
      %s136 = sphi 0, %s122
      %s140 = sphi 0, %s140
      %s142 = sphi 0, %s140
      %s143 = sphi 0, %s142
      %s157 = sphi 0, %s143
      %s161 = sphi 0, %s161
      %s163 = sphi 0, %s161
      %s164 = sphi 0, %s163
      %s178 = sphi 0, %s164
      %s182 = sphi 0, %s182
      %s184 = sphi 0, %s182
      %s185 = sphi 0, %s184
      %s199 = sphi 0, %s185
      %s203 = sphi 0, %s203
      %s205 = sphi 0, %s203
      %s206 = sphi 0, %s205
      %s220 = sphi 0, %s206
      %s224 = sphi 0, %s224
      %s226 = sphi 0, %s224
      %s227 = sphi 0, %s226
      %s241 = sphi 0, %s227
      %s245 = sphi 0, %s245
      %s247 = sphi 0, %s245
      %s248 = sphi 0, %s247
      %s262 = sphi 0, %s248
      %s266 = sphi 0, %s266
      %s268 = sphi 0, %s266
      %s269 = sphi 0, %s268
      %s283 = sphi 0, %s269
      %s289 = sphi 0, %s291
      %s292 = sphi 0, %s289
      %s293 = sphi 0, %s292
      %s309 = sphi 0, %s293
    $region4: #{decoder_forward.7} parent=1 // loop_header_branch
      %25 = sbr.rel (%p23) target = $region8
    $region5: #{decoder_forward.7} parent=1 // loop_body
      %s27 = ssub.s32 %s22, 1
      %s28 = ssub.s32 %s22, 2
      %s29 = sadd.s32 %s22, 1
      %s30 = ssub.s32 %s22, %s29
      %p31 = scmp.eq.s32.totalorder %s30, 0
      %s33 = sadd.s32 %s32, 1
      %s34 = scalar_select %p31, %s32, %s33
      %p37 = pneg %p31
      %p38 = scmp.eq.s32.totalorder %s22, 1
      %p39 = por %p37, %p38
      %p40 = scmp.ne.s32.totalorder %s32, %s35
      %p41 = scmp.eq.s32.totalorder %s22, 0
      %p42 = por %p40, %p41
      %p43 = scmp.ne.s32.totalorder %s32, %s35
      %p44 = scmp.eq.s32.totalorder %s27, 1
      %p45 = por %p43, %p44
      %p46 = scmp.ne.s32.totalorder %s35, %s36
      %p47 = scmp.eq.s32.totalorder %s27, 0
      %p48 = por %p46, %p47
      %p49 = scmp.ne.s32.totalorder %s35, %s36
      %p50 = scmp.eq.s32.totalorder %s28, 1
      %p51 = por %p49, %p50
      %p53 = scmp.ne.s32.totalorder %s36, %s52
      %p54 = scmp.eq.s32.totalorder %s28, 0
      %p55 = por %p53, %p54
      %s57 = sadd.s32 %s56, 1
      %p60 = scmp.eq.s32.totalorder %s22, 1
      %p61 = scmp.ne.s32.totalorder %s56, %s58
      %p62 = scmp.eq.s32.totalorder %s22, 0
      %p63 = por %p61, %p62
      %p64 = scmp.ne.s32.totalorder %s56, %s58
      %p65 = scmp.eq.s32.totalorder %s27, 1
      %p66 = por %p64, %p65
      %p67 = scmp.ne.s32.totalorder %s58, %s59
      %p68 = scmp.eq.s32.totalorder %s27, 0
      %p69 = por %p67, %p68
      %p70 = scmp.ne.s32.totalorder %s58, %s59
      %p71 = scmp.eq.s32.totalorder %s28, 1
      %p72 = por %p70, %p71
      %p74 = scmp.ne.s32.totalorder %s59, %s73
      %p75 = scmp.eq.s32.totalorder %s28, 0
      %p76 = por %p74, %p75
      %s78 = sadd.s32 %s77, 1
      %p81 = scmp.eq.s32.totalorder %s22, 1
      %p82 = scmp.ne.s32.totalorder %s77, %s79
      %p83 = scmp.eq.s32.totalorder %s22, 0
      %p84 = por %p82, %p83
      %p85 = scmp.ne.s32.totalorder %s77, %s79
      %p86 = scmp.eq.s32.totalorder %s27, 1
      %p87 = por %p85, %p86
      %p88 = scmp.ne.s32.totalorder %s79, %s80
      %p89 = scmp.eq.s32.totalorder %s27, 0
      %p90 = por %p88, %p89
      %p91 = scmp.ne.s32.totalorder %s79, %s80
      %p92 = scmp.eq.s32.totalorder %s28, 1
      %p93 = por %p91, %p92
      %p95 = scmp.ne.s32.totalorder %s80, %s94
      %p96 = scmp.eq.s32.totalorder %s28, 0
      %p97 = por %p95, %p96
      %s99 = sadd.s32 %s98, 1
      %p102 = scmp.eq.s32.totalorder %s22, 1
      %p103 = scmp.ne.s32.totalorder %s98, %s100
      %p104 = scmp.eq.s32.totalorder %s22, 0
      %p105 = por %p103, %p104
      %p106 = scmp.ne.s32.totalorder %s98, %s100
      %p107 = scmp.eq.s32.totalorder %s27, 1
      %p108 = por %p106, %p107
      %p109 = scmp.ne.s32.totalorder %s100, %s101
      %p110 = scmp.eq.s32.totalorder %s27, 0
      %p111 = por %p109, %p110
      %p112 = scmp.ne.s32.totalorder %s100, %s101
      %p113 = scmp.eq.s32.totalorder %s28, 1
      %p114 = por %p112, %p113
      %p116 = scmp.ne.s32.totalorder %s101, %s115
      %p117 = scmp.eq.s32.totalorder %s28, 0
      %p118 = por %p116, %p117
      %s120 = sadd.s32 %s119, 1
      %p123 = scmp.eq.s32.totalorder %s22, 1
      %p124 = scmp.ne.s32.totalorder %s119, %s121
      %p125 = scmp.eq.s32.totalorder %s22, 0
      %p126 = por %p124, %p125
      %p127 = scmp.ne.s32.totalorder %s119, %s121
      %p128 = scmp.eq.s32.totalorder %s27, 1
      %p129 = por %p127, %p128
      %p130 = scmp.ne.s32.totalorder %s121, %s122
      %p131 = scmp.eq.s32.totalorder %s27, 0
      %p132 = por %p130, %p131
      %p133 = scmp.ne.s32.totalorder %s121, %s122
      %p134 = scmp.eq.s32.totalorder %s28, 1
      %p135 = por %p133, %p134
      %p137 = scmp.ne.s32.totalorder %s122, %s136
      %p138 = scmp.eq.s32.totalorder %s28, 0
      %p139 = por %p137, %p138
      %s141 = sadd.s32 %s140, 1
      %p144 = scmp.eq.s32.totalorder %s22, 1
      %p145 = scmp.ne.s32.totalorder %s140, %s142
      %p146 = scmp.eq.s32.totalorder %s22, 0
      %p147 = por %p145, %p146
      %p148 = scmp.ne.s32.totalorder %s140, %s142
      %p149 = scmp.eq.s32.totalorder %s27, 1
      %p150 = por %p148, %p149
      %p151 = scmp.ne.s32.totalorder %s142, %s143
      %p152 = scmp.eq.s32.totalorder %s27, 0
      %p153 = por %p151, %p152
      %p154 = scmp.ne.s32.totalorder %s142, %s143
      %p155 = scmp.eq.s32.totalorder %s28, 1
      %p156 = por %p154, %p155
      %p158 = scmp.ne.s32.totalorder %s143, %s157
      %p159 = scmp.eq.s32.totalorder %s28, 0
      %p160 = por %p158, %p159
      %s162 = sadd.s32 %s161, 1
      %p165 = scmp.eq.s32.totalorder %s22, 1
      %p166 = scmp.ne.s32.totalorder %s161, %s163
      %p167 = scmp.eq.s32.totalorder %s22, 0
      %p168 = por %p166, %p167
      %p169 = scmp.ne.s32.totalorder %s161, %s163
      %p170 = scmp.eq.s32.totalorder %s27, 1
      %p171 = por %p169, %p170
      %p172 = scmp.ne.s32.totalorder %s163, %s164
      %p173 = scmp.eq.s32.totalorder %s27, 0
      %p174 = por %p172, %p173
      %p175 = scmp.ne.s32.totalorder %s163, %s164
      %p176 = scmp.eq.s32.totalorder %s28, 1
      %p177 = por %p175, %p176
      %p179 = scmp.ne.s32.totalorder %s164, %s178
      %p180 = scmp.eq.s32.totalorder %s28, 0
      %p181 = por %p179, %p180
      %s183 = sadd.s32 %s182, 1
      %p186 = scmp.eq.s32.totalorder %s22, 1
      %p187 = scmp.ne.s32.totalorder %s182, %s184
      %p188 = scmp.eq.s32.totalorder %s22, 0
      %p189 = por %p187, %p188
      %p190 = scmp.ne.s32.totalorder %s182, %s184
      %p191 = scmp.eq.s32.totalorder %s27, 1
      %p192 = por %p190, %p191
      %p193 = scmp.ne.s32.totalorder %s184, %s185
      %p194 = scmp.eq.s32.totalorder %s27, 0
      %p195 = por %p193, %p194
      %p196 = scmp.ne.s32.totalorder %s184, %s185
      %p197 = scmp.eq.s32.totalorder %s28, 1
      %p198 = por %p196, %p197
      %p200 = scmp.ne.s32.totalorder %s185, %s199
      %p201 = scmp.eq.s32.totalorder %s28, 0
      %p202 = por %p200, %p201
      %s204 = sadd.s32 %s203, 1
      %p207 = scmp.eq.s32.totalorder %s22, 1
      %p208 = scmp.ne.s32.totalorder %s203, %s205
      %p209 = scmp.eq.s32.totalorder %s22, 0
      %p210 = por %p208, %p209
      %p211 = scmp.ne.s32.totalorder %s203, %s205
      %p212 = scmp.eq.s32.totalorder %s27, 1
      %p213 = por %p211, %p212
      %p214 = scmp.ne.s32.totalorder %s205, %s206
      %p215 = scmp.eq.s32.totalorder %s27, 0
      %p216 = por %p214, %p215
      %p217 = scmp.ne.s32.totalorder %s205, %s206
      %p218 = scmp.eq.s32.totalorder %s28, 1
      %p219 = por %p217, %p218
      %p221 = scmp.ne.s32.totalorder %s206, %s220
      %p222 = scmp.eq.s32.totalorder %s28, 0
      %p223 = por %p221, %p222
      %s225 = sadd.s32 %s224, 1
      %p228 = scmp.eq.s32.totalorder %s22, 1
      %p229 = scmp.ne.s32.totalorder %s224, %s226
      %p230 = scmp.eq.s32.totalorder %s22, 0
      %p231 = por %p229, %p230
      %p232 = scmp.ne.s32.totalorder %s224, %s226
      %p233 = scmp.eq.s32.totalorder %s27, 1
      %p234 = por %p232, %p233
      %p235 = scmp.ne.s32.totalorder %s226, %s227
      %p236 = scmp.eq.s32.totalorder %s27, 0
      %p237 = por %p235, %p236
      %p238 = scmp.ne.s32.totalorder %s226, %s227
      %p239 = scmp.eq.s32.totalorder %s28, 1
      %p240 = por %p238, %p239
      %p242 = scmp.ne.s32.totalorder %s227, %s241
      %p243 = scmp.eq.s32.totalorder %s28, 0
      %p244 = por %p242, %p243
      %s246 = sadd.s32 %s245, 1
      %p249 = scmp.eq.s32.totalorder %s22, 1
      %p250 = scmp.ne.s32.totalorder %s245, %s247
      %p251 = scmp.eq.s32.totalorder %s22, 0
      %p252 = por %p250, %p251
      %p253 = scmp.ne.s32.totalorder %s245, %s247
      %p254 = scmp.eq.s32.totalorder %s27, 1
      %p255 = por %p253, %p254
      %p256 = scmp.ne.s32.totalorder %s247, %s248
      %p257 = scmp.eq.s32.totalorder %s27, 0
      %p258 = por %p256, %p257
      %p259 = scmp.ne.s32.totalorder %s247, %s248
      %p260 = scmp.eq.s32.totalorder %s28, 1
      %p261 = por %p259, %p260
      %p263 = scmp.ne.s32.totalorder %s248, %s262
      %p264 = scmp.eq.s32.totalorder %s28, 0
      %p265 = por %p263, %p264
      %s267 = sadd.s32 %s266, 1
      %p270 = scmp.eq.s32.totalorder %s22, 1
      %p271 = scmp.ne.s32.totalorder %s266, %s268
      %p272 = scmp.eq.s32.totalorder %s22, 0
      %p273 = por %p271, %p272
      %p274 = scmp.ne.s32.totalorder %s266, %s268
      %p275 = scmp.eq.s32.totalorder %s27, 1
      %p276 = por %p274, %p275
      %p277 = scmp.ne.s32.totalorder %s268, %s269
      %p278 = scmp.eq.s32.totalorder %s27, 0
      %p279 = por %p277, %p278
      %p280 = scmp.ne.s32.totalorder %s268, %s269
      %p281 = scmp.eq.s32.totalorder %s28, 1
      %p282 = por %p280, %p281
      %p284 = scmp.ne.s32.totalorder %s269, %s283
      %p285 = scmp.eq.s32.totalorder %s28, 0
      %p286 = por %p284, %p285
      %s287 = ssub.s32 %s22, %s29
      %p288 = scmp.eq.s32.totalorder %s287, 0
      %s290 = sadd.s32 %s289, 1
      %s291 = scalar_select %p288, %s289, %s290
      %p294 = pneg %p288
      %p295 = scmp.eq.s32.totalorder %s22, 1
      %p296 = por %p294, %p295
      %p297 = scmp.ne.s32.totalorder %s289, %s292
      %p298 = scmp.eq.s32.totalorder %s22, 0
      %p299 = por %p297, %p298
      %p300 = scmp.ne.s32.totalorder %s289, %s292
      %p301 = scmp.eq.s32.totalorder %s27, 1
      %p302 = por %p300, %p301
      %p303 = scmp.ne.s32.totalorder %s292, %s293
      %p304 = scmp.eq.s32.totalorder %s27, 0
      %p305 = por %p303, %p304
      %p306 = scmp.ne.s32.totalorder %s292, %s293
      %p307 = scmp.eq.s32.totalorder %s28, 1
      %p308 = por %p306, %p307
      %p310 = scmp.ne.s32.totalorder %s293, %s309
      %p311 = scmp.eq.s32.totalorder %s28, 0
      %p312 = por %p310, %p311
      %p313 = scmp.le.s32.totalorder 1, %s22
      %p314 = scmp.lt.s32.totalorder %s22, 3
      %p315 = pnand %p313, %p314
      %p316 = pneg %p315
      // Predicated region
      $region9: #{decoder_forward.7} parent=5 // pred_check
        _
      $region10: #{decoder_forward.7} parent=5 // pred_check_branch
        %318 = sbr.rel (%p315) target = $region12
      $region11: #{decoder_forward.7} parent=5 // pred_region
        %s319 = ssub.s32 %s22, 1
        // Predicated region
        $region13: #{decoder_forward.7} parent=11 // pred_check
          %p320 = pneg %p69
        $region14: #{decoder_forward.7} parent=11 // pred_check_branch
          %322 = sbr.rel (%p320) target = $region16
        $region15: #{decoder_forward.7} parent=11 // pred_region
          _
        $region16: #{decoder_forward.7} parent=11 // pred_fallthru
          _
        // Predicated region
        $region17: #{decoder_forward.7} parent=11 // pred_check
          %p323 = pneg %p90
        $region18: #{decoder_forward.7} parent=11 // pred_check_branch
          %325 = sbr.rel (%p323) target = $region20
        $region19: #{decoder_forward.7} parent=11 // pred_region
          %s327 = ssub.s32 16, 16
          %328 = vsyncadd [#allocation4], %s327
          %s330 = sshll.u32 [#allocation3], 4
          %s331 = int_to_ptr.vmem [resolvable:$true] %s330
          %333 = dma.hbm_to_vmem [thread:$0]  %s2, 16, %s331, [#allocation4]
        $region20: #{decoder_forward.7} parent=11 // pred_fallthru
          _
        // Predicated region
        $region21: #{decoder_forward.7} parent=11 // pred_check
          %p334 = pneg %p111
        $region22: #{decoder_forward.7} parent=11 // pred_check_branch
          %336 = sbr.rel (%p334) target = $region24
        $region23: #{decoder_forward.7} parent=11 // pred_region
          %s338 = ssub.s32 16, 16
          %339 = vsyncadd [#allocation6], %s338
          %s341 = sshll.u32 [#allocation5], 4
          %s342 = int_to_ptr.vmem [resolvable:$true] %s341
          %344 = dma.hbm_to_vmem [thread:$0]  %s3, 16, %s342, [#allocation6]
        $region24: #{decoder_forward.7} parent=11 // pred_fallthru
          _
        // Predicated region
        $region25: #{decoder_forward.7} parent=11 // pred_check
          %p345 = pneg %p132
        $region26: #{decoder_forward.7} parent=11 // pred_check_branch
          %347 = sbr.rel (%p345) target = $region28
        $region27: #{decoder_forward.7} parent=11 // pred_region
          _
        $region28: #{decoder_forward.7} parent=11 // pred_fallthru
          _
        // Predicated region
        $region29: #{decoder_forward.7} parent=11 // pred_check
          %p348 = pneg %p153
        $region30: #{decoder_forward.7} parent=11 // pred_check_branch
          %350 = sbr.rel (%p348) target = $region32
        $region31: #{decoder_forward.7} parent=11 // pred_region
          %s352 = ssub.s32 16, 16
          %353 = vsyncadd [#allocation6], %s352
          %s355 = sshll.u32 [#allocation7], 4
          %s356 = int_to_ptr.vmem [resolvable:$true] %s355
          %358 = dma.hbm_to_vmem [thread:$0]  %s5, 16, %s356, [#allocation6]
        $region32: #{decoder_forward.7} parent=11 // pred_fallthru
          _
        // Predicated region
        $region33: #{decoder_forward.7} parent=11 // pred_check
          %p359 = pneg %p174
        $region34: #{decoder_forward.7} parent=11 // pred_check_branch
          %361 = sbr.rel (%p359) target = $region36
        $region35: #{decoder_forward.7} parent=11 // pred_region
          _
        $region36: #{decoder_forward.7} parent=11 // pred_fallthru
          _
        // Predicated region
        $region37: #{decoder_forward.7} parent=11 // pred_check
          %p362 = pneg %p195
        $region38: #{decoder_forward.7} parent=11 // pred_check_branch
          %364 = sbr.rel (%p362) target = $region40
        $region39: #{decoder_forward.7} parent=11 // pred_region
          %s366 = ssub.s32 16, 16
          %367 = vsyncadd [#allocation9], %s366
          %s369 = sshll.u32 [#allocation8], 4
          %s370 = int_to_ptr.vmem [resolvable:$true] %s369
          %372 = dma.hbm_to_vmem [thread:$0]  %s7, 16, %s370, [#allocation9]
        $region40: #{decoder_forward.7} parent=11 // pred_fallthru
          _
        // Predicated region
        $region41: #{decoder_forward.7} parent=11 // pred_check
          %p373 = pneg %p216
        $region42: #{decoder_forward.7} parent=11 // pred_check_branch
          %375 = sbr.rel (%p373) target = $region44
        $region43: #{decoder_forward.7} parent=11 // pred_region
          _
        $region44: #{decoder_forward.7} parent=11 // pred_fallthru
          _
        // Predicated region
        $region45: #{decoder_forward.7} parent=11 // pred_check
          %p376 = pneg %p237
        $region46: #{decoder_forward.7} parent=11 // pred_check_branch
          %378 = sbr.rel (%p376) target = $region48
        $region47: #{decoder_forward.7} parent=11 // pred_region
          %s380 = ssub.s32 16, 16
          %381 = vsyncadd [#allocation9], %s380
          %s383 = sshll.u32 [#allocation10], 4
          %s384 = int_to_ptr.vmem [resolvable:$true] %s383
          %386 = dma.hbm_to_vmem [thread:$0]  %s9, 16, %s384, [#allocation9]
        $region48: #{decoder_forward.7} parent=11 // pred_fallthru
          _
        // Predicated region
        $region49: #{decoder_forward.7} parent=11 // pred_check
          %p387 = pneg %p258
        $region50: #{decoder_forward.7} parent=11 // pred_check_branch
          %389 = sbr.rel (%p387) target = $region52
        $region51: #{decoder_forward.7} parent=11 // pred_region
          %s391 = ssub.s32 512, 512
          %392 = vsyncadd [#allocation12], %s391
          %s393 = sshll.u32 [#allocation11], 4
          %s394 = int_to_ptr.vmem [resolvable:$true] %s393
          %399 = dma.hbm_to_vmem [thread:$0]  %s10, 512, %s394, [#allocation12], 128, 128, 8
        $region52: #{decoder_forward.7} parent=11 // pred_fallthru
          _
        // Predicated region
        $region53: #{decoder_forward.7} parent=11 // pred_check
          %p400 = pneg %p279
        $region54: #{decoder_forward.7} parent=11 // pred_check_branch
          %402 = sbr.rel (%p400) target = $region56
        $region55: #{decoder_forward.7} parent=11 // pred_region
          %s404 = ssub.s32 16, 16
          %405 = vsyncadd [#allocation12], %s404
          %s407 = sshll.u32 [#allocation13], 4
          %s408 = int_to_ptr.vmem [resolvable:$true] %s407
          %410 = dma.hbm_to_vmem [thread:$0]  %s11, 16, %s408, [#allocation12]
        $region56: #{decoder_forward.7} parent=11 // pred_fallthru
          _
      $region12: #{decoder_forward.7} parent=5 // pred_fallthru
        _
      %p411 = scmp.lt.s32.totalorder %s22, 2
      // Predicated region
      $region57: #{decoder_forward.7} parent=5 // pred_check
        %p412 = pneg %p411
      $region58: #{decoder_forward.7} parent=5 // pred_check_branch
        %414 = sbr.rel (%p412) target = $region60
      $region59: #{decoder_forward.7} parent=5 // pred_region
        // Predicated region
        $region61: #{decoder_forward.7} parent=59 // pred_check
          %p415 = pneg %p42
        $region62: #{decoder_forward.7} parent=59 // pred_check_branch
          %417 = sbr.rel (%p415) target = $region64
        $region63: #{decoder_forward.7} parent=59 // pred_region
          %p418 = scmp.lt.s32.totalorder %s22, 1
          %s419 = scalar_select %p418, %s22, 1
          %s420 = smul.addr %s419, 8
          %s421 = scalar_lea.vmem %s0, %s420
        $region64: #{decoder_forward.7} parent=59 // pred_fallthru
          _
      $region60: #{decoder_forward.7} parent=5 // pred_fallthru
        _
      %p422 = scmp.le.s32.totalorder 1, %s22
      %p423 = scmp.lt.s32.totalorder %s22, 3
      %p424 = pnand %p422, %p423
      %p425 = pneg %p424
      // Predicated region
      $region65: #{decoder_forward.7} parent=5 // pred_check
        _
      $region66: #{decoder_forward.7} parent=5 // pred_check_branch
        %427 = sbr.rel (%p424) target = $region68
      $region67: #{decoder_forward.7} parent=5 // pred_region
        %s428 = ssub.s32 %s22, 1
        // Predicated region
        $region69: #{decoder_forward.7} parent=67 // pred_check
          %p429 = pneg %p90
        $region70: #{decoder_forward.7} parent=67 // pred_check_branch
          %431 = sbr.rel (%p429) target = $region72
        $region71: #{decoder_forward.7} parent=67 // pred_region
          %432 = dma.done [#allocation4], 16
        $region72: #{decoder_forward.7} parent=67 // pred_fallthru
          _
        // Predicated region
        $region73: #{decoder_forward.7} parent=67 // pred_check
          %p433 = pneg %p111
        $region74: #{decoder_forward.7} parent=67 // pred_check_branch
          %435 = sbr.rel (%p433) target = $region76
        $region75: #{decoder_forward.7} parent=67 // pred_region
          %436 = dma.done [#allocation6], 16
        $region76: #{decoder_forward.7} parent=67 // pred_fallthru
          _
        // Predicated region
        $region77: #{decoder_forward.7} parent=67 // pred_check
          %p437 = pneg %p153
        $region78: #{decoder_forward.7} parent=67 // pred_check_branch
          %439 = sbr.rel (%p437) target = $region80
        $region79: #{decoder_forward.7} parent=67 // pred_region
          %440 = dma.done [#allocation6], 16
        $region80: #{decoder_forward.7} parent=67 // pred_fallthru
          _
        // Predicated region
        $region81: #{decoder_forward.7} parent=67 // pred_check
          %p441 = pneg %p195
        $region82: #{decoder_forward.7} parent=67 // pred_check_branch
          %443 = sbr.rel (%p441) target = $region84
        $region83: #{decoder_forward.7} parent=67 // pred_region
          %444 = dma.done [#allocation9], 16
        $region84: #{decoder_forward.7} parent=67 // pred_fallthru
          _
        // Predicated region
        $region85: #{decoder_forward.7} parent=67 // pred_check
          %p445 = pneg %p237
        $region86: #{decoder_forward.7} parent=67 // pred_check_branch
          %447 = sbr.rel (%p445) target = $region88
        $region87: #{decoder_forward.7} parent=67 // pred_region
          %448 = dma.done [#allocation9], 16
        $region88: #{decoder_forward.7} parent=67 // pred_fallthru
          _
        // Predicated region
        $region89: #{decoder_forward.7} parent=67 // pred_check
          %p449 = pneg %p258
        $region90: #{decoder_forward.7} parent=67 // pred_check_branch
          %451 = sbr.rel (%p449) target = $region92
        $region91: #{decoder_forward.7} parent=67 // pred_region
          %452 = dma.done [#allocation12], 512
        $region92: #{decoder_forward.7} parent=67 // pred_fallthru
          _
        // Predicated region
        $region93: #{decoder_forward.7} parent=67 // pred_check
          %p453 = pneg %p279
        $region94: #{decoder_forward.7} parent=67 // pred_check_branch
          %455 = sbr.rel (%p453) target = $region96
        $region95: #{decoder_forward.7} parent=67 // pred_region
          %456 = dma.done [#allocation12], 16
        $region96: #{decoder_forward.7} parent=67 // pred_fallthru
          _
        %p457 = scmp.lt.s32.totalorder %s27, 1
        %s458 = scalar_select %p457, %s27, 1
        %s459 = smul.addr %s458, 8
        %s460 = scalar_lea.vmem %s0, %s459
        %p461 = pneg %p48
        %p462 = pneg %p45
        %p463 = pneg %p69
        %p464 = pneg %p66
        %p465 = pneg %p90
        %p466 = pneg %p87
        %p467 = pneg %p111
        %p468 = pneg %p108
        %p469 = pneg %p132
        %p470 = pneg %p129
        %p471 = pneg %p153
        %p472 = pneg %p150
        %p473 = pneg %p174
        %p474 = pneg %p171
        %p475 = pneg %p195
        %p476 = pneg %p192
        %p477 = pneg %p216
        %p478 = pneg %p213
        %p479 = pneg %p237
        %p480 = pneg %p234
        %p481 = pneg %p258
        %p482 = pneg %p255
        %p483 = pneg %p279
        %p484 = pneg %p276
        %p485 = pneg %p305
        %p486 = pneg %p302
        %p487 = scmp.lt.s32.totalorder %s27, 1
        %s488 = scalar_select %p487, %s27, 1
        %s489 = smul.addr %s488, 8
        %s490 = scalar_lea.vmem %s12, %s489
        %p491 = scmp.lt.s32.totalorder %s27, 1
        %s492 = scalar_select %p491, %s27, 1
        %s493 = smul.addr %s492, 8
        %s494 = scalar_lea.vmem %s0, %s493
        %p495 = scmp.lt.s32.totalorder %s27, 1
        %s496 = scalar_select %p495, %s27, 1
        %s497 = smul.addr %s496, 8
        %s498 = scalar_lea.vmem %s12, %s497
        %v500 = vld [vmem:[%s494] sm:$0xff]
        %v501 = vld [vmem:[#allocation3] sm:$0x1]
        %v502 = vld [vmem:[#allocation5] sm:$0x1]
        %vm503 = vcmask 261120
        %v504 = vsel %vm503, %v500, 0.0
        %505 = vadd.xlane.f32.xlu0 %v504
        %v506 = vpop.xlane.xlu0 %505
        %v507 = vrcp.pop 32.0
        %v508 = vmul.f32 %v506, %v507
        %v509 = vsub.f32 %v500, %v508
        %v510 = vmul.f32 %v509, %v509
        %v511 = vsel %vm503, %v510, 0.0
        %512 = vadd.xlane.f32.xlu0 %v511
        %v513 = vpop.xlane.xlu0 %512
        %v514 = vmul.f32 %v513, 0.032258064
        %v515 = vrsqrt.pop %v514
        %v516 = vmul.f32 %v514, %v515
        %vm517 = vcmp.eq.f32.partialorder %v514, inf
        %v518 = vsel %vm517, %v514, %v516
        %vm519 = vcmp.eq.f32.partialorder %v514, 0.0
        %v520 = vand.u32 %v514, 2147483648
        %v521 = vsel %vm519, %v520, %v518
        %v522 = vadd.f32 %v521, 1e-06
        %v523 = vrcp.pop %v522
        %v524 = vmul.f32 %v509, %v523
        %v526 = vlaneseq
        %v527 = vshrl.u32 %v526, 7
        %v528 = vsub.s32 0, %v527
        %v529 = vrot.slane %v501, %v528
        %v531 = vmul.f32 %v529, %v524
        %v533 = vlaneseq
        %v534 = vshrl.u32 %v533, 7
        %v535 = vsub.s32 0, %v534
        %v536 = vrot.slane %v502, %v535
        %v538 = vadd.f32 %v531, %v536
        %v539 = vld [vmem:[%s4] sm:$0xff]
        %v540 = vld [vmem:[%s4 + $0x8] sm:$0xff]
        %v541 = vld [vmem:[%s4 + $0x10] sm:$0xff]
        %v542 = vld [vmem:[%s4 + $0x18] sm:$0xff]
        %v543 = vpack.c.bf16 %v538, %v538
        %v544 = vpack.c.bf16 %v540, %v539
        %v545 = vpack.c.bf16 %v542, %v541
        %v546 = vld [vmem:[#allocation7] sm:$0x1]
        %v548 = vlaneseq
        %v549 = vshrl.u32 %v548, 7
        %v550 = vsub.s32 0, %v549
        %v551 = vrot.slane %v546, %v550
        %v554 = vsel %vm503, %v543, 0
        %556 = vmatprep.subr.bf16.mxu0 0
        %557 = vmatpush1.bf16.msra.mxu0 %v544
        %558 = vmatprep.subr.bf16.mxu0 0
        %559 = vmatpush1.bf16.msra.mxu0 %v545
        %560 = vmatprep.subr.bf16.mxu0 0
        %561 = vmatpush1.bf16.msra.mxu0 0
        %562 = vmatprep.subr.bf16.mxu0 0
        %563 = vmatpush1.bf16.msra.mxu0 0
        %564 = vmatprep.subr.bf16.mxu0 0
        %565 = vmatpush1.bf16.msra.mxu0 0
        %566 = vmatprep.subr.bf16.mxu0 0
        %567 = vmatpush1.bf16.msra.mxu0 0
        %568 = vmatprep.subr.bf16.mxu0 0
        %569 = vmatpush1.bf16.msra.mxu0 0
        %570 = vmatprep.subr.bf16.mxu0 0
        %571 = vmatpush1.bf16.msra.mxu0 0
        %572 = vmatprep.subr.bf16.mxu0 0
        %573 = vmatpush1.bf16.msra.mxu0 0
        %574 = vmatprep.subr.bf16.mxu0 0
        %575 = vmatpush1.bf16.msra.mxu0 0
        %576 = vmatprep.subr.bf16.mxu0 0
        %577 = vmatpush1.bf16.msra.mxu0 0
        %578 = vmatprep.subr.bf16.mxu0 0
        %579 = vmatpush1.bf16.msra.mxu0 0
        %580 = vmatprep.subr.bf16.mxu0 0
        %581 = vmatpush1.bf16.msra.mxu0 0
        %582 = vmatprep.subr.bf16.mxu0 0
        %583 = vmatpush1.bf16.msra.mxu0 0
        %584 = vmatprep.subr.bf16.mxu0 0
        %585 = vmatpush1.bf16.msra.mxu0 0
        %586 = vmatprep.subr.bf16.mxu0 0
        %587 = vmatpush1.bf16.msra.mxu0 0
        %588 = vmatprep.mubr.bf16.mxu0 0
        %589 = vmatmul.mubr.bf16.gmra.mrb[0].mxu0 %v554
        %v590 = vpop.f32.mrb[0].mxu0
        %v591 = vadd.f32 %v551, %v590
        %v592 = vpop.f32.mrb[0].mxu0
        %v593 = vpop.f32.mrb[0].mxu0
        %v594 = vpop.f32.mrb[0].mxu0
        %595 = vdwg.mxu0
        %v596 = vpack.c.bf16 %v591, %v591
        %v597 = vld [vmem:[%s6] sm:$0xff]
        %v598 = vld [vmem:[%s6 + $0x8] sm:$0xff]
        %v599 = vld [vmem:[%s6 + $0x10] sm:$0xff]
        %v600 = vld [vmem:[%s6 + $0x18] sm:$0xff]
        %v601 = vpack.c.bf16 %v598, %v597
        %v602 = vpack.c.bf16 %v600, %v599
        %v603 = vld [vmem:[#allocation8] sm:$0x1]
        %v605 = vlaneseq
        %v606 = vshrl.u32 %v605, 7
        %v607 = vsub.s32 0, %v606
        %v608 = vrot.slane %v603, %v607
        %610 = vmatprep.subr.bf16.mxu0 0
        %611 = vmatpush1.bf16.msra.mxu0 %v601
        %612 = vmatprep.subr.bf16.mxu0 0
        %613 = vmatpush1.bf16.msra.mxu0 %v602
        %614 = vmatprep.subr.bf16.mxu0 0
        %615 = vmatpush1.bf16.msra.mxu0 0
        %616 = vmatprep.subr.bf16.mxu0 0
        %617 = vmatpush1.bf16.msra.mxu0 0
        %618 = vmatprep.subr.bf16.mxu0 0
        %619 = vmatpush1.bf16.msra.mxu0 0
        %620 = vmatprep.subr.bf16.mxu0 0
        %621 = vmatpush1.bf16.msra.mxu0 0
        %622 = vmatprep.subr.bf16.mxu0 0
        %623 = vmatpush1.bf16.msra.mxu0 0
        %624 = vmatprep.subr.bf16.mxu0 0
        %625 = vmatpush1.bf16.msra.mxu0 0
        %626 = vmatprep.subr.bf16.mxu0 0
        %627 = vmatpush1.bf16.msra.mxu0 0
        %628 = vmatprep.subr.bf16.mxu0 0
        %629 = vmatpush1.bf16.msra.mxu0 0
        %630 = vmatprep.subr.bf16.mxu0 0
        %631 = vmatpush1.bf16.msra.mxu0 0
        %632 = vmatprep.subr.bf16.mxu0 0
        %633 = vmatpush1.bf16.msra.mxu0 0
        %634 = vmatprep.subr.bf16.mxu0 0
        %635 = vmatpush1.bf16.msra.mxu0 0
        %636 = vmatprep.subr.bf16.mxu0 0
        %637 = vmatpush1.bf16.msra.mxu0 0
        %638 = vmatprep.subr.bf16.mxu0 0
        %639 = vmatpush1.bf16.msra.mxu0 0
        %640 = vmatprep.subr.bf16.mxu0 0
        %641 = vmatpush1.bf16.msra.mxu0 0
        %642 = vmatprep.mubr.bf16.mxu0 0
        %643 = vmatmul.mubr.bf16.gmra.mrb[0].mxu0 %v554
        %v644 = vpop.f32.mrb[0].mxu0
        %v645 = vadd.f32 %v608, %v644
        %v646 = vpop.f32.mrb[0].mxu0
        %v647 = vpop.f32.mrb[0].mxu0
        %v648 = vpop.f32.mrb[0].mxu0
        %649 = vdwg.mxu0
        %v650 = vpack.c.bf16 %v645, %v645
        %v651 = vld [vmem:[%s8] sm:$0xff]
        %v652 = vld [vmem:[%s8 + $0x8] sm:$0xff]
        %v653 = vld [vmem:[%s8 + $0x10] sm:$0xff]
        %v654 = vld [vmem:[%s8 + $0x18] sm:$0xff]
        %v655 = vpack.c.bf16 %v652, %v651
        %v656 = vpack.c.bf16 %v654, %v653
        %v657 = vld [vmem:[#allocation10] sm:$0x1]
        %v659 = vlaneseq
        %v660 = vshrl.u32 %v659, 7
        %v661 = vsub.s32 0, %v660
        %v662 = vrot.slane %v657, %v661
        %664 = vmatprep.subr.bf16.mxu0 0
        %665 = vmatpush1.bf16.msra.mxu0 %v655
        %666 = vmatprep.subr.bf16.mxu0 0
        %667 = vmatpush1.bf16.msra.mxu0 %v656
        %668 = vmatprep.subr.bf16.mxu0 0
        %669 = vmatpush1.bf16.msra.mxu0 0
        %670 = vmatprep.subr.bf16.mxu0 0
        %671 = vmatpush1.bf16.msra.mxu0 0
        %672 = vmatprep.subr.bf16.mxu0 0
        %673 = vmatpush1.bf16.msra.mxu0 0
        %674 = vmatprep.subr.bf16.mxu0 0
        %675 = vmatpush1.bf16.msra.mxu0 0
        %676 = vmatprep.subr.bf16.mxu0 0
        %677 = vmatpush1.bf16.msra.mxu0 0
        %678 = vmatprep.subr.bf16.mxu0 0
        %679 = vmatpush1.bf16.msra.mxu0 0
        %680 = vmatprep.subr.bf16.mxu0 0
        %681 = vmatpush1.bf16.msra.mxu0 0
        %682 = vmatprep.subr.bf16.mxu0 0
        %683 = vmatpush1.bf16.msra.mxu0 0
        %684 = vmatprep.subr.bf16.mxu0 0
        %685 = vmatpush1.bf16.msra.mxu0 0
        %686 = vmatprep.subr.bf16.mxu0 0
        %687 = vmatpush1.bf16.msra.mxu0 0
        %688 = vmatprep.subr.bf16.mxu0 0
        %689 = vmatpush1.bf16.msra.mxu0 0
        %690 = vmatprep.subr.bf16.mxu0 0
        %691 = vmatpush1.bf16.msra.mxu0 0
        %692 = vmatprep.subr.bf16.mxu0 0
        %693 = vmatpush1.bf16.msra.mxu0 0
        %694 = vmatprep.subr.bf16.mxu0 0
        %695 = vmatpush1.bf16.msra.mxu0 0
        %696 = vmatprep.mubr.bf16.mxu0 0
        %697 = vmatmul.mubr.bf16.gmra.mrb[0].mxu0 %v554
        %v698 = vpop.f32.mrb[0].mxu0
        %v699 = vadd.f32 %v662, %v698
        %v700 = vpop.f32.mrb[0].mxu0
        %v701 = vpop.f32.mrb[0].mxu0
        %v702 = vpop.f32.mrb[0].mxu0
        %703 = vdwg.mxu0
        %v704 = vpack.c.bf16 %v699, %v699
        %v705 = vld [vmem:[%s1] sm:$0xff]
        %vm706 = vcmask 64512
        %v708 = vsel %vm706, %v596, 0
        %v711 = vsel %vm706, %v650, 0
        %713 = vmatprep.subr.bf16.mxu0 0
        %714 = vmatpush1.bf16.xpose.msra.mxu0 %v711
        %715 = vmatprep.subr.bf16.mxu0 0
        %716 = vmatpush1.bf16.xpose.msra.mxu0 0
        %717 = vmatprep.subr.bf16.mxu0 0
        %718 = vmatpush1.bf16.xpose.msra.mxu0 0
        %719 = vmatprep.subr.bf16.mxu0 0
        %720 = vmatpush1.bf16.xpose.msra.mxu0 0
        %721 = vmatprep.subr.bf16.mxu0 0
        %722 = vmatpush1.bf16.xpose.msra.mxu0 0
        %723 = vmatprep.subr.bf16.mxu0 0
        %724 = vmatpush1.bf16.xpose.msra.mxu0 0
        %725 = vmatprep.subr.bf16.mxu0 0
        %726 = vmatpush1.bf16.xpose.msra.mxu0 0
        %727 = vmatprep.subr.bf16.mxu0 0
        %728 = vmatpush1.bf16.xpose.msra.mxu0 0
        %729 = vmatprep.subr.bf16.mxu0 0
        %730 = vmatpush1.bf16.xpose.msra.mxu0 0
        %731 = vmatprep.subr.bf16.mxu0 0
        %732 = vmatpush1.bf16.xpose.msra.mxu0 0
        %733 = vmatprep.subr.bf16.mxu0 0
        %734 = vmatpush1.bf16.xpose.msra.mxu0 0
        %735 = vmatprep.subr.bf16.mxu0 0
        %736 = vmatpush1.bf16.xpose.msra.mxu0 0
        %737 = vmatprep.subr.bf16.mxu0 0
        %738 = vmatpush1.bf16.xpose.msra.mxu0 0
        %739 = vmatprep.subr.bf16.mxu0 0
        %740 = vmatpush1.bf16.xpose.msra.mxu0 0
        %741 = vmatprep.subr.bf16.mxu0 0
        %742 = vmatpush1.bf16.xpose.msra.mxu0 0
        %743 = vmatprep.subr.bf16.mxu0 0
        %744 = vmatpush1.bf16.xpose.msra.mxu0 0
        %745 = vmatprep.mubr.bf16.mxu0 0
        %746 = vmatmul.mubr.bf16.gmra.mrb[0].mxu0 %v708
        %v747 = vpop.f32.mrb[0].mxu0
        %v748 = vadd.f32 0.0, %v747
        %v749 = vpop.f32.mrb[0].mxu0
        %v750 = vpop.f32.mrb[0].mxu0
        %v751 = vpop.f32.mrb[0].mxu0
        %752 = vdwg.mxu0
        %v753 = vmul.f32 %v748, 0.35355338
        %v754 = vadd.f32 %v753, %v705
        %v755 = vsel %vm706, %v754, -inf
        %756 = vmax.xlane.f32.xlu0 %v755
        %v757 = vpop.xlane.xlu0 %756
        %v758 = vsub.f32 %v754, %v757
        %v759 = vmul.f32 %v758, 1.442695
        %v760 = vpow.pop %v759
        %v761 = vsel %vm706, %v760, 0.0
        %762 = vadd.xlane.f32.xlu0 %v761
        %v763 = vpop.xlane.xlu0 %762
        %v764 = vrcp.pop %v763
        %v765 = vpack.c.bf16 %v760, %v760
        %v767 = vsel %vm706, %v765, 0
        %vm769 = vcmask 1043456
        %v771 = vsel %vm769, %v704, 0
        %773 = vmatprep.subr.bf16.mxu0 0
        %774 = vmatpush1.bf16.msra.mxu0 %v771
        %775 = vmatprep.subr.bf16.mxu0 0
        %776 = vmatpush1.bf16.msra.mxu0 0
        %777 = vmatprep.subr.bf16.mxu0 0
        %778 = vmatpush1.bf16.msra.mxu0 0
        %779 = vmatprep.subr.bf16.mxu0 0
        %780 = vmatpush1.bf16.msra.mxu0 0
        %781 = vmatprep.subr.bf16.mxu0 0
        %782 = vmatpush1.bf16.msra.mxu0 0
        %783 = vmatprep.subr.bf16.mxu0 0
        %784 = vmatpush1.bf16.msra.mxu0 0
        %785 = vmatprep.subr.bf16.mxu0 0
        %786 = vmatpush1.bf16.msra.mxu0 0
        %787 = vmatprep.subr.bf16.mxu0 0
        %788 = vmatpush1.bf16.msra.mxu0 0
        %789 = vmatprep.subr.bf16.mxu0 0
        %790 = vmatpush1.bf16.msra.mxu0 0
        %791 = vmatprep.subr.bf16.mxu0 0
        %792 = vmatpush1.bf16.msra.mxu0 0
        %793 = vmatprep.subr.bf16.mxu0 0
        %794 = vmatpush1.bf16.msra.mxu0 0
        %795 = vmatprep.subr.bf16.mxu0 0
        %796 = vmatpush1.bf16.msra.mxu0 0
        %797 = vmatprep.subr.bf16.mxu0 0
        %798 = vmatpush1.bf16.msra.mxu0 0
        %799 = vmatprep.subr.bf16.mxu0 0
        %800 = vmatpush1.bf16.msra.mxu0 0
        %801 = vmatprep.subr.bf16.mxu0 0
        %802 = vmatpush1.bf16.msra.mxu0 0
        %803 = vmatprep.subr.bf16.mxu0 0
        %804 = vmatpush1.bf16.msra.mxu0 0
        %805 = vmatprep.mubr.bf16.mxu0 0
        %806 = vmatmul.mubr.bf16.gmra.mrb[0].mxu0 %v767
        %v807 = vpop.f32.mrb[0].mxu0
        %v808 = vadd.f32 0.0, %v807
        %v809 = vpop.f32.mrb[0].mxu0
        %v810 = vpop.f32.mrb[0].mxu0
        %v811 = vpop.f32.mrb[0].mxu0
        %812 = vdwg.mxu0
        %v813 = vmul.f32 %v808, %v764
        %v814 = vpack.c.bf16 %v813, %v813
        %vm815 = vcmask 60416
        %816 = vst.msk [vmem:[#allocation2] sm:$0xf] %vm815, %v814
        %818 = vrot.lane.b32.xlu0 %v596, 120
        %v819 = vpop.permute.xlu0 %818
        %821 = vrot.lane.b32.xlu0 %v650, 120
        %v822 = vpop.permute.xlu0 %821
        %v824 = vsel %vm706, %v819, 0
        %v827 = vsel %vm706, %v822, 0
        %829 = vmatprep.subr.bf16.mxu0 0
        %830 = vmatpush1.bf16.xpose.msra.mxu0 %v827
        %831 = vmatprep.subr.bf16.mxu0 0
        %832 = vmatpush1.bf16.xpose.msra.mxu0 0
        %833 = vmatprep.subr.bf16.mxu0 0
        %834 = vmatpush1.bf16.xpose.msra.mxu0 0
        %835 = vmatprep.subr.bf16.mxu0 0
        %836 = vmatpush1.bf16.xpose.msra.mxu0 0
        %837 = vmatprep.subr.bf16.mxu0 0
        %838 = vmatpush1.bf16.xpose.msra.mxu0 0
        %839 = vmatprep.subr.bf16.mxu0 0
        %840 = vmatpush1.bf16.xpose.msra.mxu0 0
        %841 = vmatprep.subr.bf16.mxu0 0
        %842 = vmatpush1.bf16.xpose.msra.mxu0 0
        %843 = vmatprep.subr.bf16.mxu0 0
        %844 = vmatpush1.bf16.xpose.msra.mxu0 0
        %845 = vmatprep.subr.bf16.mxu0 0
        %846 = vmatpush1.bf16.xpose.msra.mxu0 0
        %847 = vmatprep.subr.bf16.mxu0 0
        %848 = vmatpush1.bf16.xpose.msra.mxu0 0
        %849 = vmatprep.subr.bf16.mxu0 0
        %850 = vmatpush1.bf16.xpose.msra.mxu0 0
        %851 = vmatprep.subr.bf16.mxu0 0
        %852 = vmatpush1.bf16.xpose.msra.mxu0 0
        %853 = vmatprep.subr.bf16.mxu0 0
        %854 = vmatpush1.bf16.xpose.msra.mxu0 0
        %855 = vmatprep.subr.bf16.mxu0 0
        %856 = vmatpush1.bf16.xpose.msra.mxu0 0
        %857 = vmatprep.subr.bf16.mxu0 0
        %858 = vmatpush1.bf16.xpose.msra.mxu0 0
        %859 = vmatprep.subr.bf16.mxu0 0
        %860 = vmatpush1.bf16.xpose.msra.mxu0 0
        %861 = vmatprep.mubr.bf16.mxu0 0
        %862 = vmatmul.mubr.bf16.gmra.mrb[0].mxu0 %v824
        %v863 = vpop.f32.mrb[0].mxu0
        %v864 = vadd.f32 0.0, %v863
        %v865 = vpop.f32.mrb[0].mxu0
        %v866 = vpop.f32.mrb[0].mxu0
        %v867 = vpop.f32.mrb[0].mxu0
        %868 = vdwg.mxu0
        %v869 = vmul.f32 %v864, 0.35355338
        %v870 = vadd.f32 %v869, %v705
        %v871 = vsel %vm706, %v870, -inf
        %872 = vmax.xlane.f32.xlu0 %v871
        %v873 = vpop.xlane.xlu0 %872
        %v874 = vsub.f32 %v870, %v873
        %v875 = vmul.f32 %v874, 1.442695
        %v876 = vpow.pop %v875
        %v877 = vsel %vm706, %v876, 0.0
        %878 = vadd.xlane.f32.xlu0 %v877
        %v879 = vpop.xlane.xlu0 %878
        %v880 = vrcp.pop %v879
        %v881 = vpack.c.bf16 %v876, %v876
        %883 = vrot.lane.b32.xlu0 %v704, 120
        %v884 = vpop.permute.xlu0 %883
        %v886 = vsel %vm706, %v881, 0
        %v889 = vsel %vm769, %v884, 0
        %891 = vmatprep.subr.bf16.mxu0 0
        %892 = vmatpush1.bf16.msra.mxu0 %v889
        %893 = vmatprep.subr.bf16.mxu0 0
        %894 = vmatpush1.bf16.msra.mxu0 0
        %895 = vmatprep.subr.bf16.mxu0 0
        %896 = vmatpush1.bf16.msra.mxu0 0
        %897 = vmatprep.subr.bf16.mxu0 0
        %898 = vmatpush1.bf16.msra.mxu0 0
        %899 = vmatprep.subr.bf16.mxu0 0
        %900 = vmatpush1.bf16.msra.mxu0 0
        %901 = vmatprep.subr.bf16.mxu0 0
        %902 = vmatpush1.bf16.msra.mxu0 0
        %903 = vmatprep.subr.bf16.mxu0 0
        %904 = vmatpush1.bf16.msra.mxu0 0
        %905 = vmatprep.subr.bf16.mxu0 0
        %906 = vmatpush1.bf16.msra.mxu0 0
        %907 = vmatprep.subr.bf16.mxu0 0
        %908 = vmatpush1.bf16.msra.mxu0 0
        %909 = vmatprep.subr.bf16.mxu0 0
        %910 = vmatpush1.bf16.msra.mxu0 0
        %911 = vmatprep.subr.bf16.mxu0 0
        %912 = vmatpush1.bf16.msra.mxu0 0
        %913 = vmatprep.subr.bf16.mxu0 0
        %914 = vmatpush1.bf16.msra.mxu0 0
        %915 = vmatprep.subr.bf16.mxu0 0
        %916 = vmatpush1.bf16.msra.mxu0 0
        %917 = vmatprep.subr.bf16.mxu0 0
        %918 = vmatpush1.bf16.msra.mxu0 0
        %919 = vmatprep.subr.bf16.mxu0 0
        %920 = vmatpush1.bf16.msra.mxu0 0
        %921 = vmatprep.subr.bf16.mxu0 0
        %922 = vmatpush1.bf16.msra.mxu0 0
        %923 = vmatprep.mubr.bf16.mxu0 0
        %924 = vmatmul.mubr.bf16.gmra.mrb[0].mxu0 %v886
        %v925 = vpop.f32.mrb[0].mxu0
        %v926 = vadd.f32 0.0, %v925
        %v927 = vpop.f32.mrb[0].mxu0
        %v928 = vpop.f32.mrb[0].mxu0
        %v929 = vpop.f32.mrb[0].mxu0
        %930 = vdwg.mxu0
        %v931 = vmul.f32 %v926, %v880
        %v932 = vpack.c.bf16 %v931, %v931
        %v934 = vunpack.c.l.b16 %v932
        %v935 = vpack.c.b16 %v934, %v934
        %936 = vrot.lane.b32.xlu0 %v935, 8
        %v937 = vpop.permute.xlu0 %936
        %vm939 = vcmask 126016
        %940 = vst.msk [vmem:[#allocation2] sm:$0xf] %vm939, %v937
        %941 = vrot.lane.b32.xlu0 %v596, 112
        %v942 = vpop.permute.xlu0 %941
        %943 = vrot.lane.b32.xlu0 %v650, 112
        %v944 = vpop.permute.xlu0 %943
        %v946 = vsel %vm706, %v942, 0
        %v949 = vsel %vm706, %v944, 0
        %951 = vmatprep.subr.bf16.mxu0 0
        %952 = vmatpush1.bf16.xpose.msra.mxu0 %v949
        %953 = vmatprep.subr.bf16.mxu0 0
        %954 = vmatpush1.bf16.xpose.msra.mxu0 0
        %955 = vmatprep.subr.bf16.mxu0 0
        %956 = vmatpush1.bf16.xpose.msra.mxu0 0
        %957 = vmatprep.subr.bf16.mxu0 0
        %958 = vmatpush1.bf16.xpose.msra.mxu0 0
        %959 = vmatprep.subr.bf16.mxu0 0
        %960 = vmatpush1.bf16.xpose.msra.mxu0 0
        %961 = vmatprep.subr.bf16.mxu0 0
        %962 = vmatpush1.bf16.xpose.msra.mxu0 0
        %963 = vmatprep.subr.bf16.mxu0 0
        %964 = vmatpush1.bf16.xpose.msra.mxu0 0
        %965 = vmatprep.subr.bf16.mxu0 0
        %966 = vmatpush1.bf16.xpose.msra.mxu0 0
        %967 = vmatprep.subr.bf16.mxu0 0
        %968 = vmatpush1.bf16.xpose.msra.mxu0 0
        %969 = vmatprep.subr.bf16.mxu0 0
        %970 = vmatpush1.bf16.xpose.msra.mxu0 0
        %971 = vmatprep.subr.bf16.mxu0 0
        %972 = vmatpush1.bf16.xpose.msra.mxu0 0
        %973 = vmatprep.subr.bf16.mxu0 0
        %974 = vmatpush1.bf16.xpose.msra.mxu0 0
        %975 = vmatprep.subr.bf16.mxu0 0
        %976 = vmatpush1.bf16.xpose.msra.mxu0 0
        %977 = vmatprep.subr.bf16.mxu0 0
        %978 = vmatpush1.bf16.xpose.msra.mxu0 0
        %979 = vmatprep.subr.bf16.mxu0 0
        %980 = vmatpush1.bf16.xpose.msra.mxu0 0
        %981 = vmatprep.subr.bf16.mxu0 0
        %982 = vmatpush1.bf16.xpose.msra.mxu0 0
        %983 = vmatprep.mubr.bf16.mxu0 0
        %984 = vmatmul.mubr.bf16.gmra.mrb[0].mxu0 %v946
        %v985 = vpop.f32.mrb[0].mxu0
        %v986 = vadd.f32 0.0, %v985
        %v987 = vpop.f32.mrb[0].mxu0
        %v988 = vpop.f32.mrb[0].mxu0
        %v989 = vpop.f32.mrb[0].mxu0
        %990 = vdwg.mxu0
        %v991 = vmul.f32 %v986, 0.35355338
        %v992 = vadd.f32 %v991, %v705
        %v993 = vsel %vm706, %v992, -inf
        %994 = vmax.xlane.f32.xlu0 %v993
        %v995 = vpop.xlane.xlu0 %994
        %v996 = vsub.f32 %v992, %v995
        %v997 = vmul.f32 %v996, 1.442695
        %v998 = vpow.pop %v997
        %v999 = vsel %vm706, %v998, 0.0
        %1000 = vadd.xlane.f32.xlu0 %v999
        %v1001 = vpop.xlane.xlu0 %1000
        %v1002 = vrcp.pop %v1001
        %v1003 = vpack.c.bf16 %v998, %v998
        %1004 = vrot.lane.b32.xlu0 %v704, 112
        %v1005 = vpop.permute.xlu0 %1004
        %v1007 = vsel %vm706, %v1003, 0
        %v1010 = vsel %vm769, %v1005, 0
        %1012 = vmatprep.subr.bf16.mxu0 0
        %1013 = vmatpush1.bf16.msra.mxu0 %v1010
        %1014 = vmatprep.subr.bf16.mxu0 0
        %1015 = vmatpush1.bf16.msra.mxu0 0
        %1016 = vmatprep.subr.bf16.mxu0 0
        %1017 = vmatpush1.bf16.msra.mxu0 0
        %1018 = vmatprep.subr.bf16.mxu0 0
        %1019 = vmatpush1.bf16.msra.mxu0 0
        %1020 = vmatprep.subr.bf16.mxu0 0
        %1021 = vmatpush1.bf16.msra.mxu0 0
        %1022 = vmatprep.subr.bf16.mxu0 0
        %1023 = vmatpush1.bf16.msra.mxu0 0
        %1024 = vmatprep.subr.bf16.mxu0 0
        %1025 = vmatpush1.bf16.msra.mxu0 0
        %1026 = vmatprep.subr.bf16.mxu0 0
        %1027 = vmatpush1.bf16.msra.mxu0 0
        %1028 = vmatprep.subr.bf16.mxu0 0
        %1029 = vmatpush1.bf16.msra.mxu0 0
        %1030 = vmatprep.subr.bf16.mxu0 0
        %1031 = vmatpush1.bf16.msra.mxu0 0
        %1032 = vmatprep.subr.bf16.mxu0 0
        %1033 = vmatpush1.bf16.msra.mxu0 0
        %1034 = vmatprep.subr.bf16.mxu0 0
        %1035 = vmatpush1.bf16.msra.mxu0 0
        %1036 = vmatprep.subr.bf16.mxu0 0
        %1037 = vmatpush1.bf16.msra.mxu0 0
        %1038 = vmatprep.subr.bf16.mxu0 0
        %1039 = vmatpush1.bf16.msra.mxu0 0
        %1040 = vmatprep.subr.bf16.mxu0 0
        %1041 = vmatpush1.bf16.msra.mxu0 0
        %1042 = vmatprep.subr.bf16.mxu0 0
        %1043 = vmatpush1.bf16.msra.mxu0 0
        %1044 = vmatprep.mubr.bf16.mxu0 0
        %1045 = vmatmul.mubr.bf16.gmra.mrb[0].mxu0 %v1007
        %v1046 = vpop.f32.mrb[0].mxu0
        %v1047 = vadd.f32 0.0, %v1046
        %v1048 = vpop.f32.mrb[0].mxu0
        %v1049 = vpop.f32.mrb[0].mxu0
        %v1050 = vpop.f32.mrb[0].mxu0
        %1051 = vdwg.mxu0
        %v1052 = vmul.f32 %v1047, %v1002
        %v1053 = vpack.c.bf16 %v1052, %v1052
        %v1055 = vunpack.c.l.b16 %v1053
        %v1056 = vpack.c.b16 %v1055, %v1055
        %1057 = vrot.lane.b32.xlu0 %v1056, 16
        %v1058 = vpop.permute.xlu0 %1057
        %vm1060 = vcmask 191616
        %1061 = vst.msk [vmem:[#allocation2] sm:$0xf] %vm1060, %v1058
        %1062 = vrot.lane.b32.xlu0 %v596, 104
        %v1063 = vpop.permute.xlu0 %1062
        %1064 = vrot.lane.b32.xlu0 %v650, 104
        %v1065 = vpop.permute.xlu0 %1064
        %v1067 = vsel %vm706, %v1063, 0
        %v1070 = vsel %vm706, %v1065, 0
        %1072 = vmatprep.subr.bf16.mxu0 0
        %1073 = vmatpush1.bf16.xpose.msra.mxu0 %v1070
        %1074 = vmatprep.subr.bf16.mxu0 0
        %1075 = vmatpush1.bf16.xpose.msra.mxu0 0
        %1076 = vmatprep.subr.bf16.mxu0 0
        %1077 = vmatpush1.bf16.xpose.msra.mxu0 0
        %1078 = vmatprep.subr.bf16.mxu0 0
        %1079 = vmatpush1.bf16.xpose.msra.mxu0 0
        %1080 = vmatprep.subr.bf16.mxu0 0
        %1081 = vmatpush1.bf16.xpose.msra.mxu0 0
        %1082 = vmatprep.subr.bf16.mxu0 0
        %1083 = vmatpush1.bf16.xpose.msra.mxu0 0
        %1084 = vmatprep.subr.bf16.mxu0 0
        %1085 = vmatpush1.bf16.xpose.msra.mxu0 0
        %1086 = vmatprep.subr.bf16.mxu0 0
        %1087 = vmatpush1.bf16.xpose.msra.mxu0 0
        %1088 = vmatprep.subr.bf16.mxu0 0
        %1089 = vmatpush1.bf16.xpose.msra.mxu0 0
        %1090 = vmatprep.subr.bf16.mxu0 0
        %1091 = vmatpush1.bf16.xpose.msra.mxu0 0
        %1092 = vmatprep.subr.bf16.mxu0 0
        %1093 = vmatpush1.bf16.xpose.msra.mxu0 0
        %1094 = vmatprep.subr.bf16.mxu0 0
        %1095 = vmatpush1.bf16.xpose.msra.mxu0 0
        %1096 = vmatprep.subr.bf16.mxu0 0
        %1097 = vmatpush1.bf16.xpose.msra.mxu0 0
        %1098 = vmatprep.subr.bf16.mxu0 0
        %1099 = vmatpush1.bf16.xpose.msra.mxu0 0
        %1100 = vmatprep.subr.bf16.mxu0 0
        %1101 = vmatpush1.bf16.xpose.msra.mxu0 0
        %1102 = vmatprep.subr.bf16.mxu0 0
        %1103 = vmatpush1.bf16.xpose.msra.mxu0 0
        %1104 = vmatprep.mubr.bf16.mxu0 0
        %1105 = vmatmul.mubr.bf16.gmra.mrb[0].mxu0 %v1067
        %v1106 = vpop.f32.mrb[0].mxu0
        %v1107 = vadd.f32 0.0, %v1106
        %v1108 = vpop.f32.mrb[0].mxu0
        %v1109 = vpop.f32.mrb[0].mxu0
        %v1110 = vpop.f32.mrb[0].mxu0
        %1111 = vdwg.mxu0
        %v1112 = vmul.f32 %v1107, 0.35355338
        %v1113 = vadd.f32 %v1112, %v705
        %v1114 = vsel %vm706, %v1113, -inf
        %1115 = vmax.xlane.f32.xlu0 %v1114
        %v1116 = vpop.xlane.xlu0 %1115
        %v1117 = vsub.f32 %v1113, %v1116
        %v1118 = vmul.f32 %v1117, 1.442695
        %v1119 = vpow.pop %v1118
        %v1120 = vsel %vm706, %v1119, 0.0
        %1121 = vadd.xlane.f32.xlu0 %v1120
        %v1122 = vpop.xlane.xlu0 %1121
        %v1123 = vrcp.pop %v1122
        %v1124 = vpack.c.bf16 %v1119, %v1119
        %1125 = vrot.lane.b32.xlu0 %v704, 104
        %v1126 = vpop.permute.xlu0 %1125
        %v1128 = vsel %vm706, %v1124, 0
        %v1131 = vsel %vm769, %v1126, 0
        %1133 = vmatprep.subr.bf16.mxu0 0
        %1134 = vmatpush1.bf16.msra.mxu0 %v1131
        %1135 = vmatprep.subr.bf16.mxu0 0
        %1136 = vmatpush1.bf16.msra.mxu0 0
        %1137 = vmatprep.subr.bf16.mxu0 0
        %1138 = vmatpush1.bf16.msra.mxu0 0
        %1139 = vmatprep.subr.bf16.mxu0 0
        %1140 = vmatpush1.bf16.msra.mxu0 0
        %1141 = vmatprep.subr.bf16.mxu0 0
        %1142 = vmatpush1.bf16.msra.mxu0 0
        %1143 = vmatprep.subr.bf16.mxu0 0
        %1144 = vmatpush1.bf16.msra.mxu0 0
        %1145 = vmatprep.subr.bf16.mxu0 0
        %1146 = vmatpush1.bf16.msra.mxu0 0
        %1147 = vmatprep.subr.bf16.mxu0 0
        %1148 = vmatpush1.bf16.msra.mxu0 0
        %1149 = vmatprep.subr.bf16.mxu0 0
        %1150 = vmatpush1.bf16.msra.mxu0 0
        %1151 = vmatprep.subr.bf16.mxu0 0
        %1152 = vmatpush1.bf16.msra.mxu0 0
        %1153 = vmatprep.subr.bf16.mxu0 0
        %1154 = vmatpush1.bf16.msra.mxu0 0
        %1155 = vmatprep.subr.bf16.mxu0 0
        %1156 = vmatpush1.bf16.msra.mxu0 0
        %1157 = vmatprep.subr.bf16.mxu0 0
        %1158 = vmatpush1.bf16.msra.mxu0 0
        %1159 = vmatprep.subr.bf16.mxu0 0
        %1160 = vmatpush1.bf16.msra.mxu0 0
        %1161 = vmatprep.subr.bf16.mxu0 0
        %1162 = vmatpush1.bf16.msra.mxu0 0
        %1163 = vmatprep.subr.bf16.mxu0 0
        %1164 = vmatpush1.bf16.msra.mxu0 0
        %1165 = vmatprep.mubr.bf16.mxu0 0
        %1166 = vmatmul.mubr.bf16.gmra.mrb[0].mxu0 %v1128
        %v1167 = vpop.f32.mrb[0].mxu0
        %v1168 = vadd.f32 0.0, %v1167
        %v1169 = vpop.f32.mrb[0].mxu0
        %v1170 = vpop.f32.mrb[0].mxu0
        %v1171 = vpop.f32.mrb[0].mxu0
        %1172 = vdwg.mxu0
        %v1173 = vmul.f32 %v1168, %v1123
        %v1174 = vpack.c.bf16 %v1173, %v1173
        %v1176 = vunpack.c.l.b16 %v1174
        %v1177 = vpack.c.b16 %v1176, %v1176
        %1178 = vrot.lane.b32.xlu0 %v1177, 24
        %v1179 = vpop.permute.xlu0 %1178
        %vm1181 = vcmask 257216
        %1182 = vst.msk [vmem:[#allocation2] sm:$0xf] %vm1181, %v1179
        %v1183 = vld [vmem:[#allocation2] sm:$0xf]
        %v1184 = vld [vmem:[#allocation11] sm:$0xff]
        %v1185 = vld [vmem:[#allocation11 + $0x8] sm:$0xff]
        %v1186 = vld [vmem:[#allocation11 + $0x10] sm:$0xff]
        %v1187 = vld [vmem:[#allocation11 + $0x18] sm:$0xff]
        %v1188 = vpack.c.bf16 %v1185, %v1184
        %v1189 = vpack.c.bf16 %v1187, %v1186
        %v1191 = vsel %vm503, %v1183, 0
        %1193 = vmatprep.subr.bf16.mxu0 0
        %1194 = vmatpush1.bf16.msra.mxu0 %v1188
        %1195 = vmatprep.subr.bf16.mxu0 0
        %1196 = vmatpush1.bf16.msra.mxu0 %v1189
        %1197 = vmatprep.subr.bf16.mxu0 0
        %1198 = vmatpush1.bf16.msra.mxu0 0
        %1199 = vmatprep.subr.bf16.mxu0 0
        %1200 = vmatpush1.bf16.msra.mxu0 0
        %1201 = vmatprep.subr.bf16.mxu0 0
        %1202 = vmatpush1.bf16.msra.mxu0 0
        %1203 = vmatprep.subr.bf16.mxu0 0
        %1204 = vmatpush1.bf16.msra.mxu0 0
        %1205 = vmatprep.subr.bf16.mxu0 0
        %1206 = vmatpush1.bf16.msra.mxu0 0
        %1207 = vmatprep.subr.bf16.mxu0 0
        %1208 = vmatpush1.bf16.msra.mxu0 0
        %1209 = vmatprep.subr.bf16.mxu0 0
        %1210 = vmatpush1.bf16.msra.mxu0 0
        %1211 = vmatprep.subr.bf16.mxu0 0
        %1212 = vmatpush1.bf16.msra.mxu0 0
        %1213 = vmatprep.subr.bf16.mxu0 0
        %1214 = vmatpush1.bf16.msra.mxu0 0
        %1215 = vmatprep.subr.bf16.mxu0 0
        %1216 = vmatpush1.bf16.msra.mxu0 0
        %1217 = vmatprep.subr.bf16.mxu0 0
        %1218 = vmatpush1.bf16.msra.mxu0 0
        %1219 = vmatprep.subr.bf16.mxu0 0
        %1220 = vmatpush1.bf16.msra.mxu0 0
        %1221 = vmatprep.subr.bf16.mxu0 0
        %1222 = vmatpush1.bf16.msra.mxu0 0
        %1223 = vmatprep.subr.bf16.mxu0 0
        %1224 = vmatpush1.bf16.msra.mxu0 0
        %1225 = vmatprep.mubr.bf16.mxu0 0
        %1226 = vmatmul.mubr.bf16.gmra.mrb[0].mxu0 %v1191
        %v1227 = vpop.f32.mrb[0].mxu0
        %v1228 = vadd.f32 0.0, %v1227
        %v1229 = vpop.f32.mrb[0].mxu0
        %v1230 = vpop.f32.mrb[0].mxu0
        %v1231 = vpop.f32.mrb[0].mxu0
        %1232 = vdwg.mxu0
        %v1233 = vadd.f32 %v500, %v1228
        %v1234 = vld [vmem:[#allocation13] sm:$0x1]
        %v1236 = vlaneseq
        %v1237 = vshrl.u32 %v1236, 7
        %v1238 = vsub.s32 0, %v1237
        %v1239 = vrot.slane %v1234, %v1238
        %v1241 = vadd.f32 %v1233, %v1239
        %1242 = vst.msk [vmem:[%s498] sm:$0xff] %vm503, %v1241
        %p1243 = scmp.lt.s32.totalorder %s27, 1
        %s1244 = scalar_select %p1243, %s27, 1
        %s1245 = smul.addr %s1244, 8
        %s1246 = scalar_lea.vmem %s12, %s1245
        // Predicated region
        $region97: #{decoder_forward.7} parent=67 // pred_check
          %p1247 = pneg %p302
        $region98: #{decoder_forward.7} parent=67 // pred_check_branch
          %1249 = sbr.rel (%p1247) target = $region100
        $region99: #{decoder_forward.7} parent=67 // pred_region
          _
        $region100: #{decoder_forward.7} parent=67 // pred_fallthru
          _
      $region68: #{decoder_forward.7} parent=5 // pred_fallthru
        _
      %p1250 = scmp.le.s32.totalorder 2, %s22
      // Predicated region
      $region101: #{decoder_forward.7} parent=5 // pred_check
        %p1251 = pneg %p1250
      $region102: #{decoder_forward.7} parent=5 // pred_check_branch
        %1253 = sbr.rel (%p1251) target = $region104
      $region103: #{decoder_forward.7} parent=5 // pred_region
        %s1254 = ssub.s32 %s22, 2
        // Predicated region
        $region105: #{decoder_forward.7} parent=103 // pred_check
          %p1255 = pneg %p308
        $region106: #{decoder_forward.7} parent=103 // pred_check_branch
          %1257 = sbr.rel (%p1255) target = $region108
        $region107: #{decoder_forward.7} parent=103 // pred_region
          %p1258 = scmp.lt.s32.totalorder %s28, 1
          %s1259 = scalar_select %p1258, %s28, 1
          %s1260 = smul.addr %s1259, 8
          %s1261 = scalar_lea.vmem %s12, %s1260
        $region108: #{decoder_forward.7} parent=103 // pred_fallthru
          _
      $region104: #{decoder_forward.7} parent=5 // pred_fallthru
        _
    $region6: #{decoder_forward.7} parent=1 // loop_footer
      %s26 = sadd.s32 1, %s22
    $region7: #{decoder_forward.7} parent=1 // loop_footer_branch
      %21 = sbr.rel target = $region3
    $region8: #{decoder_forward.7} parent=1 // loop_exit
      _
    %1262 = vsyncpa [#allocation4], 1
    %s1263 = scalar_lea.sflag [#allocation4], 1
    %1264 = vsyncpa %s1263, 1
    %1265 = vsyncpa [#allocation6], 1
    %1266 = vsyncpa [#allocation9], 1
    %1267 = vsyncpa [#allocation12], 1

// kernel: decoder_forward.8
$region0: #{decoder_forward.8}
  #allocation0 [shape = 'u32[]', space=smem, size = 0x4, offset = 0x4, fixed_abs, tag = 'smem constant byte address 0x4 - core index']
  #allocation1 [shape = 'u32[144,128]{1,0:T(1,128)}', space=vmem, size = 0x12000, scoped, tag = 'internal scratch']
  #allocation2 [shape = 'bf16[8,32]{1,0:T(8,128)(2,1)}', space=vmem, size = 0x800, scoped, tag = 'scratch operand']
  %s0 = inlined_call_operand.vmem [shape: f32[2,8,32], index: 0, kind: input, shape index: {}]
  %s1 = inlined_call_operand.vmem [shape: f32[2,8,32], index: 1, kind: input, shape index: {}]
  %s2 = inlined_call_operand.vmem [shape: f32[2,1,8], index: 2, kind: input, shape index: {}]
  %s3 = inlined_call_operand.vmem [shape: f32[1,32], index: 3, kind: input, shape index: {}]
  %s4 = inlined_call_operand.vmem [shape: f32[1,32], index: 4, kind: input, shape index: {}]
  %s5 = inlined_call_operand.vmem [shape: f32[32,32], index: 5, kind: input, shape index: {}]
  %s6 = inlined_call_operand.vmem [shape: f32[1,32], index: 6, kind: input, shape index: {}]
  %s7 = inlined_call_operand.vmem [shape: f32[32,32], index: 7, kind: input, shape index: {}]
  %s8 = inlined_call_operand.vmem [shape: f32[1,32], index: 8, kind: input, shape index: {}]
  %s9 = inlined_call_operand.vmem [shape: f32[32,32], index: 9, kind: input, shape index: {}]
  %s10 = inlined_call_operand.vmem [shape: f32[1,32], index: 10, kind: input, shape index: {}]
  %s11 = inlined_call_operand.vmem [shape: f32[32,32], index: 11, kind: input, shape index: {}]
  %s12 = inlined_call_operand.vmem [shape: f32[1,32], index: 12, kind: input, shape index: {}]
  %s13 = inlined_call_operand.vmem [shape: f32[2,8,32], index: 13, kind: output, shape index: {}]
  %s14 = sld [smem:[#allocation0]]
  $region85: #{decoder_forward.8} parent=0
    _
  %s16 = ssub.s32 1, %s14
  %s17 = scalar_select 0, %s16, %s14
  loop: start=0, step=1, limit=4
  $region2: #{decoder_forward.8} parent=0 // loop_pre_header
    _
  $region3: #{decoder_forward.8} parent=0 // loop_header
    %s19 = sphi 0, %s23
    %p20 = scmp.ge.s32.totalorder %s19, 4
    %s26 = sphi 0, %s38
    %s27 = sphi 0, %s34
    %s28 = sphi 0, %s26
    %s29 = sphi 0, %s27
    %s30 = sphi 0, %s28
    %s31 = sphi 0, %s29
    %s43 = sphi 0, %s45
    %s46 = sphi 0, %s43
    %s47 = sphi 0, %s46
    %s63 = sphi 0, %s47
    %s69 = sphi 0, %s71
    %s72 = sphi 0, %s69
    %s73 = sphi 0, %s72
    %s89 = sphi 0, %s73
    %s95 = sphi 0, %s97
    %s98 = sphi 0, %s95
    %s99 = sphi 0, %s98
    %s115 = sphi 0, %s99
    %s119 = sphi 0, %s119
    %s121 = sphi 0, %s119
    %s122 = sphi 0, %s121
    %s136 = sphi 0, %s122
    %s140 = sphi 0, %s140
    %s142 = sphi 0, %s140
    %s143 = sphi 0, %s142
    %s157 = sphi 0, %s143
    %s161 = sphi 0, %s161
    %s163 = sphi 0, %s161
    %s164 = sphi 0, %s163
    %s178 = sphi 0, %s164
    %s182 = sphi 0, %s182
    %s184 = sphi 0, %s182
    %s185 = sphi 0, %s184
    %s199 = sphi 0, %s185
    %s203 = sphi 0, %s203
    %s205 = sphi 0, %s203
    %s206 = sphi 0, %s205
    %s220 = sphi 0, %s206
    %s224 = sphi 0, %s224
    %s226 = sphi 0, %s224
    %s227 = sphi 0, %s226
    %s241 = sphi 0, %s227
    %s245 = sphi 0, %s245
    %s247 = sphi 0, %s245
    %s248 = sphi 0, %s247
    %s262 = sphi 0, %s248
    %s266 = sphi 0, %s266
    %s268 = sphi 0, %s266
    %s269 = sphi 0, %s268
    %s283 = sphi 0, %s269
    %s287 = sphi 0, %s287
    %s289 = sphi 0, %s287
    %s290 = sphi 0, %s289
    %s304 = sphi 0, %s290
    %s308 = sphi 0, %s308
    %s310 = sphi 0, %s308
    %s311 = sphi 0, %s310
    %s325 = sphi 0, %s311
    %s333 = sphi 0, %s335
    %s336 = sphi 0, %s333
    %s337 = sphi 0, %s336
    %s353 = sphi 0, %s337
  $region4: #{decoder_forward.8} parent=0 // loop_header_branch
    %22 = sbr.rel (%p20) target = $region8
  $region5: #{decoder_forward.8} parent=0 // loop_body
    %s24 = ssub.s32 %s19, 1
    %s25 = ssub.s32 %s19, 2
    %s32 = sadd.s32 1, %s27
    %p33 = scmp.ge.s32.totalorder %s32, 1
    %s34 = scalar_select %p33, 0, %s32
    %s35 = sadd.s32 1, %s26
    %s36 = scalar_select %p33, %s35, %s26
    %p37 = scmp.ge.s32.totalorder %s36, 2
    %s38 = scalar_select %p37, 0, %s36
    %s39 = ssub.s32 %s26, %s38
    %s40 = ssub.s32 %s27, %s34
    %s41 = sor.u32 %s39, %s40
    %p42 = scmp.eq.s32.totalorder %s41, 0
    %s44 = sadd.s32 %s43, 1
    %s45 = scalar_select %p42, %s43, %s44
    %p48 = pneg %p42
    %p49 = scmp.eq.s32.totalorder %s19, 1
    %p50 = por %p48, %p49
    %p51 = scmp.ne.s32.totalorder %s43, %s46
    %p52 = scmp.eq.s32.totalorder %s19, 0
    %p53 = por %p51, %p52
    %p54 = scmp.ne.s32.totalorder %s43, %s46
    %p55 = scmp.eq.s32.totalorder %s24, 1
    %p56 = por %p54, %p55
    %p57 = scmp.ne.s32.totalorder %s46, %s47
    %p58 = scmp.eq.s32.totalorder %s24, 0
    %p59 = por %p57, %p58
    %p60 = scmp.ne.s32.totalorder %s46, %s47
    %p61 = scmp.eq.s32.totalorder %s25, 1
    %p62 = por %p60, %p61
    %p64 = scmp.ne.s32.totalorder %s47, %s63
    %p65 = scmp.eq.s32.totalorder %s25, 0
    %p66 = por %p64, %p65
    %s67 = ssub.s32 %s26, %s38
    %p68 = scmp.eq.s32.totalorder %s67, 0
    %s70 = sadd.s32 %s69, 1
    %s71 = scalar_select %p68, %s69, %s70
    %p74 = pneg %p68
    %p75 = scmp.eq.s32.totalorder %s19, 1
    %p76 = por %p74, %p75
    %p77 = scmp.ne.s32.totalorder %s69, %s72
    %p78 = scmp.eq.s32.totalorder %s19, 0
    %p79 = por %p77, %p78
    %p80 = scmp.ne.s32.totalorder %s69, %s72
    %p81 = scmp.eq.s32.totalorder %s24, 1
    %p82 = por %p80, %p81
    %p83 = scmp.ne.s32.totalorder %s72, %s73
    %p84 = scmp.eq.s32.totalorder %s24, 0
    %p85 = por %p83, %p84
    %p86 = scmp.ne.s32.totalorder %s72, %s73
    %p87 = scmp.eq.s32.totalorder %s25, 1
    %p88 = por %p86, %p87
    %p90 = scmp.ne.s32.totalorder %s73, %s89
    %p91 = scmp.eq.s32.totalorder %s25, 0
    %p92 = por %p90, %p91
    %s93 = ssub.s32 %s26, %s38
    %p94 = scmp.eq.s32.totalorder %s93, 0
    %s96 = sadd.s32 %s95, 1
    %s97 = scalar_select %p94, %s95, %s96
    %p100 = pneg %p94
    %p101 = scmp.eq.s32.totalorder %s19, 1
    %p102 = por %p100, %p101
    %p103 = scmp.ne.s32.totalorder %s95, %s98
    %p104 = scmp.eq.s32.totalorder %s19, 0
    %p105 = por %p103, %p104
    %p106 = scmp.ne.s32.totalorder %s95, %s98
    %p107 = scmp.eq.s32.totalorder %s24, 1
    %p108 = por %p106, %p107
    %p109 = scmp.ne.s32.totalorder %s98, %s99
    %p110 = scmp.eq.s32.totalorder %s24, 0
    %p111 = por %p109, %p110
    %p112 = scmp.ne.s32.totalorder %s98, %s99
    %p113 = scmp.eq.s32.totalorder %s25, 1
    %p114 = por %p112, %p113
    %p116 = scmp.ne.s32.totalorder %s99, %s115
    %p117 = scmp.eq.s32.totalorder %s25, 0
    %p118 = por %p116, %p117
    %s120 = sadd.s32 %s119, 1
    %p123 = scmp.eq.s32.totalorder %s19, 1
    %p124 = scmp.ne.s32.totalorder %s119, %s121
    %p125 = scmp.eq.s32.totalorder %s19, 0
    %p126 = por %p124, %p125
    %p127 = scmp.ne.s32.totalorder %s119, %s121
    %p128 = scmp.eq.s32.totalorder %s24, 1
    %p129 = por %p127, %p128
    %p130 = scmp.ne.s32.totalorder %s121, %s122
    %p131 = scmp.eq.s32.totalorder %s24, 0
    %p132 = por %p130, %p131
    %p133 = scmp.ne.s32.totalorder %s121, %s122
    %p134 = scmp.eq.s32.totalorder %s25, 1
    %p135 = por %p133, %p134
    %p137 = scmp.ne.s32.totalorder %s122, %s136
    %p138 = scmp.eq.s32.totalorder %s25, 0
    %p139 = por %p137, %p138
    %s141 = sadd.s32 %s140, 1
    %p144 = scmp.eq.s32.totalorder %s19, 1
    %p145 = scmp.ne.s32.totalorder %s140, %s142
    %p146 = scmp.eq.s32.totalorder %s19, 0
    %p147 = por %p145, %p146
    %p148 = scmp.ne.s32.totalorder %s140, %s142
    %p149 = scmp.eq.s32.totalorder %s24, 1
    %p150 = por %p148, %p149
    %p151 = scmp.ne.s32.totalorder %s142, %s143
    %p152 = scmp.eq.s32.totalorder %s24, 0
    %p153 = por %p151, %p152
    %p154 = scmp.ne.s32.totalorder %s142, %s143
    %p155 = scmp.eq.s32.totalorder %s25, 1
    %p156 = por %p154, %p155
    %p158 = scmp.ne.s32.totalorder %s143, %s157
    %p159 = scmp.eq.s32.totalorder %s25, 0
    %p160 = por %p158, %p159
    %s162 = sadd.s32 %s161, 1
    %p165 = scmp.eq.s32.totalorder %s19, 1
    %p166 = scmp.ne.s32.totalorder %s161, %s163
    %p167 = scmp.eq.s32.totalorder %s19, 0
    %p168 = por %p166, %p167
    %p169 = scmp.ne.s32.totalorder %s161, %s163
    %p170 = scmp.eq.s32.totalorder %s24, 1
    %p171 = por %p169, %p170
    %p172 = scmp.ne.s32.totalorder %s163, %s164
    %p173 = scmp.eq.s32.totalorder %s24, 0
    %p174 = por %p172, %p173
    %p175 = scmp.ne.s32.totalorder %s163, %s164
    %p176 = scmp.eq.s32.totalorder %s25, 1
    %p177 = por %p175, %p176
    %p179 = scmp.ne.s32.totalorder %s164, %s178
    %p180 = scmp.eq.s32.totalorder %s25, 0
    %p181 = por %p179, %p180
    %s183 = sadd.s32 %s182, 1
    %p186 = scmp.eq.s32.totalorder %s19, 1
    %p187 = scmp.ne.s32.totalorder %s182, %s184
    %p188 = scmp.eq.s32.totalorder %s19, 0
    %p189 = por %p187, %p188
    %p190 = scmp.ne.s32.totalorder %s182, %s184
    %p191 = scmp.eq.s32.totalorder %s24, 1
    %p192 = por %p190, %p191
    %p193 = scmp.ne.s32.totalorder %s184, %s185
    %p194 = scmp.eq.s32.totalorder %s24, 0
    %p195 = por %p193, %p194
    %p196 = scmp.ne.s32.totalorder %s184, %s185
    %p197 = scmp.eq.s32.totalorder %s25, 1
    %p198 = por %p196, %p197
    %p200 = scmp.ne.s32.totalorder %s185, %s199
    %p201 = scmp.eq.s32.totalorder %s25, 0
    %p202 = por %p200, %p201
    %s204 = sadd.s32 %s203, 1
    %p207 = scmp.eq.s32.totalorder %s19, 1
    %p208 = scmp.ne.s32.totalorder %s203, %s205
    %p209 = scmp.eq.s32.totalorder %s19, 0
    %p210 = por %p208, %p209
    %p211 = scmp.ne.s32.totalorder %s203, %s205
    %p212 = scmp.eq.s32.totalorder %s24, 1
    %p213 = por %p211, %p212
    %p214 = scmp.ne.s32.totalorder %s205, %s206
    %p215 = scmp.eq.s32.totalorder %s24, 0
    %p216 = por %p214, %p215
    %p217 = scmp.ne.s32.totalorder %s205, %s206
    %p218 = scmp.eq.s32.totalorder %s25, 1
    %p219 = por %p217, %p218
    %p221 = scmp.ne.s32.totalorder %s206, %s220
    %p222 = scmp.eq.s32.totalorder %s25, 0
    %p223 = por %p221, %p222
    %s225 = sadd.s32 %s224, 1
    %p228 = scmp.eq.s32.totalorder %s19, 1
    %p229 = scmp.ne.s32.totalorder %s224, %s226
    %p230 = scmp.eq.s32.totalorder %s19, 0
    %p231 = por %p229, %p230
    %p232 = scmp.ne.s32.totalorder %s224, %s226
    %p233 = scmp.eq.s32.totalorder %s24, 1
    %p234 = por %p232, %p233
    %p235 = scmp.ne.s32.totalorder %s226, %s227
    %p236 = scmp.eq.s32.totalorder %s24, 0
    %p237 = por %p235, %p236
    %p238 = scmp.ne.s32.totalorder %s226, %s227
    %p239 = scmp.eq.s32.totalorder %s25, 1
    %p240 = por %p238, %p239
    %p242 = scmp.ne.s32.totalorder %s227, %s241
    %p243 = scmp.eq.s32.totalorder %s25, 0
    %p244 = por %p242, %p243
    %s246 = sadd.s32 %s245, 1
    %p249 = scmp.eq.s32.totalorder %s19, 1
    %p250 = scmp.ne.s32.totalorder %s245, %s247
    %p251 = scmp.eq.s32.totalorder %s19, 0
    %p252 = por %p250, %p251
    %p253 = scmp.ne.s32.totalorder %s245, %s247
    %p254 = scmp.eq.s32.totalorder %s24, 1
    %p255 = por %p253, %p254
    %p256 = scmp.ne.s32.totalorder %s247, %s248
    %p257 = scmp.eq.s32.totalorder %s24, 0
    %p258 = por %p256, %p257
    %p259 = scmp.ne.s32.totalorder %s247, %s248
    %p260 = scmp.eq.s32.totalorder %s25, 1
    %p261 = por %p259, %p260
    %p263 = scmp.ne.s32.totalorder %s248, %s262
    %p264 = scmp.eq.s32.totalorder %s25, 0
    %p265 = por %p263, %p264
    %s267 = sadd.s32 %s266, 1
    %p270 = scmp.eq.s32.totalorder %s19, 1
    %p271 = scmp.ne.s32.totalorder %s266, %s268
    %p272 = scmp.eq.s32.totalorder %s19, 0
    %p273 = por %p271, %p272
    %p274 = scmp.ne.s32.totalorder %s266, %s268
    %p275 = scmp.eq.s32.totalorder %s24, 1
    %p276 = por %p274, %p275
    %p277 = scmp.ne.s32.totalorder %s268, %s269
    %p278 = scmp.eq.s32.totalorder %s24, 0
    %p279 = por %p277, %p278
    %p280 = scmp.ne.s32.totalorder %s268, %s269
    %p281 = scmp.eq.s32.totalorder %s25, 1
    %p282 = por %p280, %p281
    %p284 = scmp.ne.s32.totalorder %s269, %s283
    %p285 = scmp.eq.s32.totalorder %s25, 0
    %p286 = por %p284, %p285
    %s288 = sadd.s32 %s287, 1
    %p291 = scmp.eq.s32.totalorder %s19, 1
    %p292 = scmp.ne.s32.totalorder %s287, %s289
    %p293 = scmp.eq.s32.totalorder %s19, 0
    %p294 = por %p292, %p293
    %p295 = scmp.ne.s32.totalorder %s287, %s289
    %p296 = scmp.eq.s32.totalorder %s24, 1
    %p297 = por %p295, %p296
    %p298 = scmp.ne.s32.totalorder %s289, %s290
    %p299 = scmp.eq.s32.totalorder %s24, 0
    %p300 = por %p298, %p299
    %p301 = scmp.ne.s32.totalorder %s289, %s290
    %p302 = scmp.eq.s32.totalorder %s25, 1
    %p303 = por %p301, %p302
    %p305 = scmp.ne.s32.totalorder %s290, %s304
    %p306 = scmp.eq.s32.totalorder %s25, 0
    %p307 = por %p305, %p306
    %s309 = sadd.s32 %s308, 1
    %p312 = scmp.eq.s32.totalorder %s19, 1
    %p313 = scmp.ne.s32.totalorder %s308, %s310
    %p314 = scmp.eq.s32.totalorder %s19, 0
    %p315 = por %p313, %p314
    %p316 = scmp.ne.s32.totalorder %s308, %s310
    %p317 = scmp.eq.s32.totalorder %s24, 1
    %p318 = por %p316, %p317
    %p319 = scmp.ne.s32.totalorder %s310, %s311
    %p320 = scmp.eq.s32.totalorder %s24, 0
    %p321 = por %p319, %p320
    %p322 = scmp.ne.s32.totalorder %s310, %s311
    %p323 = scmp.eq.s32.totalorder %s25, 1
    %p324 = por %p322, %p323
    %p326 = scmp.ne.s32.totalorder %s311, %s325
    %p327 = scmp.eq.s32.totalorder %s25, 0
    %p328 = por %p326, %p327
    %s329 = ssub.s32 %s26, %s38
    %s330 = ssub.s32 %s27, %s34
    %s331 = sor.u32 %s329, %s330
    %p332 = scmp.eq.s32.totalorder %s331, 0
    %s334 = sadd.s32 %s333, 1
    %s335 = scalar_select %p332, %s333, %s334
    %p338 = pneg %p332
    %p339 = scmp.eq.s32.totalorder %s19, 1
    %p340 = por %p338, %p339
    %p341 = scmp.ne.s32.totalorder %s333, %s336
    %p342 = scmp.eq.s32.totalorder %s19, 0
    %p343 = por %p341, %p342
    %p344 = scmp.ne.s32.totalorder %s333, %s336
    %p345 = scmp.eq.s32.totalorder %s24, 1
    %p346 = por %p344, %p345
    %p347 = scmp.ne.s32.totalorder %s336, %s337
    %p348 = scmp.eq.s32.totalorder %s24, 0
    %p349 = por %p347, %p348
    %p350 = scmp.ne.s32.totalorder %s336, %s337
    %p351 = scmp.eq.s32.totalorder %s25, 1
    %p352 = por %p350, %p351
    %p354 = scmp.ne.s32.totalorder %s337, %s353
    %p355 = scmp.eq.s32.totalorder %s25, 0
    %p356 = por %p354, %p355
    %p357 = scmp.le.s32.totalorder 1, %s19
    %p358 = scmp.lt.s32.totalorder %s19, 3
    %p359 = pnand %p357, %p358
    %p360 = pneg %p359
    // Predicated region
    $region9: #{decoder_forward.8} parent=5 // pred_check
      _
    $region10: #{decoder_forward.8} parent=5 // pred_check_branch
      %362 = sbr.rel (%p359) target = $region12
    $region11: #{decoder_forward.8} parent=5 // pred_region
      %s363 = ssub.s32 %s19, 1
      // Predicated region
      $region13: #{decoder_forward.8} parent=11 // pred_check
        %p364 = pneg %p132
      $region14: #{decoder_forward.8} parent=11 // pred_check_branch
        %366 = sbr.rel (%p364) target = $region16
      $region15: #{decoder_forward.8} parent=11 // pred_region
        _
      $region16: #{decoder_forward.8} parent=11 // pred_fallthru
        _
      // Predicated region
      $region17: #{decoder_forward.8} parent=11 // pred_check
        %p367 = pneg %p153
      $region18: #{decoder_forward.8} parent=11 // pred_check_branch
        %369 = sbr.rel (%p367) target = $region20
      $region19: #{decoder_forward.8} parent=11 // pred_region
        _
      $region20: #{decoder_forward.8} parent=11 // pred_fallthru
        _
      // Predicated region
      $region21: #{decoder_forward.8} parent=11 // pred_check
        %p370 = pneg %p174
      $region22: #{decoder_forward.8} parent=11 // pred_check_branch
        %372 = sbr.rel (%p370) target = $region24
      $region23: #{decoder_forward.8} parent=11 // pred_region
        _
      $region24: #{decoder_forward.8} parent=11 // pred_fallthru
        _
      // Predicated region
      $region25: #{decoder_forward.8} parent=11 // pred_check
        %p373 = pneg %p195
      $region26: #{decoder_forward.8} parent=11 // pred_check_branch
        %375 = sbr.rel (%p373) target = $region28
      $region27: #{decoder_forward.8} parent=11 // pred_region
        _
      $region28: #{decoder_forward.8} parent=11 // pred_fallthru
        _
      // Predicated region
      $region29: #{decoder_forward.8} parent=11 // pred_check
        %p376 = pneg %p216
      $region30: #{decoder_forward.8} parent=11 // pred_check_branch
        %378 = sbr.rel (%p376) target = $region32
      $region31: #{decoder_forward.8} parent=11 // pred_region
        _
      $region32: #{decoder_forward.8} parent=11 // pred_fallthru
        _
      // Predicated region
      $region33: #{decoder_forward.8} parent=11 // pred_check
        %p379 = pneg %p237
      $region34: #{decoder_forward.8} parent=11 // pred_check_branch
        %381 = sbr.rel (%p379) target = $region36
      $region35: #{decoder_forward.8} parent=11 // pred_region
        _
      $region36: #{decoder_forward.8} parent=11 // pred_fallthru
        _
      // Predicated region
      $region37: #{decoder_forward.8} parent=11 // pred_check
        %p382 = pneg %p258
      $region38: #{decoder_forward.8} parent=11 // pred_check_branch
        %384 = sbr.rel (%p382) target = $region40
      $region39: #{decoder_forward.8} parent=11 // pred_region
        _
      $region40: #{decoder_forward.8} parent=11 // pred_fallthru
        _
      // Predicated region
      $region41: #{decoder_forward.8} parent=11 // pred_check
        %p385 = pneg %p279
      $region42: #{decoder_forward.8} parent=11 // pred_check_branch
        %387 = sbr.rel (%p385) target = $region44
      $region43: #{decoder_forward.8} parent=11 // pred_region
        _
      $region44: #{decoder_forward.8} parent=11 // pred_fallthru
        _
      // Predicated region
      $region45: #{decoder_forward.8} parent=11 // pred_check
        %p388 = pneg %p300
      $region46: #{decoder_forward.8} parent=11 // pred_check_branch
        %390 = sbr.rel (%p388) target = $region48
      $region47: #{decoder_forward.8} parent=11 // pred_region
        _
      $region48: #{decoder_forward.8} parent=11 // pred_fallthru
        _
      // Predicated region
      $region49: #{decoder_forward.8} parent=11 // pred_check
        %p391 = pneg %p321
      $region50: #{decoder_forward.8} parent=11 // pred_check_branch
        %393 = sbr.rel (%p391) target = $region52
      $region51: #{decoder_forward.8} parent=11 // pred_region
        _
      $region52: #{decoder_forward.8} parent=11 // pred_fallthru
        _
    $region12: #{decoder_forward.8} parent=5 // pred_fallthru
      _
    %p394 = scmp.lt.s32.totalorder %s19, 2
    // Predicated region
    $region53: #{decoder_forward.8} parent=5 // pred_check
      %p395 = pneg %p394
    $region54: #{decoder_forward.8} parent=5 // pred_check_branch
      %397 = sbr.rel (%p395) target = $region56
    $region55: #{decoder_forward.8} parent=5 // pred_region
      // Predicated region
      $region57: #{decoder_forward.8} parent=55 // pred_check
        %p398 = pneg %p53
      $region58: #{decoder_forward.8} parent=55 // pred_check_branch
        %400 = sbr.rel (%p398) target = $region60
      $region59: #{decoder_forward.8} parent=55 // pred_region
        %p401 = scmp.lt.s32.totalorder %s26, 1
        %s402 = scalar_select %p401, %s26, 1
        %p403 = scmp.lt.s32.totalorder %s27, 0
        %s404 = scalar_select %p403, %s27, 0
        %s405 = sadd.s32 %s404, %s402
        %s406 = smul.addr %s405, 8
        %s407 = scalar_lea.vmem %s0, %s406
      $region60: #{decoder_forward.8} parent=55 // pred_fallthru
        _
      // Predicated region
      $region61: #{decoder_forward.8} parent=55 // pred_check
        %p408 = pneg %p79
      $region62: #{decoder_forward.8} parent=55 // pred_check_branch
        %410 = sbr.rel (%p408) target = $region64
      $region63: #{decoder_forward.8} parent=55 // pred_region
        %p411 = scmp.lt.s32.totalorder %s26, 1
        %s412 = scalar_select %p411, %s26, 1
        %s413 = smul.addr %s412, 8
        %s414 = scalar_lea.vmem %s1, %s413
      $region64: #{decoder_forward.8} parent=55 // pred_fallthru
        _
      // Predicated region
      $region65: #{decoder_forward.8} parent=55 // pred_check
        %p415 = pneg %p105
      $region66: #{decoder_forward.8} parent=55 // pred_check_branch
        %417 = sbr.rel (%p415) target = $region68
      $region67: #{decoder_forward.8} parent=55 // pred_region
        %p418 = scmp.lt.s32.totalorder %s26, 1
        %s419 = scalar_select %p418, %s26, 1
        %s420 = scalar_lea.vmem %s2, %s419
      $region68: #{decoder_forward.8} parent=55 // pred_fallthru
        _
    $region56: #{decoder_forward.8} parent=5 // pred_fallthru
      _
    %p421 = scmp.le.s32.totalorder 1, %s19
    %p422 = scmp.lt.s32.totalorder %s19, 3
    %p423 = pnand %p421, %p422
    %p424 = pneg %p423
    // Predicated region
    $region69: #{decoder_forward.8} parent=5 // pred_check
      _
    $region70: #{decoder_forward.8} parent=5 // pred_check_branch
      %426 = sbr.rel (%p423) target = $region72
    $region71: #{decoder_forward.8} parent=5 // pred_region
      %s427 = ssub.s32 %s19, 1
      %p428 = scmp.lt.s32.totalorder %s28, 1
      %s429 = scalar_select %p428, %s28, 1
      %p430 = scmp.lt.s32.totalorder %s29, 0
      %s431 = scalar_select %p430, %s29, 0
      %s432 = sadd.s32 %s431, %s429
      %s433 = smul.addr %s432, 8
      %s434 = scalar_lea.vmem %s0, %s433
      %p435 = pneg %p59
      %p436 = pneg %p56
      %p437 = scmp.lt.s32.totalorder %s28, 1
      %s438 = scalar_select %p437, %s28, 1
      %s439 = smul.addr %s438, 8
      %s440 = scalar_lea.vmem %s1, %s439
      %p441 = pneg %p85
      %p442 = pneg %p82
      %p443 = scmp.lt.s32.totalorder %s28, 1
      %s444 = scalar_select %p443, %s28, 1
      %s445 = scalar_lea.vmem %s2, %s444
      %p446 = pneg %p111
      %p447 = pneg %p108
      %p448 = pneg %p132
      %p449 = pneg %p129
      %p450 = pneg %p153
      %p451 = pneg %p150
      %p452 = pneg %p174
      %p453 = pneg %p171
      %p454 = pneg %p195
      %p455 = pneg %p192
      %p456 = pneg %p216
      %p457 = pneg %p213
      %p458 = pneg %p237
      %p459 = pneg %p234
      %p460 = pneg %p258
      %p461 = pneg %p255
      %p462 = pneg %p279
      %p463 = pneg %p276
      %p464 = pneg %p300
      %p465 = pneg %p297
      %p466 = pneg %p321
      %p467 = pneg %p318
      %p468 = pneg %p349
      %p469 = pneg %p346
      %p470 = scmp.lt.s32.totalorder %s28, 1
      %s471 = scalar_select %p470, %s28, 1
      %p472 = scmp.lt.s32.totalorder %s29, 0
      %s473 = scalar_select %p472, %s29, 0
      %s474 = sadd.s32 %s473, %s471
      %s475 = smul.addr %s474, 8
      %s476 = scalar_lea.vmem %s13, %s475
      %p477 = scmp.lt.s32.totalorder %s28, 1
      %s478 = scalar_select %p477, %s28, 1
      %p479 = scmp.lt.s32.totalorder %s29, 0
      %s480 = scalar_select %p479, %s29, 0
      %s481 = sadd.s32 %s480, %s478
      %s482 = smul.addr %s481, 8
      %s483 = scalar_lea.vmem %s0, %s482
      %p484 = scmp.lt.s32.totalorder %s28, 1
      %s485 = scalar_select %p484, %s28, 1
      %s486 = smul.addr %s485, 8
      %s487 = scalar_lea.vmem %s1, %s486
      %p488 = scmp.lt.s32.totalorder %s28, 1
      %s489 = scalar_select %p488, %s28, 1
      %s490 = scalar_lea.vmem %s2, %s489
      %p491 = scmp.lt.s32.totalorder %s28, 1
      %s492 = scalar_select %p491, %s28, 1
      %p493 = scmp.lt.s32.totalorder %s29, 0
      %s494 = scalar_select %p493, %s29, 0
      %s495 = sadd.s32 %s494, %s492
      %s496 = smul.addr %s495, 8
      %s497 = scalar_lea.vmem %s13, %s496
      %v499 = vld [vmem:[%s483] sm:$0xff]
      %v500 = vld [vmem:[%s3] sm:$0x1]
      %v501 = vld [vmem:[%s4] sm:$0x1]
      %vm502 = vcmask 261120
      %v503 = vsel %vm502, %v499, 0.0
      %504 = vadd.xlane.f32.xlu0 %v503
      %v505 = vpop.xlane.xlu0 %504
      %v506 = vrcp.pop 32.0
      %v507 = vmul.f32 %v505, %v506
      %v508 = vsub.f32 %v499, %v507
      %v509 = vmul.f32 %v508, %v508
      %v510 = vsel %vm502, %v509, 0.0
      %511 = vadd.xlane.f32.xlu0 %v510
      %v512 = vpop.xlane.xlu0 %511
      %v513 = vmul.f32 %v512, 0.032258064
      %v514 = vrsqrt.pop %v513
      %v515 = vmul.f32 %v513, %v514
      %vm516 = vcmp.eq.f32.partialorder %v513, inf
      %v517 = vsel %vm516, %v513, %v515
      %vm518 = vcmp.eq.f32.partialorder %v513, 0.0
      %v519 = vand.u32 %v513, 2147483648
      %v520 = vsel %vm518, %v519, %v517
      %v521 = vadd.f32 %v520, 1e-06
      %v522 = vrcp.pop %v521
      %v523 = vmul.f32 %v508, %v522
      %v525 = vlaneseq
      %v526 = vshrl.u32 %v525, 7
      %v527 = vsub.s32 0, %v526
      %v528 = vrot.slane %v500, %v527
      %v530 = vmul.f32 %v528, %v523
      %v532 = vlaneseq
      %v533 = vshrl.u32 %v532, 7
      %v534 = vsub.s32 0, %v533
      %v535 = vrot.slane %v501, %v534
      %v537 = vadd.f32 %v530, %v535
      %v538 = vld [vmem:[%s487] sm:$0xff]
      %v539 = vld [vmem:[%s5] sm:$0xff]
      %v540 = vld [vmem:[%s5 + $0x8] sm:$0xff]
      %v541 = vld [vmem:[%s5 + $0x10] sm:$0xff]
      %v542 = vld [vmem:[%s5 + $0x18] sm:$0xff]
      %v543 = vpack.c.bf16 %v537, %v537
      %v544 = vpack.c.bf16 %v540, %v539
      %v545 = vpack.c.bf16 %v542, %v541
      %v546 = vld [vmem:[%s6] sm:$0x1]
      %v548 = vlaneseq
      %v549 = vshrl.u32 %v548, 7
      %v550 = vsub.s32 0, %v549
      %v551 = vrot.slane %v546, %v550
      %v554 = vsel %vm502, %v543, 0
      %556 = vmatprep.subr.bf16.mxu0 0
      %557 = vmatpush1.bf16.msra.mxu0 %v544
      %558 = vmatprep.subr.bf16.mxu0 0
      %559 = vmatpush1.bf16.msra.mxu0 %v545
      %560 = vmatprep.subr.bf16.mxu0 0
      %561 = vmatpush1.bf16.msra.mxu0 0
      %562 = vmatprep.subr.bf16.mxu0 0
      %563 = vmatpush1.bf16.msra.mxu0 0
      %564 = vmatprep.subr.bf16.mxu0 0
      %565 = vmatpush1.bf16.msra.mxu0 0
      %566 = vmatprep.subr.bf16.mxu0 0
      %567 = vmatpush1.bf16.msra.mxu0 0
      %568 = vmatprep.subr.bf16.mxu0 0
      %569 = vmatpush1.bf16.msra.mxu0 0
      %570 = vmatprep.subr.bf16.mxu0 0
      %571 = vmatpush1.bf16.msra.mxu0 0
      %572 = vmatprep.subr.bf16.mxu0 0
      %573 = vmatpush1.bf16.msra.mxu0 0
      %574 = vmatprep.subr.bf16.mxu0 0
      %575 = vmatpush1.bf16.msra.mxu0 0
      %576 = vmatprep.subr.bf16.mxu0 0
      %577 = vmatpush1.bf16.msra.mxu0 0
      %578 = vmatprep.subr.bf16.mxu0 0
      %579 = vmatpush1.bf16.msra.mxu0 0
      %580 = vmatprep.subr.bf16.mxu0 0
      %581 = vmatpush1.bf16.msra.mxu0 0
      %582 = vmatprep.subr.bf16.mxu0 0
      %583 = vmatpush1.bf16.msra.mxu0 0
      %584 = vmatprep.subr.bf16.mxu0 0
      %585 = vmatpush1.bf16.msra.mxu0 0
      %586 = vmatprep.subr.bf16.mxu0 0
      %587 = vmatpush1.bf16.msra.mxu0 0
      %588 = vmatprep.mubr.bf16.mxu0 0
      %589 = vmatmul.mubr.bf16.gmra.mrb[0].mxu0 %v554
      %v590 = vpop.f32.mrb[0].mxu0
      %v591 = vadd.f32 %v551, %v590
      %v592 = vpop.f32.mrb[0].mxu0
      %v593 = vpop.f32.mrb[0].mxu0
      %v594 = vpop.f32.mrb[0].mxu0
      %595 = vdwg.mxu0
      %v596 = vpack.c.bf16 %v591, %v591
      %v597 = vld [vmem:[%s7] sm:$0xff]
      %v598 = vld [vmem:[%s7 + $0x8] sm:$0xff]
      %v599 = vld [vmem:[%s7 + $0x10] sm:$0xff]
      %v600 = vld [vmem:[%s7 + $0x18] sm:$0xff]
      %v601 = vpack.c.bf16 %v538, %v538
      %v602 = vpack.c.bf16 %v598, %v597
      %v603 = vpack.c.bf16 %v600, %v599
      %v604 = vld [vmem:[%s8] sm:$0x1]
      %v606 = vlaneseq
      %v607 = vshrl.u32 %v606, 7
      %v608 = vsub.s32 0, %v607
      %v609 = vrot.slane %v604, %v608
      %v612 = vsel %vm502, %v601, 0
      %614 = vmatprep.subr.bf16.mxu0 0
      %615 = vmatpush1.bf16.msra.mxu0 %v602
      %616 = vmatprep.subr.bf16.mxu0 0
      %617 = vmatpush1.bf16.msra.mxu0 %v603
      %618 = vmatprep.subr.bf16.mxu0 0
      %619 = vmatpush1.bf16.msra.mxu0 0
      %620 = vmatprep.subr.bf16.mxu0 0
      %621 = vmatpush1.bf16.msra.mxu0 0
      %622 = vmatprep.subr.bf16.mxu0 0
      %623 = vmatpush1.bf16.msra.mxu0 0
      %624 = vmatprep.subr.bf16.mxu0 0
      %625 = vmatpush1.bf16.msra.mxu0 0
      %626 = vmatprep.subr.bf16.mxu0 0
      %627 = vmatpush1.bf16.msra.mxu0 0
      %628 = vmatprep.subr.bf16.mxu0 0
      %629 = vmatpush1.bf16.msra.mxu0 0
      %630 = vmatprep.subr.bf16.mxu0 0
      %631 = vmatpush1.bf16.msra.mxu0 0
      %632 = vmatprep.subr.bf16.mxu0 0
      %633 = vmatpush1.bf16.msra.mxu0 0
      %634 = vmatprep.subr.bf16.mxu0 0
      %635 = vmatpush1.bf16.msra.mxu0 0
      %636 = vmatprep.subr.bf16.mxu0 0
      %637 = vmatpush1.bf16.msra.mxu0 0
      %638 = vmatprep.subr.bf16.mxu0 0
      %639 = vmatpush1.bf16.msra.mxu0 0
      %640 = vmatprep.subr.bf16.mxu0 0
      %641 = vmatpush1.bf16.msra.mxu0 0
      %642 = vmatprep.subr.bf16.mxu0 0
      %643 = vmatpush1.bf16.msra.mxu0 0
      %644 = vmatprep.subr.bf16.mxu0 0
      %645 = vmatpush1.bf16.msra.mxu0 0
      %646 = vmatprep.mubr.bf16.mxu0 0
      %647 = vmatmul.mubr.bf16.gmra.mrb[0].mxu0 %v612
      %v648 = vpop.f32.mrb[0].mxu0
      %v649 = vadd.f32 %v609, %v648
      %v650 = vpop.f32.mrb[0].mxu0
      %v651 = vpop.f32.mrb[0].mxu0
      %v652 = vpop.f32.mrb[0].mxu0
      %653 = vdwg.mxu0
      %v654 = vpack.c.bf16 %v649, %v649
      %v655 = vld [vmem:[%s9] sm:$0xff]
      %v656 = vld [vmem:[%s9 + $0x8] sm:$0xff]
      %v657 = vld [vmem:[%s9 + $0x10] sm:$0xff]
      %v658 = vld [vmem:[%s9 + $0x18] sm:$0xff]
      %v659 = vpack.c.bf16 %v656, %v655
      %v660 = vpack.c.bf16 %v658, %v657
      %v661 = vld [vmem:[%s10] sm:$0x1]
      %v663 = vlaneseq
      %v664 = vshrl.u32 %v663, 7
      %v665 = vsub.s32 0, %v664
      %v666 = vrot.slane %v661, %v665
      %668 = vmatprep.subr.bf16.mxu0 0
      %669 = vmatpush1.bf16.msra.mxu0 %v659
      %670 = vmatprep.subr.bf16.mxu0 0
      %671 = vmatpush1.bf16.msra.mxu0 %v660
      %672 = vmatprep.subr.bf16.mxu0 0
      %673 = vmatpush1.bf16.msra.mxu0 0
      %674 = vmatprep.subr.bf16.mxu0 0
      %675 = vmatpush1.bf16.msra.mxu0 0
      %676 = vmatprep.subr.bf16.mxu0 0
      %677 = vmatpush1.bf16.msra.mxu0 0
      %678 = vmatprep.subr.bf16.mxu0 0
      %679 = vmatpush1.bf16.msra.mxu0 0
      %680 = vmatprep.subr.bf16.mxu0 0
      %681 = vmatpush1.bf16.msra.mxu0 0
      %682 = vmatprep.subr.bf16.mxu0 0
      %683 = vmatpush1.bf16.msra.mxu0 0
      %684 = vmatprep.subr.bf16.mxu0 0
      %685 = vmatpush1.bf16.msra.mxu0 0
      %686 = vmatprep.subr.bf16.mxu0 0
      %687 = vmatpush1.bf16.msra.mxu0 0
      %688 = vmatprep.subr.bf16.mxu0 0
      %689 = vmatpush1.bf16.msra.mxu0 0
      %690 = vmatprep.subr.bf16.mxu0 0
      %691 = vmatpush1.bf16.msra.mxu0 0
      %692 = vmatprep.subr.bf16.mxu0 0
      %693 = vmatpush1.bf16.msra.mxu0 0
      %694 = vmatprep.subr.bf16.mxu0 0
      %695 = vmatpush1.bf16.msra.mxu0 0
      %696 = vmatprep.subr.bf16.mxu0 0
      %697 = vmatpush1.bf16.msra.mxu0 0
      %698 = vmatprep.subr.bf16.mxu0 0
      %699 = vmatpush1.bf16.msra.mxu0 0
      %700 = vmatprep.mubr.bf16.mxu0 0
      %701 = vmatmul.mubr.bf16.gmra.mrb[0].mxu0 %v612
      %v702 = vpop.f32.mrb[0].mxu0
      %v703 = vadd.f32 %v666, %v702
      %v704 = vpop.f32.mrb[0].mxu0
      %v705 = vpop.f32.mrb[0].mxu0
      %v706 = vpop.f32.mrb[0].mxu0
      %707 = vdwg.mxu0
      %v708 = vpack.c.bf16 %v703, %v703
      %v709 = vld [vmem:[%s490] sm:$0x1]
      %v711 = vlaneseq
      %v712 = vshrl.u32 %v711, 7
      %v713 = vsub.s32 0, %v712
      %v714 = vrot.slane %v709, %v713
      %vm716 = vcmask 64512
      %v718 = vsel %vm716, %v596, 0
      %v721 = vsel %vm716, %v654, 0
      %723 = vmatprep.subr.bf16.mxu0 0
      %724 = vmatpush1.bf16.xpose.msra.mxu0 %v721
      %725 = vmatprep.subr.bf16.mxu0 0
      %726 = vmatpush1.bf16.xpose.msra.mxu0 0
      %727 = vmatprep.subr.bf16.mxu0 0
      %728 = vmatpush1.bf16.xpose.msra.mxu0 0
      %729 = vmatprep.subr.bf16.mxu0 0
      %730 = vmatpush1.bf16.xpose.msra.mxu0 0
      %731 = vmatprep.subr.bf16.mxu0 0
      %732 = vmatpush1.bf16.xpose.msra.mxu0 0
      %733 = vmatprep.subr.bf16.mxu0 0
      %734 = vmatpush1.bf16.xpose.msra.mxu0 0
      %735 = vmatprep.subr.bf16.mxu0 0
      %736 = vmatpush1.bf16.xpose.msra.mxu0 0
      %737 = vmatprep.subr.bf16.mxu0 0
      %738 = vmatpush1.bf16.xpose.msra.mxu0 0
      %739 = vmatprep.subr.bf16.mxu0 0
      %740 = vmatpush1.bf16.xpose.msra.mxu0 0
      %741 = vmatprep.subr.bf16.mxu0 0
      %742 = vmatpush1.bf16.xpose.msra.mxu0 0
      %743 = vmatprep.subr.bf16.mxu0 0
      %744 = vmatpush1.bf16.xpose.msra.mxu0 0
      %745 = vmatprep.subr.bf16.mxu0 0
      %746 = vmatpush1.bf16.xpose.msra.mxu0 0
      %747 = vmatprep.subr.bf16.mxu0 0
      %748 = vmatpush1.bf16.xpose.msra.mxu0 0
      %749 = vmatprep.subr.bf16.mxu0 0
      %750 = vmatpush1.bf16.xpose.msra.mxu0 0
      %751 = vmatprep.subr.bf16.mxu0 0
      %752 = vmatpush1.bf16.xpose.msra.mxu0 0
      %753 = vmatprep.subr.bf16.mxu0 0
      %754 = vmatpush1.bf16.xpose.msra.mxu0 0
      %755 = vmatprep.mubr.bf16.mxu0 0
      %756 = vmatmul.mubr.bf16.gmra.mrb[0].mxu0 %v718
      %v757 = vpop.f32.mrb[0].mxu0
      %v758 = vadd.f32 0.0, %v757
      %v759 = vpop.f32.mrb[0].mxu0
      %v760 = vpop.f32.mrb[0].mxu0
      %v761 = vpop.f32.mrb[0].mxu0
      %762 = vdwg.mxu0
      %v763 = vmul.f32 %v758, 0.35355338
      %v764 = vadd.f32 %v763, %v714
      %v765 = vsel %vm716, %v764, -inf
      %766 = vmax.xlane.f32.xlu0 %v765
      %v767 = vpop.xlane.xlu0 %766
      %v768 = vsub.f32 %v764, %v767
      %v769 = vmul.f32 %v768, 1.442695
      %v770 = vpow.pop %v769
      %v771 = vsel %vm716, %v770, 0.0
      %772 = vadd.xlane.f32.xlu0 %v771
      %v773 = vpop.xlane.xlu0 %772
      %v774 = vrcp.pop %v773
      %v775 = vpack.c.bf16 %v770, %v770
      %v777 = vsel %vm716, %v775, 0
      %vm779 = vcmask 1043456
      %v781 = vsel %vm779, %v708, 0
      %783 = vmatprep.subr.bf16.mxu0 0
      %784 = vmatpush1.bf16.msra.mxu0 %v781
      %785 = vmatprep.subr.bf16.mxu0 0
      %786 = vmatpush1.bf16.msra.mxu0 0
      %787 = vmatprep.subr.bf16.mxu0 0
      %788 = vmatpush1.bf16.msra.mxu0 0
      %789 = vmatprep.subr.bf16.mxu0 0
      %790 = vmatpush1.bf16.msra.mxu0 0
      %791 = vmatprep.subr.bf16.mxu0 0
      %792 = vmatpush1.bf16.msra.mxu0 0
      %793 = vmatprep.subr.bf16.mxu0 0
      %794 = vmatpush1.bf16.msra.mxu0 0
      %795 = vmatprep.subr.bf16.mxu0 0
      %796 = vmatpush1.bf16.msra.mxu0 0
      %797 = vmatprep.subr.bf16.mxu0 0
      %798 = vmatpush1.bf16.msra.mxu0 0
      %799 = vmatprep.subr.bf16.mxu0 0
      %800 = vmatpush1.bf16.msra.mxu0 0
      %801 = vmatprep.subr.bf16.mxu0 0
      %802 = vmatpush1.bf16.msra.mxu0 0
      %803 = vmatprep.subr.bf16.mxu0 0
      %804 = vmatpush1.bf16.msra.mxu0 0
      %805 = vmatprep.subr.bf16.mxu0 0
      %806 = vmatpush1.bf16.msra.mxu0 0
      %807 = vmatprep.subr.bf16.mxu0 0
      %808 = vmatpush1.bf16.msra.mxu0 0
      %809 = vmatprep.subr.bf16.mxu0 0
      %810 = vmatpush1.bf16.msra.mxu0 0
      %811 = vmatprep.subr.bf16.mxu0 0
      %812 = vmatpush1.bf16.msra.mxu0 0
      %813 = vmatprep.subr.bf16.mxu0 0
      %814 = vmatpush1.bf16.msra.mxu0 0
      %815 = vmatprep.mubr.bf16.mxu0 0
      %816 = vmatmul.mubr.bf16.gmra.mrb[0].mxu0 %v777
      %v817 = vpop.f32.mrb[0].mxu0
      %v818 = vadd.f32 0.0, %v817
      %v819 = vpop.f32.mrb[0].mxu0
      %v820 = vpop.f32.mrb[0].mxu0
      %v821 = vpop.f32.mrb[0].mxu0
      %822 = vdwg.mxu0
      %v823 = vmul.f32 %v818, %v774
      %v824 = vpack.c.bf16 %v823, %v823
      %vm825 = vcmask 60416
      %826 = vst.msk [vmem:[#allocation2] sm:$0xf] %vm825, %v824
      %828 = vrot.lane.b32.xlu0 %v596, 120
      %v829 = vpop.permute.xlu0 %828
      %831 = vrot.lane.b32.xlu0 %v654, 120
      %v832 = vpop.permute.xlu0 %831
      %v834 = vsel %vm716, %v829, 0
      %v837 = vsel %vm716, %v832, 0
      %839 = vmatprep.subr.bf16.mxu0 0
      %840 = vmatpush1.bf16.xpose.msra.mxu0 %v837
      %841 = vmatprep.subr.bf16.mxu0 0
      %842 = vmatpush1.bf16.xpose.msra.mxu0 0
      %843 = vmatprep.subr.bf16.mxu0 0
      %844 = vmatpush1.bf16.xpose.msra.mxu0 0
      %845 = vmatprep.subr.bf16.mxu0 0
      %846 = vmatpush1.bf16.xpose.msra.mxu0 0
      %847 = vmatprep.subr.bf16.mxu0 0
      %848 = vmatpush1.bf16.xpose.msra.mxu0 0
      %849 = vmatprep.subr.bf16.mxu0 0
      %850 = vmatpush1.bf16.xpose.msra.mxu0 0
      %851 = vmatprep.subr.bf16.mxu0 0
      %852 = vmatpush1.bf16.xpose.msra.mxu0 0
      %853 = vmatprep.subr.bf16.mxu0 0
      %854 = vmatpush1.bf16.xpose.msra.mxu0 0
      %855 = vmatprep.subr.bf16.mxu0 0
      %856 = vmatpush1.bf16.xpose.msra.mxu0 0
      %857 = vmatprep.subr.bf16.mxu0 0
      %858 = vmatpush1.bf16.xpose.msra.mxu0 0
      %859 = vmatprep.subr.bf16.mxu0 0
      %860 = vmatpush1.bf16.xpose.msra.mxu0 0
      %861 = vmatprep.subr.bf16.mxu0 0
      %862 = vmatpush1.bf16.xpose.msra.mxu0 0
      %863 = vmatprep.subr.bf16.mxu0 0
      %864 = vmatpush1.bf16.xpose.msra.mxu0 0
      %865 = vmatprep.subr.bf16.mxu0 0
      %866 = vmatpush1.bf16.xpose.msra.mxu0 0
      %867 = vmatprep.subr.bf16.mxu0 0
      %868 = vmatpush1.bf16.xpose.msra.mxu0 0
      %869 = vmatprep.subr.bf16.mxu0 0
      %870 = vmatpush1.bf16.xpose.msra.mxu0 0
      %871 = vmatprep.mubr.bf16.mxu0 0
      %872 = vmatmul.mubr.bf16.gmra.mrb[0].mxu0 %v834
      %v873 = vpop.f32.mrb[0].mxu0
      %v874 = vadd.f32 0.0, %v873
      %v875 = vpop.f32.mrb[0].mxu0
      %v876 = vpop.f32.mrb[0].mxu0
      %v877 = vpop.f32.mrb[0].mxu0
      %878 = vdwg.mxu0
      %v879 = vmul.f32 %v874, 0.35355338
      %v880 = vadd.f32 %v879, %v714
      %v881 = vsel %vm716, %v880, -inf
      %882 = vmax.xlane.f32.xlu0 %v881
      %v883 = vpop.xlane.xlu0 %882
      %v884 = vsub.f32 %v880, %v883
      %v885 = vmul.f32 %v884, 1.442695
      %v886 = vpow.pop %v885
      %v887 = vsel %vm716, %v886, 0.0
      %888 = vadd.xlane.f32.xlu0 %v887
      %v889 = vpop.xlane.xlu0 %888
      %v890 = vrcp.pop %v889
      %v891 = vpack.c.bf16 %v886, %v886
      %893 = vrot.lane.b32.xlu0 %v708, 120
      %v894 = vpop.permute.xlu0 %893
      %v896 = vsel %vm716, %v891, 0
      %v899 = vsel %vm779, %v894, 0
      %901 = vmatprep.subr.bf16.mxu0 0
      %902 = vmatpush1.bf16.msra.mxu0 %v899
      %903 = vmatprep.subr.bf16.mxu0 0
      %904 = vmatpush1.bf16.msra.mxu0 0
      %905 = vmatprep.subr.bf16.mxu0 0
      %906 = vmatpush1.bf16.msra.mxu0 0
      %907 = vmatprep.subr.bf16.mxu0 0
      %908 = vmatpush1.bf16.msra.mxu0 0
      %909 = vmatprep.subr.bf16.mxu0 0
      %910 = vmatpush1.bf16.msra.mxu0 0
      %911 = vmatprep.subr.bf16.mxu0 0
      %912 = vmatpush1.bf16.msra.mxu0 0
      %913 = vmatprep.subr.bf16.mxu0 0
      %914 = vmatpush1.bf16.msra.mxu0 0
      %915 = vmatprep.subr.bf16.mxu0 0
      %916 = vmatpush1.bf16.msra.mxu0 0
      %917 = vmatprep.subr.bf16.mxu0 0
      %918 = vmatpush1.bf16.msra.mxu0 0
      %919 = vmatprep.subr.bf16.mxu0 0
      %920 = vmatpush1.bf16.msra.mxu0 0
      %921 = vmatprep.subr.bf16.mxu0 0
      %922 = vmatpush1.bf16.msra.mxu0 0
      %923 = vmatprep.subr.bf16.mxu0 0
      %924 = vmatpush1.bf16.msra.mxu0 0
      %925 = vmatprep.subr.bf16.mxu0 0
      %926 = vmatpush1.bf16.msra.mxu0 0
      %927 = vmatprep.subr.bf16.mxu0 0
      %928 = vmatpush1.bf16.msra.mxu0 0
      %929 = vmatprep.subr.bf16.mxu0 0
      %930 = vmatpush1.bf16.msra.mxu0 0
      %931 = vmatprep.subr.bf16.mxu0 0
      %932 = vmatpush1.bf16.msra.mxu0 0
      %933 = vmatprep.mubr.bf16.mxu0 0
      %934 = vmatmul.mubr.bf16.gmra.mrb[0].mxu0 %v896
      %v935 = vpop.f32.mrb[0].mxu0
      %v936 = vadd.f32 0.0, %v935
      %v937 = vpop.f32.mrb[0].mxu0
      %v938 = vpop.f32.mrb[0].mxu0
      %v939 = vpop.f32.mrb[0].mxu0
      %940 = vdwg.mxu0
      %v941 = vmul.f32 %v936, %v890
      %v942 = vpack.c.bf16 %v941, %v941
      %v944 = vunpack.c.l.b16 %v942
      %v945 = vpack.c.b16 %v944, %v944
      %946 = vrot.lane.b32.xlu0 %v945, 8
      %v947 = vpop.permute.xlu0 %946
      %vm949 = vcmask 126016
      %950 = vst.msk [vmem:[#allocation2] sm:$0xf] %vm949, %v947
      %951 = vrot.lane.b32.xlu0 %v596, 112
      %v952 = vpop.permute.xlu0 %951
      %953 = vrot.lane.b32.xlu0 %v654, 112
      %v954 = vpop.permute.xlu0 %953
      %v956 = vsel %vm716, %v952, 0
      %v959 = vsel %vm716, %v954, 0
      %961 = vmatprep.subr.bf16.mxu0 0
      %962 = vmatpush1.bf16.xpose.msra.mxu0 %v959
      %963 = vmatprep.subr.bf16.mxu0 0
      %964 = vmatpush1.bf16.xpose.msra.mxu0 0
      %965 = vmatprep.subr.bf16.mxu0 0
      %966 = vmatpush1.bf16.xpose.msra.mxu0 0
      %967 = vmatprep.subr.bf16.mxu0 0
      %968 = vmatpush1.bf16.xpose.msra.mxu0 0
      %969 = vmatprep.subr.bf16.mxu0 0
      %970 = vmatpush1.bf16.xpose.msra.mxu0 0
      %971 = vmatprep.subr.bf16.mxu0 0
      %972 = vmatpush1.bf16.xpose.msra.mxu0 0
      %973 = vmatprep.subr.bf16.mxu0 0
      %974 = vmatpush1.bf16.xpose.msra.mxu0 0
      %975 = vmatprep.subr.bf16.mxu0 0
      %976 = vmatpush1.bf16.xpose.msra.mxu0 0
      %977 = vmatprep.subr.bf16.mxu0 0
      %978 = vmatpush1.bf16.xpose.msra.mxu0 0
      %979 = vmatprep.subr.bf16.mxu0 0
      %980 = vmatpush1.bf16.xpose.msra.mxu0 0
      %981 = vmatprep.subr.bf16.mxu0 0
      %982 = vmatpush1.bf16.xpose.msra.mxu0 0
      %983 = vmatprep.subr.bf16.mxu0 0
      %984 = vmatpush1.bf16.xpose.msra.mxu0 0
      %985 = vmatprep.subr.bf16.mxu0 0
      %986 = vmatpush1.bf16.xpose.msra.mxu0 0
      %987 = vmatprep.subr.bf16.mxu0 0
      %988 = vmatpush1.bf16.xpose.msra.mxu0 0
      %989 = vmatprep.subr.bf16.mxu0 0
      %990 = vmatpush1.bf16.xpose.msra.mxu0 0
      %991 = vmatprep.subr.bf16.mxu0 0
      %992 = vmatpush1.bf16.xpose.msra.mxu0 0
      %993 = vmatprep.mubr.bf16.mxu0 0
      %994 = vmatmul.mubr.bf16.gmra.mrb[0].mxu0 %v956
      %v995 = vpop.f32.mrb[0].mxu0
      %v996 = vadd.f32 0.0, %v995
      %v997 = vpop.f32.mrb[0].mxu0
      %v998 = vpop.f32.mrb[0].mxu0
      %v999 = vpop.f32.mrb[0].mxu0
      %1000 = vdwg.mxu0
      %v1001 = vmul.f32 %v996, 0.35355338
      %v1002 = vadd.f32 %v1001, %v714
      %v1003 = vsel %vm716, %v1002, -inf
      %1004 = vmax.xlane.f32.xlu0 %v1003
      %v1005 = vpop.xlane.xlu0 %1004
      %v1006 = vsub.f32 %v1002, %v1005
      %v1007 = vmul.f32 %v1006, 1.442695
      %v1008 = vpow.pop %v1007
      %v1009 = vsel %vm716, %v1008, 0.0
      %1010 = vadd.xlane.f32.xlu0 %v1009
      %v1011 = vpop.xlane.xlu0 %1010
      %v1012 = vrcp.pop %v1011
      %v1013 = vpack.c.bf16 %v1008, %v1008
      %1014 = vrot.lane.b32.xlu0 %v708, 112
      %v1015 = vpop.permute.xlu0 %1014
      %v1017 = vsel %vm716, %v1013, 0
      %v1020 = vsel %vm779, %v1015, 0
      %1022 = vmatprep.subr.bf16.mxu0 0
      %1023 = vmatpush1.bf16.msra.mxu0 %v1020
      %1024 = vmatprep.subr.bf16.mxu0 0
      %1025 = vmatpush1.bf16.msra.mxu0 0
      %1026 = vmatprep.subr.bf16.mxu0 0
      %1027 = vmatpush1.bf16.msra.mxu0 0
      %1028 = vmatprep.subr.bf16.mxu0 0
      %1029 = vmatpush1.bf16.msra.mxu0 0
      %1030 = vmatprep.subr.bf16.mxu0 0
      %1031 = vmatpush1.bf16.msra.mxu0 0
      %1032 = vmatprep.subr.bf16.mxu0 0
      %1033 = vmatpush1.bf16.msra.mxu0 0
      %1034 = vmatprep.subr.bf16.mxu0 0
      %1035 = vmatpush1.bf16.msra.mxu0 0
      %1036 = vmatprep.subr.bf16.mxu0 0
      %1037 = vmatpush1.bf16.msra.mxu0 0
      %1038 = vmatprep.subr.bf16.mxu0 0
      %1039 = vmatpush1.bf16.msra.mxu0 0
      %1040 = vmatprep.subr.bf16.mxu0 0
      %1041 = vmatpush1.bf16.msra.mxu0 0
      %1042 = vmatprep.subr.bf16.mxu0 0
      %1043 = vmatpush1.bf16.msra.mxu0 0
      %1044 = vmatprep.subr.bf16.mxu0 0
      %1045 = vmatpush1.bf16.msra.mxu0 0
      %1046 = vmatprep.subr.bf16.mxu0 0
      %1047 = vmatpush1.bf16.msra.mxu0 0
      %1048 = vmatprep.subr.bf16.mxu0 0
      %1049 = vmatpush1.bf16.msra.mxu0 0
      %1050 = vmatprep.subr.bf16.mxu0 0
      %1051 = vmatpush1.bf16.msra.mxu0 0
      %1052 = vmatprep.subr.bf16.mxu0 0
      %1053 = vmatpush1.bf16.msra.mxu0 0
      %1054 = vmatprep.mubr.bf16.mxu0 0
      %1055 = vmatmul.mubr.bf16.gmra.mrb[0].mxu0 %v1017
      %v1056 = vpop.f32.mrb[0].mxu0
      %v1057 = vadd.f32 0.0, %v1056
      %v1058 = vpop.f32.mrb[0].mxu0
      %v1059 = vpop.f32.mrb[0].mxu0
      %v1060 = vpop.f32.mrb[0].mxu0
      %1061 = vdwg.mxu0
      %v1062 = vmul.f32 %v1057, %v1012
      %v1063 = vpack.c.bf16 %v1062, %v1062
      %v1065 = vunpack.c.l.b16 %v1063
      %v1066 = vpack.c.b16 %v1065, %v1065
      %1067 = vrot.lane.b32.xlu0 %v1066, 16
      %v1068 = vpop.permute.xlu0 %1067
      %vm1070 = vcmask 191616
      %1071 = vst.msk [vmem:[#allocation2] sm:$0xf] %vm1070, %v1068
      %1072 = vrot.lane.b32.xlu0 %v596, 104
      %v1073 = vpop.permute.xlu0 %1072
      %1074 = vrot.lane.b32.xlu0 %v654, 104
      %v1075 = vpop.permute.xlu0 %1074
      %v1077 = vsel %vm716, %v1073, 0
      %v1080 = vsel %vm716, %v1075, 0
      %1082 = vmatprep.subr.bf16.mxu0 0
      %1083 = vmatpush1.bf16.xpose.msra.mxu0 %v1080
      %1084 = vmatprep.subr.bf16.mxu0 0
      %1085 = vmatpush1.bf16.xpose.msra.mxu0 0
      %1086 = vmatprep.subr.bf16.mxu0 0
      %1087 = vmatpush1.bf16.xpose.msra.mxu0 0
      %1088 = vmatprep.subr.bf16.mxu0 0
      %1089 = vmatpush1.bf16.xpose.msra.mxu0 0
      %1090 = vmatprep.subr.bf16.mxu0 0
      %1091 = vmatpush1.bf16.xpose.msra.mxu0 0
      %1092 = vmatprep.subr.bf16.mxu0 0
      %1093 = vmatpush1.bf16.xpose.msra.mxu0 0
      %1094 = vmatprep.subr.bf16.mxu0 0
      %1095 = vmatpush1.bf16.xpose.msra.mxu0 0
      %1096 = vmatprep.subr.bf16.mxu0 0
      %1097 = vmatpush1.bf16.xpose.msra.mxu0 0
      %1098 = vmatprep.subr.bf16.mxu0 0
      %1099 = vmatpush1.bf16.xpose.msra.mxu0 0
      %1100 = vmatprep.subr.bf16.mxu0 0
      %1101 = vmatpush1.bf16.xpose.msra.mxu0 0
      %1102 = vmatprep.subr.bf16.mxu0 0
      %1103 = vmatpush1.bf16.xpose.msra.mxu0 0
      %1104 = vmatprep.subr.bf16.mxu0 0
      %1105 = vmatpush1.bf16.xpose.msra.mxu0 0
      %1106 = vmatprep.subr.bf16.mxu0 0
      %1107 = vmatpush1.bf16.xpose.msra.mxu0 0
      %1108 = vmatprep.subr.bf16.mxu0 0
      %1109 = vmatpush1.bf16.xpose.msra.mxu0 0
      %1110 = vmatprep.subr.bf16.mxu0 0
      %1111 = vmatpush1.bf16.xpose.msra.mxu0 0
      %1112 = vmatprep.subr.bf16.mxu0 0
      %1113 = vmatpush1.bf16.xpose.msra.mxu0 0
      %1114 = vmatprep.mubr.bf16.mxu0 0
      %1115 = vmatmul.mubr.bf16.gmra.mrb[0].mxu0 %v1077
      %v1116 = vpop.f32.mrb[0].mxu0
      %v1117 = vadd.f32 0.0, %v1116
      %v1118 = vpop.f32.mrb[0].mxu0
      %v1119 = vpop.f32.mrb[0].mxu0
      %v1120 = vpop.f32.mrb[0].mxu0
      %1121 = vdwg.mxu0
      %v1122 = vmul.f32 %v1117, 0.35355338
      %v1123 = vadd.f32 %v1122, %v714
      %v1124 = vsel %vm716, %v1123, -inf
      %1125 = vmax.xlane.f32.xlu0 %v1124
      %v1126 = vpop.xlane.xlu0 %1125
      %v1127 = vsub.f32 %v1123, %v1126
      %v1128 = vmul.f32 %v1127, 1.442695
      %v1129 = vpow.pop %v1128
      %v1130 = vsel %vm716, %v1129, 0.0
      %1131 = vadd.xlane.f32.xlu0 %v1130
      %v1132 = vpop.xlane.xlu0 %1131
      %v1133 = vrcp.pop %v1132
      %v1134 = vpack.c.bf16 %v1129, %v1129
      %1135 = vrot.lane.b32.xlu0 %v708, 104
      %v1136 = vpop.permute.xlu0 %1135
      %v1138 = vsel %vm716, %v1134, 0
      %v1141 = vsel %vm779, %v1136, 0
      %1143 = vmatprep.subr.bf16.mxu0 0
      %1144 = vmatpush1.bf16.msra.mxu0 %v1141
      %1145 = vmatprep.subr.bf16.mxu0 0
      %1146 = vmatpush1.bf16.msra.mxu0 0
      %1147 = vmatprep.subr.bf16.mxu0 0
      %1148 = vmatpush1.bf16.msra.mxu0 0
      %1149 = vmatprep.subr.bf16.mxu0 0
      %1150 = vmatpush1.bf16.msra.mxu0 0
      %1151 = vmatprep.subr.bf16.mxu0 0
      %1152 = vmatpush1.bf16.msra.mxu0 0
      %1153 = vmatprep.subr.bf16.mxu0 0
      %1154 = vmatpush1.bf16.msra.mxu0 0
      %1155 = vmatprep.subr.bf16.mxu0 0
      %1156 = vmatpush1.bf16.msra.mxu0 0
      %1157 = vmatprep.subr.bf16.mxu0 0
      %1158 = vmatpush1.bf16.msra.mxu0 0
      %1159 = vmatprep.subr.bf16.mxu0 0
      %1160 = vmatpush1.bf16.msra.mxu0 0
      %1161 = vmatprep.subr.bf16.mxu0 0
      %1162 = vmatpush1.bf16.msra.mxu0 0
      %1163 = vmatprep.subr.bf16.mxu0 0
      %1164 = vmatpush1.bf16.msra.mxu0 0
      %1165 = vmatprep.subr.bf16.mxu0 0
      %1166 = vmatpush1.bf16.msra.mxu0 0
      %1167 = vmatprep.subr.bf16.mxu0 0
      %1168 = vmatpush1.bf16.msra.mxu0 0
      %1169 = vmatprep.subr.bf16.mxu0 0
      %1170 = vmatpush1.bf16.msra.mxu0 0
      %1171 = vmatprep.subr.bf16.mxu0 0
      %1172 = vmatpush1.bf16.msra.mxu0 0
      %1173 = vmatprep.subr.bf16.mxu0 0
      %1174 = vmatpush1.bf16.msra.mxu0 0
      %1175 = vmatprep.mubr.bf16.mxu0 0
      %1176 = vmatmul.mubr.bf16.gmra.mrb[0].mxu0 %v1138
      %v1177 = vpop.f32.mrb[0].mxu0
      %v1178 = vadd.f32 0.0, %v1177
      %v1179 = vpop.f32.mrb[0].mxu0
      %v1180 = vpop.f32.mrb[0].mxu0
      %v1181 = vpop.f32.mrb[0].mxu0
      %1182 = vdwg.mxu0
      %v1183 = vmul.f32 %v1178, %v1133
      %v1184 = vpack.c.bf16 %v1183, %v1183
      %v1186 = vunpack.c.l.b16 %v1184
      %v1187 = vpack.c.b16 %v1186, %v1186
      %1188 = vrot.lane.b32.xlu0 %v1187, 24
      %v1189 = vpop.permute.xlu0 %1188
      %vm1191 = vcmask 257216
      %1192 = vst.msk [vmem:[#allocation2] sm:$0xf] %vm1191, %v1189
      %v1193 = vld [vmem:[#allocation2] sm:$0xf]
      %v1194 = vld [vmem:[%s11] sm:$0xff]
      %v1195 = vld [vmem:[%s11 + $0x8] sm:$0xff]
      %v1196 = vld [vmem:[%s11 + $0x10] sm:$0xff]
      %v1197 = vld [vmem:[%s11 + $0x18] sm:$0xff]
      %v1198 = vpack.c.bf16 %v1195, %v1194
      %v1199 = vpack.c.bf16 %v1197, %v1196
      %v1201 = vsel %vm502, %v1193, 0
      %1203 = vmatprep.subr.bf16.mxu0 0
      %1204 = vmatpush1.bf16.msra.mxu0 %v1198
      %1205 = vmatprep.subr.bf16.mxu0 0
      %1206 = vmatpush1.bf16.msra.mxu0 %v1199
      %1207 = vmatprep.subr.bf16.mxu0 0
      %1208 = vmatpush1.bf16.msra.mxu0 0
      %1209 = vmatprep.subr.bf16.mxu0 0
      %1210 = vmatpush1.bf16.msra.mxu0 0
      %1211 = vmatprep.subr.bf16.mxu0 0
      %1212 = vmatpush1.bf16.msra.mxu0 0
      %1213 = vmatprep.subr.bf16.mxu0 0
      %1214 = vmatpush1.bf16.msra.mxu0 0
      %1215 = vmatprep.subr.bf16.mxu0 0
      %1216 = vmatpush1.bf16.msra.mxu0 0
      %1217 = vmatprep.subr.bf16.mxu0 0
      %1218 = vmatpush1.bf16.msra.mxu0 0
      %1219 = vmatprep.subr.bf16.mxu0 0
      %1220 = vmatpush1.bf16.msra.mxu0 0
      %1221 = vmatprep.subr.bf16.mxu0 0
      %1222 = vmatpush1.bf16.msra.mxu0 0
      %1223 = vmatprep.subr.bf16.mxu0 0
      %1224 = vmatpush1.bf16.msra.mxu0 0
      %1225 = vmatprep.subr.bf16.mxu0 0
      %1226 = vmatpush1.bf16.msra.mxu0 0
      %1227 = vmatprep.subr.bf16.mxu0 0
      %1228 = vmatpush1.bf16.msra.mxu0 0
      %1229 = vmatprep.subr.bf16.mxu0 0
      %1230 = vmatpush1.bf16.msra.mxu0 0
      %1231 = vmatprep.subr.bf16.mxu0 0
      %1232 = vmatpush1.bf16.msra.mxu0 0
      %1233 = vmatprep.subr.bf16.mxu0 0
      %1234 = vmatpush1.bf16.msra.mxu0 0
      %1235 = vmatprep.mubr.bf16.mxu0 0
      %1236 = vmatmul.mubr.bf16.gmra.mrb[0].mxu0 %v1201
      %v1237 = vpop.f32.mrb[0].mxu0
      %v1238 = vadd.f32 0.0, %v1237
      %v1239 = vpop.f32.mrb[0].mxu0
      %v1240 = vpop.f32.mrb[0].mxu0
      %v1241 = vpop.f32.mrb[0].mxu0
      %1242 = vdwg.mxu0
      %v1243 = vadd.f32 %v499, %v1238
      %v1244 = vld [vmem:[%s12] sm:$0x1]
      %v1246 = vlaneseq
      %v1247 = vshrl.u32 %v1246, 7
      %v1248 = vsub.s32 0, %v1247
      %v1249 = vrot.slane %v1244, %v1248
      %v1251 = vadd.f32 %v1243, %v1249
      %1252 = vst.msk [vmem:[%s497] sm:$0xff] %vm502, %v1251
      %p1253 = scmp.lt.s32.totalorder %s28, 1
      %s1254 = scalar_select %p1253, %s28, 1
      %p1255 = scmp.lt.s32.totalorder %s29, 0
      %s1256 = scalar_select %p1255, %s29, 0
      %s1257 = sadd.s32 %s1256, %s1254
      %s1258 = smul.addr %s1257, 8
      %s1259 = scalar_lea.vmem %s13, %s1258
      // Predicated region
      $region73: #{decoder_forward.8} parent=71 // pred_check
        %p1260 = pneg %p346
      $region74: #{decoder_forward.8} parent=71 // pred_check_branch
        %1262 = sbr.rel (%p1260) target = $region76
      $region75: #{decoder_forward.8} parent=71 // pred_region
        _
      $region76: #{decoder_forward.8} parent=71 // pred_fallthru
        _
    $region72: #{decoder_forward.8} parent=5 // pred_fallthru
      _
    %p1263 = scmp.le.s32.totalorder 2, %s19
    // Predicated region
    $region77: #{decoder_forward.8} parent=5 // pred_check
      %p1264 = pneg %p1263
    $region78: #{decoder_forward.8} parent=5 // pred_check_branch
      %1266 = sbr.rel (%p1264) target = $region80
    $region79: #{decoder_forward.8} parent=5 // pred_region
      %s1267 = ssub.s32 %s19, 2
      // Predicated region
      $region81: #{decoder_forward.8} parent=79 // pred_check
        %p1268 = pneg %p352
      $region82: #{decoder_forward.8} parent=79 // pred_check_branch
        %1270 = sbr.rel (%p1268) target = $region84
      $region83: #{decoder_forward.8} parent=79 // pred_region
        %p1271 = scmp.lt.s32.totalorder %s30, 1
        %s1272 = scalar_select %p1271, %s30, 1
        %p1273 = scmp.lt.s32.totalorder %s31, 0
        %s1274 = scalar_select %p1273, %s31, 0
        %s1275 = sadd.s32 %s1274, %s1272
        %s1276 = smul.addr %s1275, 8
        %s1277 = scalar_lea.vmem %s13, %s1276
      $region84: #{decoder_forward.8} parent=79 // pred_fallthru
        _
    $region80: #{decoder_forward.8} parent=5 // pred_fallthru
      _
  $region6: #{decoder_forward.8} parent=0 // loop_footer
    %s23 = sadd.s32 1, %s19
  $region7: #{decoder_forward.8} parent=0 // loop_footer_branch
    %18 = sbr.rel target = $region3
  $region8: #{decoder_forward.8} parent=0 // loop_exit
    _

// kernel: decoder_forward.10
$region0: #{decoder_forward.10}
  #allocation0 [shape = 'u32[]', space=smem, size = 0x4, offset = 0x4, fixed_abs, tag = 'smem constant byte address 0x4 - core index']
  #allocation1 [shape = 'u32[144,128]{1,0:T(1,128)}', space=vmem, size = 0x12000, scoped, tag = 'internal scratch']
  #allocation2 [shape = 'bf16[8,32]{1,0:T(8,128)(2,1)}', space=vmem, size = 0x800, scoped, tag = 'scratch operand']
  %s0 = inlined_call_operand.vmem [shape: f32[2,8,32], index: 0, kind: input, shape index: {}]
  %s1 = inlined_call_operand.vmem [shape: f32[1,8,8], index: 1, kind: input, shape index: {}]
  %s2 = inlined_call_operand.vmem [shape: f32[1,32], index: 2, kind: input, shape index: {}]
  %s3 = inlined_call_operand.vmem [shape: f32[1,32], index: 3, kind: input, shape index: {}]
  %s4 = inlined_call_operand.vmem [shape: f32[32,32], index: 4, kind: input, shape index: {}]
  %s5 = inlined_call_operand.vmem [shape: f32[1,32], index: 5, kind: input, shape index: {}]
  %s6 = inlined_call_operand.vmem [shape: f32[32,32], index: 6, kind: input, shape index: {}]
  %s7 = inlined_call_operand.vmem [shape: f32[1,32], index: 7, kind: input, shape index: {}]
  %s8 = inlined_call_operand.vmem [shape: f32[32,32], index: 8, kind: input, shape index: {}]
  %s9 = inlined_call_operand.vmem [shape: f32[1,32], index: 9, kind: input, shape index: {}]
  %s10 = inlined_call_operand.vmem [shape: f32[32,32], index: 10, kind: input, shape index: {}]
  %s11 = inlined_call_operand.vmem [shape: f32[1,32], index: 11, kind: input, shape index: {}]
  %s12 = inlined_call_operand.vmem [shape: f32[2,8,32], index: 12, kind: output, shape index: {}]
  %s13 = sld [smem:[#allocation0]]
  $region81: #{decoder_forward.10} parent=0
    _
  %s15 = ssub.s32 1, %s13
  %s16 = scalar_select 0, %s15, %s13
  loop: start=0, step=1, limit=4
  $region2: #{decoder_forward.10} parent=0 // loop_pre_header
    _
  $region3: #{decoder_forward.10} parent=0 // loop_header
    %s18 = sphi 0, %s22
    %p19 = scmp.ge.s32.totalorder %s18, 4
    %s28 = sphi 0, %s30
    %s31 = sphi 0, %s28
    %s32 = sphi 0, %s31
    %s48 = sphi 0, %s32
    %s52 = sphi 0, %s52
    %s54 = sphi 0, %s52
    %s55 = sphi 0, %s54
    %s69 = sphi 0, %s55
    %s73 = sphi 0, %s73
    %s75 = sphi 0, %s73
    %s76 = sphi 0, %s75
    %s90 = sphi 0, %s76
    %s94 = sphi 0, %s94
    %s96 = sphi 0, %s94
    %s97 = sphi 0, %s96
    %s111 = sphi 0, %s97
    %s115 = sphi 0, %s115
    %s117 = sphi 0, %s115
    %s118 = sphi 0, %s117
    %s132 = sphi 0, %s118
    %s136 = sphi 0, %s136
    %s138 = sphi 0, %s136
    %s139 = sphi 0, %s138
    %s153 = sphi 0, %s139
    %s157 = sphi 0, %s157
    %s159 = sphi 0, %s157
    %s160 = sphi 0, %s159
    %s174 = sphi 0, %s160
    %s178 = sphi 0, %s178
    %s180 = sphi 0, %s178
    %s181 = sphi 0, %s180
    %s195 = sphi 0, %s181
    %s199 = sphi 0, %s199
    %s201 = sphi 0, %s199
    %s202 = sphi 0, %s201
    %s216 = sphi 0, %s202
    %s220 = sphi 0, %s220
    %s222 = sphi 0, %s220
    %s223 = sphi 0, %s222
    %s237 = sphi 0, %s223
    %s241 = sphi 0, %s241
    %s243 = sphi 0, %s241
    %s244 = sphi 0, %s243
    %s258 = sphi 0, %s244
    %s262 = sphi 0, %s262
    %s264 = sphi 0, %s262
    %s265 = sphi 0, %s264
    %s279 = sphi 0, %s265
    %s285 = sphi 0, %s287
    %s288 = sphi 0, %s285
    %s289 = sphi 0, %s288
    %s305 = sphi 0, %s289
  $region4: #{decoder_forward.10} parent=0 // loop_header_branch
    %21 = sbr.rel (%p19) target = $region8
  $region5: #{decoder_forward.10} parent=0 // loop_body
    %s23 = ssub.s32 %s18, 1
    %s24 = ssub.s32 %s18, 2
    %s25 = sadd.s32 %s18, 1
    %s26 = ssub.s32 %s18, %s25
    %p27 = scmp.eq.s32.totalorder %s26, 0
    %s29 = sadd.s32 %s28, 1
    %s30 = scalar_select %p27, %s28, %s29
    %p33 = pneg %p27
    %p34 = scmp.eq.s32.totalorder %s18, 1
    %p35 = por %p33, %p34
    %p36 = scmp.ne.s32.totalorder %s28, %s31
    %p37 = scmp.eq.s32.totalorder %s18, 0
    %p38 = por %p36, %p37
    %p39 = scmp.ne.s32.totalorder %s28, %s31
    %p40 = scmp.eq.s32.totalorder %s23, 1
    %p41 = por %p39, %p40
    %p42 = scmp.ne.s32.totalorder %s31, %s32
    %p43 = scmp.eq.s32.totalorder %s23, 0
    %p44 = por %p42, %p43
    %p45 = scmp.ne.s32.totalorder %s31, %s32
    %p46 = scmp.eq.s32.totalorder %s24, 1
    %p47 = por %p45, %p46
    %p49 = scmp.ne.s32.totalorder %s32, %s48
    %p50 = scmp.eq.s32.totalorder %s24, 0
    %p51 = por %p49, %p50
    %s53 = sadd.s32 %s52, 1
    %p56 = scmp.eq.s32.totalorder %s18, 1
    %p57 = scmp.ne.s32.totalorder %s52, %s54
    %p58 = scmp.eq.s32.totalorder %s18, 0
    %p59 = por %p57, %p58
    %p60 = scmp.ne.s32.totalorder %s52, %s54
    %p61 = scmp.eq.s32.totalorder %s23, 1
    %p62 = por %p60, %p61
    %p63 = scmp.ne.s32.totalorder %s54, %s55
    %p64 = scmp.eq.s32.totalorder %s23, 0
    %p65 = por %p63, %p64
    %p66 = scmp.ne.s32.totalorder %s54, %s55
    %p67 = scmp.eq.s32.totalorder %s24, 1
    %p68 = por %p66, %p67
    %p70 = scmp.ne.s32.totalorder %s55, %s69
    %p71 = scmp.eq.s32.totalorder %s24, 0
    %p72 = por %p70, %p71
    %s74 = sadd.s32 %s73, 1
    %p77 = scmp.eq.s32.totalorder %s18, 1
    %p78 = scmp.ne.s32.totalorder %s73, %s75
    %p79 = scmp.eq.s32.totalorder %s18, 0
    %p80 = por %p78, %p79
    %p81 = scmp.ne.s32.totalorder %s73, %s75
    %p82 = scmp.eq.s32.totalorder %s23, 1
    %p83 = por %p81, %p82
    %p84 = scmp.ne.s32.totalorder %s75, %s76
    %p85 = scmp.eq.s32.totalorder %s23, 0
    %p86 = por %p84, %p85
    %p87 = scmp.ne.s32.totalorder %s75, %s76
    %p88 = scmp.eq.s32.totalorder %s24, 1
    %p89 = por %p87, %p88
    %p91 = scmp.ne.s32.totalorder %s76, %s90
    %p92 = scmp.eq.s32.totalorder %s24, 0
    %p93 = por %p91, %p92
    %s95 = sadd.s32 %s94, 1
    %p98 = scmp.eq.s32.totalorder %s18, 1
    %p99 = scmp.ne.s32.totalorder %s94, %s96
    %p100 = scmp.eq.s32.totalorder %s18, 0
    %p101 = por %p99, %p100
    %p102 = scmp.ne.s32.totalorder %s94, %s96
    %p103 = scmp.eq.s32.totalorder %s23, 1
    %p104 = por %p102, %p103
    %p105 = scmp.ne.s32.totalorder %s96, %s97
    %p106 = scmp.eq.s32.totalorder %s23, 0
    %p107 = por %p105, %p106
    %p108 = scmp.ne.s32.totalorder %s96, %s97
    %p109 = scmp.eq.s32.totalorder %s24, 1
    %p110 = por %p108, %p109
    %p112 = scmp.ne.s32.totalorder %s97, %s111
    %p113 = scmp.eq.s32.totalorder %s24, 0
    %p114 = por %p112, %p113
    %s116 = sadd.s32 %s115, 1
    %p119 = scmp.eq.s32.totalorder %s18, 1
    %p120 = scmp.ne.s32.totalorder %s115, %s117
    %p121 = scmp.eq.s32.totalorder %s18, 0
    %p122 = por %p120, %p121
    %p123 = scmp.ne.s32.totalorder %s115, %s117
    %p124 = scmp.eq.s32.totalorder %s23, 1
    %p125 = por %p123, %p124
    %p126 = scmp.ne.s32.totalorder %s117, %s118
    %p127 = scmp.eq.s32.totalorder %s23, 0
    %p128 = por %p126, %p127
    %p129 = scmp.ne.s32.totalorder %s117, %s118
    %p130 = scmp.eq.s32.totalorder %s24, 1
    %p131 = por %p129, %p130
    %p133 = scmp.ne.s32.totalorder %s118, %s132
    %p134 = scmp.eq.s32.totalorder %s24, 0
    %p135 = por %p133, %p134
    %s137 = sadd.s32 %s136, 1
    %p140 = scmp.eq.s32.totalorder %s18, 1
    %p141 = scmp.ne.s32.totalorder %s136, %s138
    %p142 = scmp.eq.s32.totalorder %s18, 0
    %p143 = por %p141, %p142
    %p144 = scmp.ne.s32.totalorder %s136, %s138
    %p145 = scmp.eq.s32.totalorder %s23, 1
    %p146 = por %p144, %p145
    %p147 = scmp.ne.s32.totalorder %s138, %s139
    %p148 = scmp.eq.s32.totalorder %s23, 0
    %p149 = por %p147, %p148
    %p150 = scmp.ne.s32.totalorder %s138, %s139
    %p151 = scmp.eq.s32.totalorder %s24, 1
    %p152 = por %p150, %p151
    %p154 = scmp.ne.s32.totalorder %s139, %s153
    %p155 = scmp.eq.s32.totalorder %s24, 0
    %p156 = por %p154, %p155
    %s158 = sadd.s32 %s157, 1
    %p161 = scmp.eq.s32.totalorder %s18, 1
    %p162 = scmp.ne.s32.totalorder %s157, %s159
    %p163 = scmp.eq.s32.totalorder %s18, 0
    %p164 = por %p162, %p163
    %p165 = scmp.ne.s32.totalorder %s157, %s159
    %p166 = scmp.eq.s32.totalorder %s23, 1
    %p167 = por %p165, %p166
    %p168 = scmp.ne.s32.totalorder %s159, %s160
    %p169 = scmp.eq.s32.totalorder %s23, 0
    %p170 = por %p168, %p169
    %p171 = scmp.ne.s32.totalorder %s159, %s160
    %p172 = scmp.eq.s32.totalorder %s24, 1
    %p173 = por %p171, %p172
    %p175 = scmp.ne.s32.totalorder %s160, %s174
    %p176 = scmp.eq.s32.totalorder %s24, 0
    %p177 = por %p175, %p176
    %s179 = sadd.s32 %s178, 1
    %p182 = scmp.eq.s32.totalorder %s18, 1
    %p183 = scmp.ne.s32.totalorder %s178, %s180
    %p184 = scmp.eq.s32.totalorder %s18, 0
    %p185 = por %p183, %p184
    %p186 = scmp.ne.s32.totalorder %s178, %s180
    %p187 = scmp.eq.s32.totalorder %s23, 1
    %p188 = por %p186, %p187
    %p189 = scmp.ne.s32.totalorder %s180, %s181
    %p190 = scmp.eq.s32.totalorder %s23, 0
    %p191 = por %p189, %p190
    %p192 = scmp.ne.s32.totalorder %s180, %s181
    %p193 = scmp.eq.s32.totalorder %s24, 1
    %p194 = por %p192, %p193
    %p196 = scmp.ne.s32.totalorder %s181, %s195
    %p197 = scmp.eq.s32.totalorder %s24, 0
    %p198 = por %p196, %p197
    %s200 = sadd.s32 %s199, 1
    %p203 = scmp.eq.s32.totalorder %s18, 1
    %p204 = scmp.ne.s32.totalorder %s199, %s201
    %p205 = scmp.eq.s32.totalorder %s18, 0
    %p206 = por %p204, %p205
    %p207 = scmp.ne.s32.totalorder %s199, %s201
    %p208 = scmp.eq.s32.totalorder %s23, 1
    %p209 = por %p207, %p208
    %p210 = scmp.ne.s32.totalorder %s201, %s202
    %p211 = scmp.eq.s32.totalorder %s23, 0
    %p212 = por %p210, %p211
    %p213 = scmp.ne.s32.totalorder %s201, %s202
    %p214 = scmp.eq.s32.totalorder %s24, 1
    %p215 = por %p213, %p214
    %p217 = scmp.ne.s32.totalorder %s202, %s216
    %p218 = scmp.eq.s32.totalorder %s24, 0
    %p219 = por %p217, %p218
    %s221 = sadd.s32 %s220, 1
    %p224 = scmp.eq.s32.totalorder %s18, 1
    %p225 = scmp.ne.s32.totalorder %s220, %s222
    %p226 = scmp.eq.s32.totalorder %s18, 0
    %p227 = por %p225, %p226
    %p228 = scmp.ne.s32.totalorder %s220, %s222
    %p229 = scmp.eq.s32.totalorder %s23, 1
    %p230 = por %p228, %p229
    %p231 = scmp.ne.s32.totalorder %s222, %s223
    %p232 = scmp.eq.s32.totalorder %s23, 0
    %p233 = por %p231, %p232
    %p234 = scmp.ne.s32.totalorder %s222, %s223
    %p235 = scmp.eq.s32.totalorder %s24, 1
    %p236 = por %p234, %p235
    %p238 = scmp.ne.s32.totalorder %s223, %s237
    %p239 = scmp.eq.s32.totalorder %s24, 0
    %p240 = por %p238, %p239
    %s242 = sadd.s32 %s241, 1
    %p245 = scmp.eq.s32.totalorder %s18, 1
    %p246 = scmp.ne.s32.totalorder %s241, %s243
    %p247 = scmp.eq.s32.totalorder %s18, 0
    %p248 = por %p246, %p247
    %p249 = scmp.ne.s32.totalorder %s241, %s243
    %p250 = scmp.eq.s32.totalorder %s23, 1
    %p251 = por %p249, %p250
    %p252 = scmp.ne.s32.totalorder %s243, %s244
    %p253 = scmp.eq.s32.totalorder %s23, 0
    %p254 = por %p252, %p253
    %p255 = scmp.ne.s32.totalorder %s243, %s244
    %p256 = scmp.eq.s32.totalorder %s24, 1
    %p257 = por %p255, %p256
    %p259 = scmp.ne.s32.totalorder %s244, %s258
    %p260 = scmp.eq.s32.totalorder %s24, 0
    %p261 = por %p259, %p260
    %s263 = sadd.s32 %s262, 1
    %p266 = scmp.eq.s32.totalorder %s18, 1
    %p267 = scmp.ne.s32.totalorder %s262, %s264
    %p268 = scmp.eq.s32.totalorder %s18, 0
    %p269 = por %p267, %p268
    %p270 = scmp.ne.s32.totalorder %s262, %s264
    %p271 = scmp.eq.s32.totalorder %s23, 1
    %p272 = por %p270, %p271
    %p273 = scmp.ne.s32.totalorder %s264, %s265
    %p274 = scmp.eq.s32.totalorder %s23, 0
    %p275 = por %p273, %p274
    %p276 = scmp.ne.s32.totalorder %s264, %s265
    %p277 = scmp.eq.s32.totalorder %s24, 1
    %p278 = por %p276, %p277
    %p280 = scmp.ne.s32.totalorder %s265, %s279
    %p281 = scmp.eq.s32.totalorder %s24, 0
    %p282 = por %p280, %p281
    %s283 = ssub.s32 %s18, %s25
    %p284 = scmp.eq.s32.totalorder %s283, 0
    %s286 = sadd.s32 %s285, 1
    %s287 = scalar_select %p284, %s285, %s286
    %p290 = pneg %p284
    %p291 = scmp.eq.s32.totalorder %s18, 1
    %p292 = por %p290, %p291
    %p293 = scmp.ne.s32.totalorder %s285, %s288
    %p294 = scmp.eq.s32.totalorder %s18, 0
    %p295 = por %p293, %p294
    %p296 = scmp.ne.s32.totalorder %s285, %s288
    %p297 = scmp.eq.s32.totalorder %s23, 1
    %p298 = por %p296, %p297
    %p299 = scmp.ne.s32.totalorder %s288, %s289
    %p300 = scmp.eq.s32.totalorder %s23, 0
    %p301 = por %p299, %p300
    %p302 = scmp.ne.s32.totalorder %s288, %s289
    %p303 = scmp.eq.s32.totalorder %s24, 1
    %p304 = por %p302, %p303
    %p306 = scmp.ne.s32.totalorder %s289, %s305
    %p307 = scmp.eq.s32.totalorder %s24, 0
    %p308 = por %p306, %p307
    %p309 = scmp.le.s32.totalorder 1, %s18
    %p310 = scmp.lt.s32.totalorder %s18, 3
    %p311 = pnand %p309, %p310
    %p312 = pneg %p311
    // Predicated region
    $region9: #{decoder_forward.10} parent=5 // pred_check
      _
    $region10: #{decoder_forward.10} parent=5 // pred_check_branch
      %314 = sbr.rel (%p311) target = $region12
    $region11: #{decoder_forward.10} parent=5 // pred_region
      %s315 = ssub.s32 %s18, 1
      // Predicated region
      $region13: #{decoder_forward.10} parent=11 // pred_check
        %p316 = pneg %p65
      $region14: #{decoder_forward.10} parent=11 // pred_check_branch
        %318 = sbr.rel (%p316) target = $region16
      $region15: #{decoder_forward.10} parent=11 // pred_region
        _
      $region16: #{decoder_forward.10} parent=11 // pred_fallthru
        _
      // Predicated region
      $region17: #{decoder_forward.10} parent=11 // pred_check
        %p319 = pneg %p86
      $region18: #{decoder_forward.10} parent=11 // pred_check_branch
        %321 = sbr.rel (%p319) target = $region20
      $region19: #{decoder_forward.10} parent=11 // pred_region
        _
      $region20: #{decoder_forward.10} parent=11 // pred_fallthru
        _
      // Predicated region
      $region21: #{decoder_forward.10} parent=11 // pred_check
        %p322 = pneg %p107
      $region22: #{decoder_forward.10} parent=11 // pred_check_branch
        %324 = sbr.rel (%p322) target = $region24
      $region23: #{decoder_forward.10} parent=11 // pred_region
        _
      $region24: #{decoder_forward.10} parent=11 // pred_fallthru
        _
      // Predicated region
      $region25: #{decoder_forward.10} parent=11 // pred_check
        %p325 = pneg %p128
      $region26: #{decoder_forward.10} parent=11 // pred_check_branch
        %327 = sbr.rel (%p325) target = $region28
      $region27: #{decoder_forward.10} parent=11 // pred_region
        _
      $region28: #{decoder_forward.10} parent=11 // pred_fallthru
        _
      // Predicated region
      $region29: #{decoder_forward.10} parent=11 // pred_check
        %p328 = pneg %p149
      $region30: #{decoder_forward.10} parent=11 // pred_check_branch
        %330 = sbr.rel (%p328) target = $region32
      $region31: #{decoder_forward.10} parent=11 // pred_region
        _
      $region32: #{decoder_forward.10} parent=11 // pred_fallthru
        _
      // Predicated region
      $region33: #{decoder_forward.10} parent=11 // pred_check
        %p331 = pneg %p170
      $region34: #{decoder_forward.10} parent=11 // pred_check_branch
        %333 = sbr.rel (%p331) target = $region36
      $region35: #{decoder_forward.10} parent=11 // pred_region
        _
      $region36: #{decoder_forward.10} parent=11 // pred_fallthru
        _
      // Predicated region
      $region37: #{decoder_forward.10} parent=11 // pred_check
        %p334 = pneg %p191
      $region38: #{decoder_forward.10} parent=11 // pred_check_branch
        %336 = sbr.rel (%p334) target = $region40
      $region39: #{decoder_forward.10} parent=11 // pred_region
        _
      $region40: #{decoder_forward.10} parent=11 // pred_fallthru
        _
      // Predicated region
      $region41: #{decoder_forward.10} parent=11 // pred_check
        %p337 = pneg %p212
      $region42: #{decoder_forward.10} parent=11 // pred_check_branch
        %339 = sbr.rel (%p337) target = $region44
      $region43: #{decoder_forward.10} parent=11 // pred_region
        _
      $region44: #{decoder_forward.10} parent=11 // pred_fallthru
        _
      // Predicated region
      $region45: #{decoder_forward.10} parent=11 // pred_check
        %p340 = pneg %p233
      $region46: #{decoder_forward.10} parent=11 // pred_check_branch
        %342 = sbr.rel (%p340) target = $region48
      $region47: #{decoder_forward.10} parent=11 // pred_region
        _
      $region48: #{decoder_forward.10} parent=11 // pred_fallthru
        _
      // Predicated region
      $region49: #{decoder_forward.10} parent=11 // pred_check
        %p343 = pneg %p254
      $region50: #{decoder_forward.10} parent=11 // pred_check_branch
        %345 = sbr.rel (%p343) target = $region52
      $region51: #{decoder_forward.10} parent=11 // pred_region
        _
      $region52: #{decoder_forward.10} parent=11 // pred_fallthru
        _
      // Predicated region
      $region53: #{decoder_forward.10} parent=11 // pred_check
        %p346 = pneg %p275
      $region54: #{decoder_forward.10} parent=11 // pred_check_branch
        %348 = sbr.rel (%p346) target = $region56
      $region55: #{decoder_forward.10} parent=11 // pred_region
        _
      $region56: #{decoder_forward.10} parent=11 // pred_fallthru
        _
    $region12: #{decoder_forward.10} parent=5 // pred_fallthru
      _
    %p349 = scmp.lt.s32.totalorder %s18, 2
    // Predicated region
    $region57: #{decoder_forward.10} parent=5 // pred_check
      %p350 = pneg %p349
    $region58: #{decoder_forward.10} parent=5 // pred_check_branch
      %352 = sbr.rel (%p350) target = $region60
    $region59: #{decoder_forward.10} parent=5 // pred_region
      // Predicated region
      $region61: #{decoder_forward.10} parent=59 // pred_check
        %p353 = pneg %p38
      $region62: #{decoder_forward.10} parent=59 // pred_check_branch
        %355 = sbr.rel (%p353) target = $region64
      $region63: #{decoder_forward.10} parent=59 // pred_region
        %p356 = scmp.lt.s32.totalorder %s18, 1
        %s357 = scalar_select %p356, %s18, 1
        %s358 = smul.addr %s357, 8
        %s359 = scalar_lea.vmem %s0, %s358
      $region64: #{decoder_forward.10} parent=59 // pred_fallthru
        _
    $region60: #{decoder_forward.10} parent=5 // pred_fallthru
      _
    %p360 = scmp.le.s32.totalorder 1, %s18
    %p361 = scmp.lt.s32.totalorder %s18, 3
    %p362 = pnand %p360, %p361
    %p363 = pneg %p362
    // Predicated region
    $region65: #{decoder_forward.10} parent=5 // pred_check
      _
    $region66: #{decoder_forward.10} parent=5 // pred_check_branch
      %365 = sbr.rel (%p362) target = $region68
    $region67: #{decoder_forward.10} parent=5 // pred_region
      %s366 = ssub.s32 %s18, 1
      %p367 = scmp.lt.s32.totalorder %s23, 1
      %s368 = scalar_select %p367, %s23, 1
      %s369 = smul.addr %s368, 8
      %s370 = scalar_lea.vmem %s0, %s369
      %p371 = pneg %p44
      %p372 = pneg %p41
      %p373 = pneg %p65
      %p374 = pneg %p62
      %p375 = pneg %p86
      %p376 = pneg %p83
      %p377 = pneg %p107
      %p378 = pneg %p104
      %p379 = pneg %p128
      %p380 = pneg %p125
      %p381 = pneg %p149
      %p382 = pneg %p146
      %p383 = pneg %p170
      %p384 = pneg %p167
      %p385 = pneg %p191
      %p386 = pneg %p188
      %p387 = pneg %p212
      %p388 = pneg %p209
      %p389 = pneg %p233
      %p390 = pneg %p230
      %p391 = pneg %p254
      %p392 = pneg %p251
      %p393 = pneg %p275
      %p394 = pneg %p272
      %p395 = pneg %p301
      %p396 = pneg %p298
      %p397 = scmp.lt.s32.totalorder %s23, 1
      %s398 = scalar_select %p397, %s23, 1
      %s399 = smul.addr %s398, 8
      %s400 = scalar_lea.vmem %s12, %s399
      %p401 = scmp.lt.s32.totalorder %s23, 1
      %s402 = scalar_select %p401, %s23, 1
      %s403 = smul.addr %s402, 8
      %s404 = scalar_lea.vmem %s0, %s403
      %p405 = scmp.lt.s32.totalorder %s23, 1
      %s406 = scalar_select %p405, %s23, 1
      %s407 = smul.addr %s406, 8
      %s408 = scalar_lea.vmem %s12, %s407
      %v410 = vld [vmem:[%s404] sm:$0xff]
      %v411 = vld [vmem:[%s2] sm:$0x1]
      %v412 = vld [vmem:[%s3] sm:$0x1]
      %vm413 = vcmask 261120
      %v414 = vsel %vm413, %v410, 0.0
      %415 = vadd.xlane.f32.xlu0 %v414
      %v416 = vpop.xlane.xlu0 %415
      %v417 = vrcp.pop 32.0
      %v418 = vmul.f32 %v416, %v417
      %v419 = vsub.f32 %v410, %v418
      %v420 = vmul.f32 %v419, %v419
      %v421 = vsel %vm413, %v420, 0.0
      %422 = vadd.xlane.f32.xlu0 %v421
      %v423 = vpop.xlane.xlu0 %422
      %v424 = vmul.f32 %v423, 0.032258064
      %v425 = vrsqrt.pop %v424
      %v426 = vmul.f32 %v424, %v425
      %vm427 = vcmp.eq.f32.partialorder %v424, inf
      %v428 = vsel %vm427, %v424, %v426
      %vm429 = vcmp.eq.f32.partialorder %v424, 0.0
      %v430 = vand.u32 %v424, 2147483648
      %v431 = vsel %vm429, %v430, %v428
      %v432 = vadd.f32 %v431, 1e-06
      %v433 = vrcp.pop %v432
      %v434 = vmul.f32 %v419, %v433
      %v436 = vlaneseq
      %v437 = vshrl.u32 %v436, 7
      %v438 = vsub.s32 0, %v437
      %v439 = vrot.slane %v411, %v438
      %v441 = vmul.f32 %v439, %v434
      %v443 = vlaneseq
      %v444 = vshrl.u32 %v443, 7
      %v445 = vsub.s32 0, %v444
      %v446 = vrot.slane %v412, %v445
      %v448 = vadd.f32 %v441, %v446
      %v449 = vld [vmem:[%s4] sm:$0xff]
      %v450 = vld [vmem:[%s4 + $0x8] sm:$0xff]
      %v451 = vld [vmem:[%s4 + $0x10] sm:$0xff]
      %v452 = vld [vmem:[%s4 + $0x18] sm:$0xff]
      %v453 = vpack.c.bf16 %v448, %v448
      %v454 = vpack.c.bf16 %v450, %v449
      %v455 = vpack.c.bf16 %v452, %v451
      %v456 = vld [vmem:[%s5] sm:$0x1]
      %v458 = vlaneseq
      %v459 = vshrl.u32 %v458, 7
      %v460 = vsub.s32 0, %v459
      %v461 = vrot.slane %v456, %v460
      %v464 = vsel %vm413, %v453, 0
      %466 = vmatprep.subr.bf16.mxu0 0
      %467 = vmatpush1.bf16.msra.mxu0 %v454
      %468 = vmatprep.subr.bf16.mxu0 0
      %469 = vmatpush1.bf16.msra.mxu0 %v455
      %470 = vmatprep.subr.bf16.mxu0 0
      %471 = vmatpush1.bf16.msra.mxu0 0
      %472 = vmatprep.subr.bf16.mxu0 0
      %473 = vmatpush1.bf16.msra.mxu0 0
      %474 = vmatprep.subr.bf16.mxu0 0
      %475 = vmatpush1.bf16.msra.mxu0 0
      %476 = vmatprep.subr.bf16.mxu0 0
      %477 = vmatpush1.bf16.msra.mxu0 0
      %478 = vmatprep.subr.bf16.mxu0 0
      %479 = vmatpush1.bf16.msra.mxu0 0
      %480 = vmatprep.subr.bf16.mxu0 0
      %481 = vmatpush1.bf16.msra.mxu0 0
      %482 = vmatprep.subr.bf16.mxu0 0
      %483 = vmatpush1.bf16.msra.mxu0 0
      %484 = vmatprep.subr.bf16.mxu0 0
      %485 = vmatpush1.bf16.msra.mxu0 0
      %486 = vmatprep.subr.bf16.mxu0 0
      %487 = vmatpush1.bf16.msra.mxu0 0
      %488 = vmatprep.subr.bf16.mxu0 0
      %489 = vmatpush1.bf16.msra.mxu0 0
      %490 = vmatprep.subr.bf16.mxu0 0
      %491 = vmatpush1.bf16.msra.mxu0 0
      %492 = vmatprep.subr.bf16.mxu0 0
      %493 = vmatpush1.bf16.msra.mxu0 0
      %494 = vmatprep.subr.bf16.mxu0 0
      %495 = vmatpush1.bf16.msra.mxu0 0
      %496 = vmatprep.subr.bf16.mxu0 0
      %497 = vmatpush1.bf16.msra.mxu0 0
      %498 = vmatprep.mubr.bf16.mxu0 0
      %499 = vmatmul.mubr.bf16.gmra.mrb[0].mxu0 %v464
      %v500 = vpop.f32.mrb[0].mxu0
      %v501 = vadd.f32 %v461, %v500
      %v502 = vpop.f32.mrb[0].mxu0
      %v503 = vpop.f32.mrb[0].mxu0
      %v504 = vpop.f32.mrb[0].mxu0
      %505 = vdwg.mxu0
      %v506 = vpack.c.bf16 %v501, %v501
      %v507 = vld [vmem:[%s6] sm:$0xff]
      %v508 = vld [vmem:[%s6 + $0x8] sm:$0xff]
      %v509 = vld [vmem:[%s6 + $0x10] sm:$0xff]
      %v510 = vld [vmem:[%s6 + $0x18] sm:$0xff]
      %v511 = vpack.c.bf16 %v508, %v507
      %v512 = vpack.c.bf16 %v510, %v509
      %v513 = vld [vmem:[%s7] sm:$0x1]
      %v515 = vlaneseq
      %v516 = vshrl.u32 %v515, 7
      %v517 = vsub.s32 0, %v516
      %v518 = vrot.slane %v513, %v517
      %520 = vmatprep.subr.bf16.mxu0 0
      %521 = vmatpush1.bf16.msra.mxu0 %v511
      %522 = vmatprep.subr.bf16.mxu0 0
      %523 = vmatpush1.bf16.msra.mxu0 %v512
      %524 = vmatprep.subr.bf16.mxu0 0
      %525 = vmatpush1.bf16.msra.mxu0 0
      %526 = vmatprep.subr.bf16.mxu0 0
      %527 = vmatpush1.bf16.msra.mxu0 0
      %528 = vmatprep.subr.bf16.mxu0 0
      %529 = vmatpush1.bf16.msra.mxu0 0
      %530 = vmatprep.subr.bf16.mxu0 0
      %531 = vmatpush1.bf16.msra.mxu0 0
      %532 = vmatprep.subr.bf16.mxu0 0
      %533 = vmatpush1.bf16.msra.mxu0 0
      %534 = vmatprep.subr.bf16.mxu0 0
      %535 = vmatpush1.bf16.msra.mxu0 0
      %536 = vmatprep.subr.bf16.mxu0 0
      %537 = vmatpush1.bf16.msra.mxu0 0
      %538 = vmatprep.subr.bf16.mxu0 0
      %539 = vmatpush1.bf16.msra.mxu0 0
      %540 = vmatprep.subr.bf16.mxu0 0
      %541 = vmatpush1.bf16.msra.mxu0 0
      %542 = vmatprep.subr.bf16.mxu0 0
      %543 = vmatpush1.bf16.msra.mxu0 0
      %544 = vmatprep.subr.bf16.mxu0 0
      %545 = vmatpush1.bf16.msra.mxu0 0
      %546 = vmatprep.subr.bf16.mxu0 0
      %547 = vmatpush1.bf16.msra.mxu0 0
      %548 = vmatprep.subr.bf16.mxu0 0
      %549 = vmatpush1.bf16.msra.mxu0 0
      %550 = vmatprep.subr.bf16.mxu0 0
      %551 = vmatpush1.bf16.msra.mxu0 0
      %552 = vmatprep.mubr.bf16.mxu0 0
      %553 = vmatmul.mubr.bf16.gmra.mrb[0].mxu0 %v464
      %v554 = vpop.f32.mrb[0].mxu0
      %v555 = vadd.f32 %v518, %v554
      %v556 = vpop.f32.mrb[0].mxu0
      %v557 = vpop.f32.mrb[0].mxu0
      %v558 = vpop.f32.mrb[0].mxu0
      %559 = vdwg.mxu0
      %v560 = vpack.c.bf16 %v555, %v555
      %v561 = vld [vmem:[%s8] sm:$0xff]
      %v562 = vld [vmem:[%s8 + $0x8] sm:$0xff]
      %v563 = vld [vmem:[%s8 + $0x10] sm:$0xff]
      %v564 = vld [vmem:[%s8 + $0x18] sm:$0xff]
      %v565 = vpack.c.bf16 %v562, %v561
      %v566 = vpack.c.bf16 %v564, %v563
      %v567 = vld [vmem:[%s9] sm:$0x1]
      %v569 = vlaneseq
      %v570 = vshrl.u32 %v569, 7
      %v571 = vsub.s32 0, %v570
      %v572 = vrot.slane %v567, %v571
      %574 = vmatprep.subr.bf16.mxu0 0
      %575 = vmatpush1.bf16.msra.mxu0 %v565
      %576 = vmatprep.subr.bf16.mxu0 0
      %577 = vmatpush1.bf16.msra.mxu0 %v566
      %578 = vmatprep.subr.bf16.mxu0 0
      %579 = vmatpush1.bf16.msra.mxu0 0
      %580 = vmatprep.subr.bf16.mxu0 0
      %581 = vmatpush1.bf16.msra.mxu0 0
      %582 = vmatprep.subr.bf16.mxu0 0
      %583 = vmatpush1.bf16.msra.mxu0 0
      %584 = vmatprep.subr.bf16.mxu0 0
      %585 = vmatpush1.bf16.msra.mxu0 0
      %586 = vmatprep.subr.bf16.mxu0 0
      %587 = vmatpush1.bf16.msra.mxu0 0
      %588 = vmatprep.subr.bf16.mxu0 0
      %589 = vmatpush1.bf16.msra.mxu0 0
      %590 = vmatprep.subr.bf16.mxu0 0
      %591 = vmatpush1.bf16.msra.mxu0 0
      %592 = vmatprep.subr.bf16.mxu0 0
      %593 = vmatpush1.bf16.msra.mxu0 0
      %594 = vmatprep.subr.bf16.mxu0 0
      %595 = vmatpush1.bf16.msra.mxu0 0
      %596 = vmatprep.subr.bf16.mxu0 0
      %597 = vmatpush1.bf16.msra.mxu0 0
      %598 = vmatprep.subr.bf16.mxu0 0
      %599 = vmatpush1.bf16.msra.mxu0 0
      %600 = vmatprep.subr.bf16.mxu0 0
      %601 = vmatpush1.bf16.msra.mxu0 0
      %602 = vmatprep.subr.bf16.mxu0 0
      %603 = vmatpush1.bf16.msra.mxu0 0
      %604 = vmatprep.subr.bf16.mxu0 0
      %605 = vmatpush1.bf16.msra.mxu0 0
      %606 = vmatprep.mubr.bf16.mxu0 0
      %607 = vmatmul.mubr.bf16.gmra.mrb[0].mxu0 %v464
      %v608 = vpop.f32.mrb[0].mxu0
      %v609 = vadd.f32 %v572, %v608
      %v610 = vpop.f32.mrb[0].mxu0
      %v611 = vpop.f32.mrb[0].mxu0
      %v612 = vpop.f32.mrb[0].mxu0
      %613 = vdwg.mxu0
      %v614 = vpack.c.bf16 %v609, %v609
      %v615 = vld [vmem:[%s1] sm:$0xff]
      %vm616 = vcmask 64512
      %v618 = vsel %vm616, %v506, 0
      %v621 = vsel %vm616, %v560, 0
      %623 = vmatprep.subr.bf16.mxu0 0
      %624 = vmatpush1.bf16.xpose.msra.mxu0 %v621
      %625 = vmatprep.subr.bf16.mxu0 0
      %626 = vmatpush1.bf16.xpose.msra.mxu0 0
      %627 = vmatprep.subr.bf16.mxu0 0
      %628 = vmatpush1.bf16.xpose.msra.mxu0 0
      %629 = vmatprep.subr.bf16.mxu0 0
      %630 = vmatpush1.bf16.xpose.msra.mxu0 0
      %631 = vmatprep.subr.bf16.mxu0 0
      %632 = vmatpush1.bf16.xpose.msra.mxu0 0
      %633 = vmatprep.subr.bf16.mxu0 0
      %634 = vmatpush1.bf16.xpose.msra.mxu0 0
      %635 = vmatprep.subr.bf16.mxu0 0
      %636 = vmatpush1.bf16.xpose.msra.mxu0 0
      %637 = vmatprep.subr.bf16.mxu0 0
      %638 = vmatpush1.bf16.xpose.msra.mxu0 0
      %639 = vmatprep.subr.bf16.mxu0 0
      %640 = vmatpush1.bf16.xpose.msra.mxu0 0
      %641 = vmatprep.subr.bf16.mxu0 0
      %642 = vmatpush1.bf16.xpose.msra.mxu0 0
      %643 = vmatprep.subr.bf16.mxu0 0
      %644 = vmatpush1.bf16.xpose.msra.mxu0 0
      %645 = vmatprep.subr.bf16.mxu0 0
      %646 = vmatpush1.bf16.xpose.msra.mxu0 0
      %647 = vmatprep.subr.bf16.mxu0 0
      %648 = vmatpush1.bf16.xpose.msra.mxu0 0
      %649 = vmatprep.subr.bf16.mxu0 0
      %650 = vmatpush1.bf16.xpose.msra.mxu0 0
      %651 = vmatprep.subr.bf16.mxu0 0
      %652 = vmatpush1.bf16.xpose.msra.mxu0 0
      %653 = vmatprep.subr.bf16.mxu0 0
      %654 = vmatpush1.bf16.xpose.msra.mxu0 0
      %655 = vmatprep.mubr.bf16.mxu0 0
      %656 = vmatmul.mubr.bf16.gmra.mrb[0].mxu0 %v618
      %v657 = vpop.f32.mrb[0].mxu0
      %v658 = vadd.f32 0.0, %v657
      %v659 = vpop.f32.mrb[0].mxu0
      %v660 = vpop.f32.mrb[0].mxu0
      %v661 = vpop.f32.mrb[0].mxu0
      %662 = vdwg.mxu0
      %v663 = vmul.f32 %v658, 0.35355338
      %v664 = vadd.f32 %v663, %v615
      %v665 = vsel %vm616, %v664, -inf
      %666 = vmax.xlane.f32.xlu0 %v665
      %v667 = vpop.xlane.xlu0 %666
      %v668 = vsub.f32 %v664, %v667
      %v669 = vmul.f32 %v668, 1.442695
      %v670 = vpow.pop %v669
      %v671 = vsel %vm616, %v670, 0.0
      %672 = vadd.xlane.f32.xlu0 %v671
      %v673 = vpop.xlane.xlu0 %672
      %v674 = vrcp.pop %v673
      %v675 = vpack.c.bf16 %v670, %v670
      %v677 = vsel %vm616, %v675, 0
      %vm679 = vcmask 1043456
      %v681 = vsel %vm679, %v614, 0
      %683 = vmatprep.subr.bf16.mxu0 0
      %684 = vmatpush1.bf16.msra.mxu0 %v681
      %685 = vmatprep.subr.bf16.mxu0 0
      %686 = vmatpush1.bf16.msra.mxu0 0
      %687 = vmatprep.subr.bf16.mxu0 0
      %688 = vmatpush1.bf16.msra.mxu0 0
      %689 = vmatprep.subr.bf16.mxu0 0
      %690 = vmatpush1.bf16.msra.mxu0 0
      %691 = vmatprep.subr.bf16.mxu0 0
      %692 = vmatpush1.bf16.msra.mxu0 0
      %693 = vmatprep.subr.bf16.mxu0 0
      %694 = vmatpush1.bf16.msra.mxu0 0
      %695 = vmatprep.subr.bf16.mxu0 0
      %696 = vmatpush1.bf16.msra.mxu0 0
      %697 = vmatprep.subr.bf16.mxu0 0
      %698 = vmatpush1.bf16.msra.mxu0 0
      %699 = vmatprep.subr.bf16.mxu0 0
      %700 = vmatpush1.bf16.msra.mxu0 0
      %701 = vmatprep.subr.bf16.mxu0 0
      %702 = vmatpush1.bf16.msra.mxu0 0
      %703 = vmatprep.subr.bf16.mxu0 0
      %704 = vmatpush1.bf16.msra.mxu0 0
      %705 = vmatprep.subr.bf16.mxu0 0
      %706 = vmatpush1.bf16.msra.mxu0 0
      %707 = vmatprep.subr.bf16.mxu0 0
      %708 = vmatpush1.bf16.msra.mxu0 0
      %709 = vmatprep.subr.bf16.mxu0 0
      %710 = vmatpush1.bf16.msra.mxu0 0
      %711 = vmatprep.subr.bf16.mxu0 0
      %712 = vmatpush1.bf16.msra.mxu0 0
      %713 = vmatprep.subr.bf16.mxu0 0
      %714 = vmatpush1.bf16.msra.mxu0 0
      %715 = vmatprep.mubr.bf16.mxu0 0
      %716 = vmatmul.mubr.bf16.gmra.mrb[0].mxu0 %v677
      %v717 = vpop.f32.mrb[0].mxu0
      %v718 = vadd.f32 0.0, %v717
      %v719 = vpop.f32.mrb[0].mxu0
      %v720 = vpop.f32.mrb[0].mxu0
      %v721 = vpop.f32.mrb[0].mxu0
      %722 = vdwg.mxu0
      %v723 = vmul.f32 %v718, %v674
      %v724 = vpack.c.bf16 %v723, %v723
      %vm725 = vcmask 60416
      %726 = vst.msk [vmem:[#allocation2] sm:$0xf] %vm725, %v724
      %728 = vrot.lane.b32.xlu0 %v506, 120
      %v729 = vpop.permute.xlu0 %728
      %731 = vrot.lane.b32.xlu0 %v560, 120
      %v732 = vpop.permute.xlu0 %731
      %v734 = vsel %vm616, %v729, 0
      %v737 = vsel %vm616, %v732, 0
      %739 = vmatprep.subr.bf16.mxu0 0
      %740 = vmatpush1.bf16.xpose.msra.mxu0 %v737
      %741 = vmatprep.subr.bf16.mxu0 0
      %742 = vmatpush1.bf16.xpose.msra.mxu0 0
      %743 = vmatprep.subr.bf16.mxu0 0
      %744 = vmatpush1.bf16.xpose.msra.mxu0 0
      %745 = vmatprep.subr.bf16.mxu0 0
      %746 = vmatpush1.bf16.xpose.msra.mxu0 0
      %747 = vmatprep.subr.bf16.mxu0 0
      %748 = vmatpush1.bf16.xpose.msra.mxu0 0
      %749 = vmatprep.subr.bf16.mxu0 0
      %750 = vmatpush1.bf16.xpose.msra.mxu0 0
      %751 = vmatprep.subr.bf16.mxu0 0
      %752 = vmatpush1.bf16.xpose.msra.mxu0 0
      %753 = vmatprep.subr.bf16.mxu0 0
      %754 = vmatpush1.bf16.xpose.msra.mxu0 0
      %755 = vmatprep.subr.bf16.mxu0 0
      %756 = vmatpush1.bf16.xpose.msra.mxu0 0
      %757 = vmatprep.subr.bf16.mxu0 0
      %758 = vmatpush1.bf16.xpose.msra.mxu0 0
      %759 = vmatprep.subr.bf16.mxu0 0
      %760 = vmatpush1.bf16.xpose.msra.mxu0 0
      %761 = vmatprep.subr.bf16.mxu0 0
      %762 = vmatpush1.bf16.xpose.msra.mxu0 0
      %763 = vmatprep.subr.bf16.mxu0 0
      %764 = vmatpush1.bf16.xpose.msra.mxu0 0
      %765 = vmatprep.subr.bf16.mxu0 0
      %766 = vmatpush1.bf16.xpose.msra.mxu0 0
      %767 = vmatprep.subr.bf16.mxu0 0
      %768 = vmatpush1.bf16.xpose.msra.mxu0 0
      %769 = vmatprep.subr.bf16.mxu0 0
      %770 = vmatpush1.bf16.xpose.msra.mxu0 0
      %771 = vmatprep.mubr.bf16.mxu0 0
      %772 = vmatmul.mubr.bf16.gmra.mrb[0].mxu0 %v734
      %v773 = vpop.f32.mrb[0].mxu0
      %v774 = vadd.f32 0.0, %v773
      %v775 = vpop.f32.mrb[0].mxu0
      %v776 = vpop.f32.mrb[0].mxu0
      %v777 = vpop.f32.mrb[0].mxu0
      %778 = vdwg.mxu0
      %v779 = vmul.f32 %v774, 0.35355338
      %v780 = vadd.f32 %v779, %v615
      %v781 = vsel %vm616, %v780, -inf
      %782 = vmax.xlane.f32.xlu0 %v781
      %v783 = vpop.xlane.xlu0 %782
      %v784 = vsub.f32 %v780, %v783
      %v785 = vmul.f32 %v784, 1.442695
      %v786 = vpow.pop %v785
      %v787 = vsel %vm616, %v786, 0.0
      %788 = vadd.xlane.f32.xlu0 %v787
      %v789 = vpop.xlane.xlu0 %788
      %v790 = vrcp.pop %v789
      %v791 = vpack.c.bf16 %v786, %v786
      %793 = vrot.lane.b32.xlu0 %v614, 120
      %v794 = vpop.permute.xlu0 %793
      %v796 = vsel %vm616, %v791, 0
      %v799 = vsel %vm679, %v794, 0
      %801 = vmatprep.subr.bf16.mxu0 0
      %802 = vmatpush1.bf16.msra.mxu0 %v799
      %803 = vmatprep.subr.bf16.mxu0 0
      %804 = vmatpush1.bf16.msra.mxu0 0
      %805 = vmatprep.subr.bf16.mxu0 0
      %806 = vmatpush1.bf16.msra.mxu0 0
      %807 = vmatprep.subr.bf16.mxu0 0
      %808 = vmatpush1.bf16.msra.mxu0 0
      %809 = vmatprep.subr.bf16.mxu0 0
      %810 = vmatpush1.bf16.msra.mxu0 0
      %811 = vmatprep.subr.bf16.mxu0 0
      %812 = vmatpush1.bf16.msra.mxu0 0
      %813 = vmatprep.subr.bf16.mxu0 0
      %814 = vmatpush1.bf16.msra.mxu0 0
      %815 = vmatprep.subr.bf16.mxu0 0
      %816 = vmatpush1.bf16.msra.mxu0 0
      %817 = vmatprep.subr.bf16.mxu0 0
      %818 = vmatpush1.bf16.msra.mxu0 0
      %819 = vmatprep.subr.bf16.mxu0 0
      %820 = vmatpush1.bf16.msra.mxu0 0
      %821 = vmatprep.subr.bf16.mxu0 0
      %822 = vmatpush1.bf16.msra.mxu0 0
      %823 = vmatprep.subr.bf16.mxu0 0
      %824 = vmatpush1.bf16.msra.mxu0 0
      %825 = vmatprep.subr.bf16.mxu0 0
      %826 = vmatpush1.bf16.msra.mxu0 0
      %827 = vmatprep.subr.bf16.mxu0 0
      %828 = vmatpush1.bf16.msra.mxu0 0
      %829 = vmatprep.subr.bf16.mxu0 0
      %830 = vmatpush1.bf16.msra.mxu0 0
      %831 = vmatprep.subr.bf16.mxu0 0
      %832 = vmatpush1.bf16.msra.mxu0 0
      %833 = vmatprep.mubr.bf16.mxu0 0
      %834 = vmatmul.mubr.bf16.gmra.mrb[0].mxu0 %v796
      %v835 = vpop.f32.mrb[0].mxu0
      %v836 = vadd.f32 0.0, %v835
      %v837 = vpop.f32.mrb[0].mxu0
      %v838 = vpop.f32.mrb[0].mxu0
      %v839 = vpop.f32.mrb[0].mxu0
      %840 = vdwg.mxu0
      %v841 = vmul.f32 %v836, %v790
      %v842 = vpack.c.bf16 %v841, %v841
      %v844 = vunpack.c.l.b16 %v842
      %v845 = vpack.c.b16 %v844, %v844
      %846 = vrot.lane.b32.xlu0 %v845, 8
      %v847 = vpop.permute.xlu0 %846
      %vm849 = vcmask 126016
      %850 = vst.msk [vmem:[#allocation2] sm:$0xf] %vm849, %v847
      %851 = vrot.lane.b32.xlu0 %v506, 112
      %v852 = vpop.permute.xlu0 %851
      %853 = vrot.lane.b32.xlu0 %v560, 112
      %v854 = vpop.permute.xlu0 %853
      %v856 = vsel %vm616, %v852, 0
      %v859 = vsel %vm616, %v854, 0
      %861 = vmatprep.subr.bf16.mxu0 0
      %862 = vmatpush1.bf16.xpose.msra.mxu0 %v859
      %863 = vmatprep.subr.bf16.mxu0 0
      %864 = vmatpush1.bf16.xpose.msra.mxu0 0
      %865 = vmatprep.subr.bf16.mxu0 0
      %866 = vmatpush1.bf16.xpose.msra.mxu0 0
      %867 = vmatprep.subr.bf16.mxu0 0
      %868 = vmatpush1.bf16.xpose.msra.mxu0 0
      %869 = vmatprep.subr.bf16.mxu0 0
      %870 = vmatpush1.bf16.xpose.msra.mxu0 0
      %871 = vmatprep.subr.bf16.mxu0 0
      %872 = vmatpush1.bf16.xpose.msra.mxu0 0
      %873 = vmatprep.subr.bf16.mxu0 0
      %874 = vmatpush1.bf16.xpose.msra.mxu0 0
      %875 = vmatprep.subr.bf16.mxu0 0
      %876 = vmatpush1.bf16.xpose.msra.mxu0 0
      %877 = vmatprep.subr.bf16.mxu0 0
      %878 = vmatpush1.bf16.xpose.msra.mxu0 0
      %879 = vmatprep.subr.bf16.mxu0 0
      %880 = vmatpush1.bf16.xpose.msra.mxu0 0
      %881 = vmatprep.subr.bf16.mxu0 0
      %882 = vmatpush1.bf16.xpose.msra.mxu0 0
      %883 = vmatprep.subr.bf16.mxu0 0
      %884 = vmatpush1.bf16.xpose.msra.mxu0 0
      %885 = vmatprep.subr.bf16.mxu0 0
      %886 = vmatpush1.bf16.xpose.msra.mxu0 0
      %887 = vmatprep.subr.bf16.mxu0 0
      %888 = vmatpush1.bf16.xpose.msra.mxu0 0
      %889 = vmatprep.subr.bf16.mxu0 0
      %890 = vmatpush1.bf16.xpose.msra.mxu0 0
      %891 = vmatprep.subr.bf16.mxu0 0
      %892 = vmatpush1.bf16.xpose.msra.mxu0 0
      %893 = vmatprep.mubr.bf16.mxu0 0
      %894 = vmatmul.mubr.bf16.gmra.mrb[0].mxu0 %v856
      %v895 = vpop.f32.mrb[0].mxu0
      %v896 = vadd.f32 0.0, %v895
      %v897 = vpop.f32.mrb[0].mxu0
      %v898 = vpop.f32.mrb[0].mxu0
      %v899 = vpop.f32.mrb[0].mxu0
      %900 = vdwg.mxu0
      %v901 = vmul.f32 %v896, 0.35355338
      %v902 = vadd.f32 %v901, %v615
      %v903 = vsel %vm616, %v902, -inf
      %904 = vmax.xlane.f32.xlu0 %v903
      %v905 = vpop.xlane.xlu0 %904
      %v906 = vsub.f32 %v902, %v905
      %v907 = vmul.f32 %v906, 1.442695
      %v908 = vpow.pop %v907
      %v909 = vsel %vm616, %v908, 0.0
      %910 = vadd.xlane.f32.xlu0 %v909
      %v911 = vpop.xlane.xlu0 %910
      %v912 = vrcp.pop %v911
      %v913 = vpack.c.bf16 %v908, %v908
      %914 = vrot.lane.b32.xlu0 %v614, 112
      %v915 = vpop.permute.xlu0 %914
      %v917 = vsel %vm616, %v913, 0
      %v920 = vsel %vm679, %v915, 0
      %922 = vmatprep.subr.bf16.mxu0 0
      %923 = vmatpush1.bf16.msra.mxu0 %v920
      %924 = vmatprep.subr.bf16.mxu0 0
      %925 = vmatpush1.bf16.msra.mxu0 0
      %926 = vmatprep.subr.bf16.mxu0 0
      %927 = vmatpush1.bf16.msra.mxu0 0
      %928 = vmatprep.subr.bf16.mxu0 0
      %929 = vmatpush1.bf16.msra.mxu0 0
      %930 = vmatprep.subr.bf16.mxu0 0
      %931 = vmatpush1.bf16.msra.mxu0 0
      %932 = vmatprep.subr.bf16.mxu0 0
      %933 = vmatpush1.bf16.msra.mxu0 0
      %934 = vmatprep.subr.bf16.mxu0 0
      %935 = vmatpush1.bf16.msra.mxu0 0
      %936 = vmatprep.subr.bf16.mxu0 0
      %937 = vmatpush1.bf16.msra.mxu0 0
      %938 = vmatprep.subr.bf16.mxu0 0
      %939 = vmatpush1.bf16.msra.mxu0 0
      %940 = vmatprep.subr.bf16.mxu0 0
      %941 = vmatpush1.bf16.msra.mxu0 0
      %942 = vmatprep.subr.bf16.mxu0 0
      %943 = vmatpush1.bf16.msra.mxu0 0
      %944 = vmatprep.subr.bf16.mxu0 0
      %945 = vmatpush1.bf16.msra.mxu0 0
      %946 = vmatprep.subr.bf16.mxu0 0
      %947 = vmatpush1.bf16.msra.mxu0 0
      %948 = vmatprep.subr.bf16.mxu0 0
      %949 = vmatpush1.bf16.msra.mxu0 0
      %950 = vmatprep.subr.bf16.mxu0 0
      %951 = vmatpush1.bf16.msra.mxu0 0
      %952 = vmatprep.subr.bf16.mxu0 0
      %953 = vmatpush1.bf16.msra.mxu0 0
      %954 = vmatprep.mubr.bf16.mxu0 0
      %955 = vmatmul.mubr.bf16.gmra.mrb[0].mxu0 %v917
      %v956 = vpop.f32.mrb[0].mxu0
      %v957 = vadd.f32 0.0, %v956
      %v958 = vpop.f32.mrb[0].mxu0
      %v959 = vpop.f32.mrb[0].mxu0
      %v960 = vpop.f32.mrb[0].mxu0
      %961 = vdwg.mxu0
      %v962 = vmul.f32 %v957, %v912
      %v963 = vpack.c.bf16 %v962, %v962
      %v965 = vunpack.c.l.b16 %v963
      %v966 = vpack.c.b16 %v965, %v965
      %967 = vrot.lane.b32.xlu0 %v966, 16
      %v968 = vpop.permute.xlu0 %967
      %vm970 = vcmask 191616
      %971 = vst.msk [vmem:[#allocation2] sm:$0xf] %vm970, %v968
      %972 = vrot.lane.b32.xlu0 %v506, 104
      %v973 = vpop.permute.xlu0 %972
      %974 = vrot.lane.b32.xlu0 %v560, 104
      %v975 = vpop.permute.xlu0 %974
      %v977 = vsel %vm616, %v973, 0
      %v980 = vsel %vm616, %v975, 0
      %982 = vmatprep.subr.bf16.mxu0 0
      %983 = vmatpush1.bf16.xpose.msra.mxu0 %v980
      %984 = vmatprep.subr.bf16.mxu0 0
      %985 = vmatpush1.bf16.xpose.msra.mxu0 0
      %986 = vmatprep.subr.bf16.mxu0 0
      %987 = vmatpush1.bf16.xpose.msra.mxu0 0
      %988 = vmatprep.subr.bf16.mxu0 0
      %989 = vmatpush1.bf16.xpose.msra.mxu0 0
      %990 = vmatprep.subr.bf16.mxu0 0
      %991 = vmatpush1.bf16.xpose.msra.mxu0 0
      %992 = vmatprep.subr.bf16.mxu0 0
      %993 = vmatpush1.bf16.xpose.msra.mxu0 0
      %994 = vmatprep.subr.bf16.mxu0 0
      %995 = vmatpush1.bf16.xpose.msra.mxu0 0
      %996 = vmatprep.subr.bf16.mxu0 0
      %997 = vmatpush1.bf16.xpose.msra.mxu0 0
      %998 = vmatprep.subr.bf16.mxu0 0
      %999 = vmatpush1.bf16.xpose.msra.mxu0 0
      %1000 = vmatprep.subr.bf16.mxu0 0
      %1001 = vmatpush1.bf16.xpose.msra.mxu0 0
      %1002 = vmatprep.subr.bf16.mxu0 0
      %1003 = vmatpush1.bf16.xpose.msra.mxu0 0
      %1004 = vmatprep.subr.bf16.mxu0 0
      %1005 = vmatpush1.bf16.xpose.msra.mxu0 0
      %1006 = vmatprep.subr.bf16.mxu0 0
      %1007 = vmatpush1.bf16.xpose.msra.mxu0 0
      %1008 = vmatprep.subr.bf16.mxu0 0
      %1009 = vmatpush1.bf16.xpose.msra.mxu0 0
      %1010 = vmatprep.subr.bf16.mxu0 0
      %1011 = vmatpush1.bf16.xpose.msra.mxu0 0
      %1012 = vmatprep.subr.bf16.mxu0 0
      %1013 = vmatpush1.bf16.xpose.msra.mxu0 0
      %1014 = vmatprep.mubr.bf16.mxu0 0
      %1015 = vmatmul.mubr.bf16.gmra.mrb[0].mxu0 %v977
      %v1016 = vpop.f32.mrb[0].mxu0
      %v1017 = vadd.f32 0.0, %v1016
      %v1018 = vpop.f32.mrb[0].mxu0
      %v1019 = vpop.f32.mrb[0].mxu0
      %v1020 = vpop.f32.mrb[0].mxu0
      %1021 = vdwg.mxu0
      %v1022 = vmul.f32 %v1017, 0.35355338
      %v1023 = vadd.f32 %v1022, %v615
      %v1024 = vsel %vm616, %v1023, -inf
      %1025 = vmax.xlane.f32.xlu0 %v1024
      %v1026 = vpop.xlane.xlu0 %1025
      %v1027 = vsub.f32 %v1023, %v1026
      %v1028 = vmul.f32 %v1027, 1.442695
      %v1029 = vpow.pop %v1028
      %v1030 = vsel %vm616, %v1029, 0.0
      %1031 = vadd.xlane.f32.xlu0 %v1030
      %v1032 = vpop.xlane.xlu0 %1031
      %v1033 = vrcp.pop %v1032
      %v1034 = vpack.c.bf16 %v1029, %v1029
      %1035 = vrot.lane.b32.xlu0 %v614, 104
      %v1036 = vpop.permute.xlu0 %1035
      %v1038 = vsel %vm616, %v1034, 0
      %v1041 = vsel %vm679, %v1036, 0
      %1043 = vmatprep.subr.bf16.mxu0 0
      %1044 = vmatpush1.bf16.msra.mxu0 %v1041
      %1045 = vmatprep.subr.bf16.mxu0 0
      %1046 = vmatpush1.bf16.msra.mxu0 0
      %1047 = vmatprep.subr.bf16.mxu0 0
      %1048 = vmatpush1.bf16.msra.mxu0 0
      %1049 = vmatprep.subr.bf16.mxu0 0
      %1050 = vmatpush1.bf16.msra.mxu0 0
      %1051 = vmatprep.subr.bf16.mxu0 0
      %1052 = vmatpush1.bf16.msra.mxu0 0
      %1053 = vmatprep.subr.bf16.mxu0 0
      %1054 = vmatpush1.bf16.msra.mxu0 0
      %1055 = vmatprep.subr.bf16.mxu0 0
      %1056 = vmatpush1.bf16.msra.mxu0 0
      %1057 = vmatprep.subr.bf16.mxu0 0
      %1058 = vmatpush1.bf16.msra.mxu0 0
      %1059 = vmatprep.subr.bf16.mxu0 0
      %1060 = vmatpush1.bf16.msra.mxu0 0
      %1061 = vmatprep.subr.bf16.mxu0 0
      %1062 = vmatpush1.bf16.msra.mxu0 0
      %1063 = vmatprep.subr.bf16.mxu0 0
      %1064 = vmatpush1.bf16.msra.mxu0 0
      %1065 = vmatprep.subr.bf16.mxu0 0
      %1066 = vmatpush1.bf16.msra.mxu0 0
      %1067 = vmatprep.subr.bf16.mxu0 0
      %1068 = vmatpush1.bf16.msra.mxu0 0
      %1069 = vmatprep.subr.bf16.mxu0 0
      %1070 = vmatpush1.bf16.msra.mxu0 0
      %1071 = vmatprep.subr.bf16.mxu0 0
      %1072 = vmatpush1.bf16.msra.mxu0 0
      %1073 = vmatprep.subr.bf16.mxu0 0
      %1074 = vmatpush1.bf16.msra.mxu0 0
      %1075 = vmatprep.mubr.bf16.mxu0 0
      %1076 = vmatmul.mubr.bf16.gmra.mrb[0].mxu0 %v1038
      %v1077 = vpop.f32.mrb[0].mxu0
      %v1078 = vadd.f32 0.0, %v1077
      %v1079 = vpop.f32.mrb[0].mxu0
      %v1080 = vpop.f32.mrb[0].mxu0
      %v1081 = vpop.f32.mrb[0].mxu0
      %1082 = vdwg.mxu0
      %v1083 = vmul.f32 %v1078, %v1033
      %v1084 = vpack.c.bf16 %v1083, %v1083
      %v1086 = vunpack.c.l.b16 %v1084
      %v1087 = vpack.c.b16 %v1086, %v1086
      %1088 = vrot.lane.b32.xlu0 %v1087, 24
      %v1089 = vpop.permute.xlu0 %1088
      %vm1091 = vcmask 257216
      %1092 = vst.msk [vmem:[#allocation2] sm:$0xf] %vm1091, %v1089
      %v1093 = vld [vmem:[#allocation2] sm:$0xf]
      %v1094 = vld [vmem:[%s10] sm:$0xff]
      %v1095 = vld [vmem:[%s10 + $0x8] sm:$0xff]
      %v1096 = vld [vmem:[%s10 + $0x10] sm:$0xff]
      %v1097 = vld [vmem:[%s10 + $0x18] sm:$0xff]
      %v1098 = vpack.c.bf16 %v1095, %v1094
      %v1099 = vpack.c.bf16 %v1097, %v1096
      %v1101 = vsel %vm413, %v1093, 0
      %1103 = vmatprep.subr.bf16.mxu0 0
      %1104 = vmatpush1.bf16.msra.mxu0 %v1098
      %1105 = vmatprep.subr.bf16.mxu0 0
      %1106 = vmatpush1.bf16.msra.mxu0 %v1099
      %1107 = vmatprep.subr.bf16.mxu0 0
      %1108 = vmatpush1.bf16.msra.mxu0 0
      %1109 = vmatprep.subr.bf16.mxu0 0
      %1110 = vmatpush1.bf16.msra.mxu0 0
      %1111 = vmatprep.subr.bf16.mxu0 0
      %1112 = vmatpush1.bf16.msra.mxu0 0
      %1113 = vmatprep.subr.bf16.mxu0 0
      %1114 = vmatpush1.bf16.msra.mxu0 0
      %1115 = vmatprep.subr.bf16.mxu0 0
      %1116 = vmatpush1.bf16.msra.mxu0 0
      %1117 = vmatprep.subr.bf16.mxu0 0
      %1118 = vmatpush1.bf16.msra.mxu0 0
      %1119 = vmatprep.subr.bf16.mxu0 0
      %1120 = vmatpush1.bf16.msra.mxu0 0
      %1121 = vmatprep.subr.bf16.mxu0 0
      %1122 = vmatpush1.bf16.msra.mxu0 0
      %1123 = vmatprep.subr.bf16.mxu0 0
      %1124 = vmatpush1.bf16.msra.mxu0 0
      %1125 = vmatprep.subr.bf16.mxu0 0
      %1126 = vmatpush1.bf16.msra.mxu0 0
      %1127 = vmatprep.subr.bf16.mxu0 0
      %1128 = vmatpush1.bf16.msra.mxu0 0
      %1129 = vmatprep.subr.bf16.mxu0 0
      %1130 = vmatpush1.bf16.msra.mxu0 0
      %1131 = vmatprep.subr.bf16.mxu0 0
      %1132 = vmatpush1.bf16.msra.mxu0 0
      %1133 = vmatprep.subr.bf16.mxu0 0
      %1134 = vmatpush1.bf16.msra.mxu0 0
      %1135 = vmatprep.mubr.bf16.mxu0 0
      %1136 = vmatmul.mubr.bf16.gmra.mrb[0].mxu0 %v1101
      %v1137 = vpop.f32.mrb[0].mxu0
      %v1138 = vadd.f32 0.0, %v1137
      %v1139 = vpop.f32.mrb[0].mxu0
      %v1140 = vpop.f32.mrb[0].mxu0
      %v1141 = vpop.f32.mrb[0].mxu0
      %1142 = vdwg.mxu0
      %v1143 = vadd.f32 %v410, %v1138
      %v1144 = vld [vmem:[%s11] sm:$0x1]
      %v1146 = vlaneseq
      %v1147 = vshrl.u32 %v1146, 7
      %v1148 = vsub.s32 0, %v1147
      %v1149 = vrot.slane %v1144, %v1148
      %v1151 = vadd.f32 %v1143, %v1149
      %1152 = vst.msk [vmem:[%s408] sm:$0xff] %vm413, %v1151
      %p1153 = scmp.lt.s32.totalorder %s23, 1
      %s1154 = scalar_select %p1153, %s23, 1
      %s1155 = smul.addr %s1154, 8
      %s1156 = scalar_lea.vmem %s12, %s1155
      // Predicated region
      $region69: #{decoder_forward.10} parent=67 // pred_check
        %p1157 = pneg %p298
      $region70: #{decoder_forward.10} parent=67 // pred_check_branch
        %1159 = sbr.rel (%p1157) target = $region72
      $region71: #{decoder_forward.10} parent=67 // pred_region
        _
      $region72: #{decoder_forward.10} parent=67 // pred_fallthru
        _
    $region68: #{decoder_forward.10} parent=5 // pred_fallthru
      _
    %p1160 = scmp.le.s32.totalorder 2, %s18
    // Predicated region
    $region73: #{decoder_forward.10} parent=5 // pred_check
      %p1161 = pneg %p1160
    $region74: #{decoder_forward.10} parent=5 // pred_check_branch
      %1163 = sbr.rel (%p1161) target = $region76
    $region75: #{decoder_forward.10} parent=5 // pred_region
      %s1164 = ssub.s32 %s18, 2
      // Predicated region
      $region77: #{decoder_forward.10} parent=75 // pred_check
        %p1165 = pneg %p304
      $region78: #{decoder_forward.10} parent=75 // pred_check_branch
        %1167 = sbr.rel (%p1165) target = $region80
      $region79: #{decoder_forward.10} parent=75 // pred_region
        %p1168 = scmp.lt.s32.totalorder %s24, 1
        %s1169 = scalar_select %p1168, %s24, 1
        %s1170 = smul.addr %s1169, 8
        %s1171 = scalar_lea.vmem %s12, %s1170
      $region80: #{decoder_forward.10} parent=75 // pred_fallthru
        _
    $region76: #{decoder_forward.10} parent=5 // pred_fallthru
      _
  $region6: #{decoder_forward.10} parent=0 // loop_footer
    %s22 = sadd.s32 1, %s18
  $region7: #{decoder_forward.10} parent=0 // loop_footer_branch
    %17 = sbr.rel target = $region3
  $region8: #{decoder_forward.10} parent=0 // loop_exit
    _

// kernel: decoder_forward.13
$region0: #{decoder_forward.13}
  #allocation0 [shape = 'u32[]', space=smem, size = 0x4, offset = 0x4, fixed_abs, tag = 'smem constant byte address 0x4 - core index']
  #allocation1 [shape = 'u32[144,128]{1,0:T(1,128)}', space=vmem, size = 0x12000, scoped, tag = 'internal scratch']
  %s0 = inlined_call_operand.vmem [shape: f32[2,8,32], index: 0, kind: input, shape index: {}]
  %s1 = inlined_call_operand.vmem [shape: f32[1,32], index: 1, kind: input, shape index: {}]
  %s2 = inlined_call_operand.vmem [shape: f32[1,32], index: 2, kind: input, shape index: {}]
  %s3 = inlined_call_operand.hbm [shape: f32[2,8,32], index: 3, kind: output, shape index: {}]
  %s4 = sld [smem:[#allocation0]]
  $region45: #{decoder_forward.13} parent=0
    _
  %s6 = ssub.s32 1, %s4
  %s7 = scalar_select 0, %s6, %s4
  $region1: #{decoder_forward.13} parent=0
    #allocation2 [shape = 'u8[8192]{0}', space=vmem, size = 0x2000, scoped, tag = 'output window, operand 0']
    #allocation3 [shape = 's32[2]{0}', space=sflag, size = 0x8, scoped, tag = 'scoped memory for decoder_forward.13']
    %8 = vsyncpa [#allocation3], 0
    %s9 = scalar_lea.sflag [#allocation3], 1
    %10 = vsyncpa %s9, 0
    loop: start=0, step=1, limit=4
    $region2: #{decoder_forward.13} parent=1 // loop_pre_header
      _
    $region3: #{decoder_forward.13} parent=1 // loop_header
      %s12 = sphi 0, %s16
      %p13 = scmp.ge.s32.totalorder %s12, 4
      %s19 = sphi 0, %s31
      %s20 = sphi 0, %s27
      %s21 = sphi 0, %s19
      %s22 = sphi 0, %s20
      %s23 = sphi 0, %s21
      %s24 = sphi 0, %s22
      %s36 = sphi 0, %s38
      %s39 = sphi 0, %s36
      %s40 = sphi 0, %s39
      %s56 = sphi 0, %s40
      %s60 = sphi 0, %s60
      %s62 = sphi 0, %s60
      %s63 = sphi 0, %s62
      %s77 = sphi 0, %s63
      %s81 = sphi 0, %s81
      %s83 = sphi 0, %s81
      %s84 = sphi 0, %s83
      %s98 = sphi 0, %s84
      %s106 = sphi 0, %s108
      %s109 = sphi 0, %s106
      %s110 = sphi 0, %s109
      %s126 = sphi 0, %s110
    $region4: #{decoder_forward.13} parent=1 // loop_header_branch
      %15 = sbr.rel (%p13) target = $region8
    $region5: #{decoder_forward.13} parent=1 // loop_body
      %s17 = ssub.s32 %s12, 1
      %s18 = ssub.s32 %s12, 2
      %s25 = sadd.s32 1, %s20
      %p26 = scmp.ge.s32.totalorder %s25, 1
      %s27 = scalar_select %p26, 0, %s25
      %s28 = sadd.s32 1, %s19
      %s29 = scalar_select %p26, %s28, %s19
      %p30 = scmp.ge.s32.totalorder %s29, 2
      %s31 = scalar_select %p30, 0, %s29
      %s32 = ssub.s32 %s19, %s31
      %s33 = ssub.s32 %s20, %s27
      %s34 = sor.u32 %s32, %s33
      %p35 = scmp.eq.s32.totalorder %s34, 0
      %s37 = sadd.s32 %s36, 1
      %s38 = scalar_select %p35, %s36, %s37
      %p41 = pneg %p35
      %p42 = scmp.eq.s32.totalorder %s12, 1
      %p43 = por %p41, %p42
      %p44 = scmp.ne.s32.totalorder %s36, %s39
      %p45 = scmp.eq.s32.totalorder %s12, 0
      %p46 = por %p44, %p45
      %p47 = scmp.ne.s32.totalorder %s36, %s39
      %p48 = scmp.eq.s32.totalorder %s17, 1
      %p49 = por %p47, %p48
      %p50 = scmp.ne.s32.totalorder %s39, %s40
      %p51 = scmp.eq.s32.totalorder %s17, 0
      %p52 = por %p50, %p51
      %p53 = scmp.ne.s32.totalorder %s39, %s40
      %p54 = scmp.eq.s32.totalorder %s18, 1
      %p55 = por %p53, %p54
      %p57 = scmp.ne.s32.totalorder %s40, %s56
      %p58 = scmp.eq.s32.totalorder %s18, 0
      %p59 = por %p57, %p58
      %s61 = sadd.s32 %s60, 1
      %p64 = scmp.eq.s32.totalorder %s12, 1
      %p65 = scmp.ne.s32.totalorder %s60, %s62
      %p66 = scmp.eq.s32.totalorder %s12, 0
      %p67 = por %p65, %p66
      %p68 = scmp.ne.s32.totalorder %s60, %s62
      %p69 = scmp.eq.s32.totalorder %s17, 1
      %p70 = por %p68, %p69
      %p71 = scmp.ne.s32.totalorder %s62, %s63
      %p72 = scmp.eq.s32.totalorder %s17, 0
      %p73 = por %p71, %p72
      %p74 = scmp.ne.s32.totalorder %s62, %s63
      %p75 = scmp.eq.s32.totalorder %s18, 1
      %p76 = por %p74, %p75
      %p78 = scmp.ne.s32.totalorder %s63, %s77
      %p79 = scmp.eq.s32.totalorder %s18, 0
      %p80 = por %p78, %p79
      %s82 = sadd.s32 %s81, 1
      %p85 = scmp.eq.s32.totalorder %s12, 1
      %p86 = scmp.ne.s32.totalorder %s81, %s83
      %p87 = scmp.eq.s32.totalorder %s12, 0
      %p88 = por %p86, %p87
      %p89 = scmp.ne.s32.totalorder %s81, %s83
      %p90 = scmp.eq.s32.totalorder %s17, 1
      %p91 = por %p89, %p90
      %p92 = scmp.ne.s32.totalorder %s83, %s84
      %p93 = scmp.eq.s32.totalorder %s17, 0
      %p94 = por %p92, %p93
      %p95 = scmp.ne.s32.totalorder %s83, %s84
      %p96 = scmp.eq.s32.totalorder %s18, 1
      %p97 = por %p95, %p96
      %p99 = scmp.ne.s32.totalorder %s84, %s98
      %p100 = scmp.eq.s32.totalorder %s18, 0
      %p101 = por %p99, %p100
      %s102 = ssub.s32 %s19, %s31
      %s103 = ssub.s32 %s20, %s27
      %s104 = sor.u32 %s102, %s103
      %p105 = scmp.eq.s32.totalorder %s104, 0
      %s107 = sadd.s32 %s106, 1
      %s108 = scalar_select %p105, %s106, %s107
      %p111 = pneg %p105
      %p112 = scmp.eq.s32.totalorder %s12, 1
      %p113 = por %p111, %p112
      %p114 = scmp.ne.s32.totalorder %s106, %s109
      %p115 = scmp.eq.s32.totalorder %s12, 0
      %p116 = por %p114, %p115
      %p117 = scmp.ne.s32.totalorder %s106, %s109
      %p118 = scmp.eq.s32.totalorder %s17, 1
      %p119 = por %p117, %p118
      %p120 = scmp.ne.s32.totalorder %s109, %s110
      %p121 = scmp.eq.s32.totalorder %s17, 0
      %p122 = por %p120, %p121
      %p123 = scmp.ne.s32.totalorder %s109, %s110
      %p124 = scmp.eq.s32.totalorder %s18, 1
      %p125 = por %p123, %p124
      %p127 = scmp.ne.s32.totalorder %s110, %s126
      %p128 = scmp.eq.s32.totalorder %s18, 0
      %p129 = por %p127, %p128
      %p130 = scmp.le.s32.totalorder 1, %s12
      %p131 = scmp.lt.s32.totalorder %s12, 3
      %p132 = pnand %p130, %p131
      %p133 = pneg %p132
      // Predicated region
      $region9: #{decoder_forward.13} parent=5 // pred_check
        _
      $region10: #{decoder_forward.13} parent=5 // pred_check_branch
        %135 = sbr.rel (%p132) target = $region12
      $region11: #{decoder_forward.13} parent=5 // pred_region
        %s136 = ssub.s32 %s12, 1
        // Predicated region
        $region13: #{decoder_forward.13} parent=11 // pred_check
          %p137 = pneg %p73
        $region14: #{decoder_forward.13} parent=11 // pred_check_branch
          %139 = sbr.rel (%p137) target = $region16
        $region15: #{decoder_forward.13} parent=11 // pred_region
          _
        $region16: #{decoder_forward.13} parent=11 // pred_fallthru
          _
        // Predicated region
        $region17: #{decoder_forward.13} parent=11 // pred_check
          %p140 = pneg %p94
        $region18: #{decoder_forward.13} parent=11 // pred_check_branch
          %142 = sbr.rel (%p140) target = $region20
        $region19: #{decoder_forward.13} parent=11 // pred_region
          _
        $region20: #{decoder_forward.13} parent=11 // pred_fallthru
          _
      $region12: #{decoder_forward.13} parent=5 // pred_fallthru
        _
      %p143 = scmp.lt.s32.totalorder %s12, 2
      // Predicated region
      $region21: #{decoder_forward.13} parent=5 // pred_check
        %p144 = pneg %p143
      $region22: #{decoder_forward.13} parent=5 // pred_check_branch
        %146 = sbr.rel (%p144) target = $region24
      $region23: #{decoder_forward.13} parent=5 // pred_region
        // Predicated region
        $region25: #{decoder_forward.13} parent=23 // pred_check
          %p147 = pneg %p46
        $region26: #{decoder_forward.13} parent=23 // pred_check_branch
          %149 = sbr.rel (%p147) target = $region28
        $region27: #{decoder_forward.13} parent=23 // pred_region
          %p150 = scmp.lt.s32.totalorder %s19, 1
          %s151 = scalar_select %p150, %s19, 1
          %p152 = scmp.lt.s32.totalorder %s20, 0
          %s153 = scalar_select %p152, %s20, 0
          %s154 = sadd.s32 %s153, %s151
          %s155 = smul.addr %s154, 8
          %s156 = scalar_lea.vmem %s0, %s155
        $region28: #{decoder_forward.13} parent=23 // pred_fallthru
          _
      $region24: #{decoder_forward.13} parent=5 // pred_fallthru
        _
      %p157 = scmp.le.s32.totalorder 1, %s12
      %p158 = scmp.lt.s32.totalorder %s12, 3
      %p159 = pnand %p157, %p158
      %p160 = pneg %p159
      // Predicated region
      $region29: #{decoder_forward.13} parent=5 // pred_check
        _
      $region30: #{decoder_forward.13} parent=5 // pred_check_branch
        %162 = sbr.rel (%p159) target = $region32
      $region31: #{decoder_forward.13} parent=5 // pred_region
        %s163 = ssub.s32 %s12, 1
        %p164 = scmp.lt.s32.totalorder %s21, 1
        %s165 = scalar_select %p164, %s21, 1
        %p166 = scmp.lt.s32.totalorder %s22, 0
        %s167 = scalar_select %p166, %s22, 0
        %s168 = sadd.s32 %s167, %s165
        %s169 = smul.addr %s168, 8
        %s170 = scalar_lea.vmem %s0, %s169
        %p171 = pneg %p52
        %p172 = pneg %p49
        %p173 = pneg %p73
        %p174 = pneg %p70
        %p175 = pneg %p94
        %p176 = pneg %p91
        %p177 = pneg %p122
        %p178 = pneg %p119
        %s179 = sand.u32 %s109, 1
        %s180 = scalar_lea.sflag [#allocation3], %s179
        %s181 = sand.u32 %s109, 1
        %s182 = smul.addr %s181, 8
        %s183 = scalar_lea.vmem [#allocation2], %s182
        %p184 = scmp.lt.s32.totalorder %s21, 1
        %s185 = scalar_select %p184, %s21, 1
        %p186 = scmp.lt.s32.totalorder %s22, 0
        %s187 = scalar_select %p186, %s22, 0
        %s188 = sadd.s32 %s187, %s185
        %s189 = smul.addr %s188, 8
        %s190 = scalar_lea.vmem %s0, %s189
        %v191 = vld [vmem:[%s190] sm:$0xff]
        %v192 = vld [vmem:[%s1] sm:$0x1]
        %v193 = vld [vmem:[%s2] sm:$0x1]
        %vm194 = vcmask 261120
        %v195 = vsel %vm194, %v191, 0.0
        %196 = vadd.xlane.f32.xlu0 %v195
        %v197 = vpop.xlane.xlu0 %196
        %v198 = vrcp.pop 32.0
        %v199 = vmul.f32 %v197, %v198
        %v200 = vsub.f32 %v191, %v199
        %v201 = vmul.f32 %v200, %v200
        %v202 = vsel %vm194, %v201, 0.0
        %203 = vadd.xlane.f32.xlu0 %v202
        %v204 = vpop.xlane.xlu0 %203
        %v205 = vmul.f32 %v204, 0.032258064
        %v206 = vrsqrt.pop %v205
        %v207 = vmul.f32 %v205, %v206
        %vm208 = vcmp.eq.f32.partialorder %v205, inf
        %v209 = vsel %vm208, %v205, %v207
        %vm210 = vcmp.eq.f32.partialorder %v205, 0.0
        %v211 = vand.u32 %v205, 2147483648
        %v212 = vsel %vm210, %v211, %v209
        %v213 = vadd.f32 %v212, 1e-06
        %v214 = vrcp.pop %v213
        %v215 = vmul.f32 %v200, %v214
        %v217 = vlaneseq
        %v218 = vshrl.u32 %v217, 7
        %v219 = vsub.s32 0, %v218
        %v220 = vrot.slane %v192, %v219
        %v222 = vmul.f32 %v220, %v215
        %v224 = vlaneseq
        %v225 = vshrl.u32 %v224, 7
        %v226 = vsub.s32 0, %v225
        %v227 = vrot.slane %v193, %v226
        %v229 = vadd.f32 %v222, %v227
        %230 = vst.msk [vmem:[%s183] sm:$0xff] %vm194, %v229
        %s231 = sand.u32 %s109, 1
        %s232 = scalar_lea.sflag [#allocation3], %s231
        %s233 = sand.u32 %s109, 1
        %s234 = smul.addr %s233, 8
        %s235 = scalar_lea.vmem [#allocation2], %s234
        // Predicated region
        $region33: #{decoder_forward.13} parent=31 // pred_check
          %p236 = pneg %p119
        $region34: #{decoder_forward.13} parent=31 // pred_check_branch
          %238 = sbr.rel (%p236) target = $region36
        $region35: #{decoder_forward.13} parent=31 // pred_region
          %s240 = ssub.s32 128, 128
          %241 = vsyncadd %s232, %s240
          %s242 = sadd.s32 %s22, %s21
          %s243 = smul.addr %s242, 128
          %s244 = scalar_lea.hbm %s3, %s243
          %s246 = sshll.u32 %s235, 4
          %s247 = int_to_ptr.vmem [resolvable:$true] %s246
          %249 = dma.vmem_to_hbm [thread:$0]  %s247, 128, %s244, %s232
        $region36: #{decoder_forward.13} parent=31 // pred_fallthru
          _
      $region32: #{decoder_forward.13} parent=5 // pred_fallthru
        _
      %p250 = scmp.le.s32.totalorder 2, %s12
      // Predicated region
      $region37: #{decoder_forward.13} parent=5 // pred_check
        %p251 = pneg %p250
      $region38: #{decoder_forward.13} parent=5 // pred_check_branch
        %253 = sbr.rel (%p251) target = $region40
      $region39: #{decoder_forward.13} parent=5 // pred_region
        %s254 = ssub.s32 %s12, 2
        // Predicated region
        $region41: #{decoder_forward.13} parent=39 // pred_check
          %p255 = pneg %p125
        $region42: #{decoder_forward.13} parent=39 // pred_check_branch
          %257 = sbr.rel (%p255) target = $region44
        $region43: #{decoder_forward.13} parent=39 // pred_region
          %s258 = sand.u32 %s110, 1
          %s259 = scalar_lea.sflag [#allocation3], %s258
          %s260 = sand.u32 %s110, 1
          %s261 = smul.addr %s260, 8
          %s262 = scalar_lea.vmem [#allocation2], %s261
          %263 = dma.done %s259, 128
        $region44: #{decoder_forward.13} parent=39 // pred_fallthru
          _
      $region40: #{decoder_forward.13} parent=5 // pred_fallthru
        _
    $region6: #{decoder_forward.13} parent=1 // loop_footer
      %s16 = sadd.s32 1, %s12
    $region7: #{decoder_forward.13} parent=1 // loop_footer_branch
      %11 = sbr.rel target = $region3
    $region8: #{decoder_forward.13} parent=1 // loop_exit
      _
    %264 = vsyncpa [#allocation3], 1
    %s265 = scalar_lea.sflag [#allocation3], 1
    %266 = vsyncpa %s265, 1

</llo_original>
